<compile_context>
chip_gen: v7x
topology: tpu7x:2x2x1
jax: 0.10.0
libtpu: 0.0.40
codegen_flags: <defaults>
</compile_context>

<pallas_src>
import numpy as np
import jax
import jax.numpy as jnp
from jax.experimental import pallas as pl
from jax.experimental.pallas import tpu as pltpu

H, W = 6, 7               # Connect-4 board
HP, WP = H + 2, W + 2     # zero-padded spatial dims for 3x3 / pad=1 convs
PP = HP * WP              # 72 padded positions per batch element
CH = 128                  # trunk channels
NBLOCKS = 19
BN_EPS = 1e-5


# ----------------------------- kernels --------------------------------------

def tower_kernel(x0_ref, w0_ref, s0_ref, b0_ref,
                 w_ref, scale_ref, bias_ref, mask_ref, out_ref):
    """First conv (at i==0) + one residual block per grid step.

    out_ref (constant block index) doubles as the VMEM-resident trunk state.
    Padded-border rows of the state are kept exactly zero via `mask`, which is
    what makes the roll-based shift trick equal a 3x3 / pad=1 convolution.
    """
    i = pl.program_id(0)
    NPr = out_ref.shape[0]
    mask = mask_ref[...]

    @pl.when(i == 0)
    def _():
        # ConvolutionBlock: im2col'd conv3x3(3->128) + folded BN + ReLU.
        h0 = jnp.dot(x0_ref[...], w0_ref[...],
                     preferred_element_type=jnp.float32)
        out_ref[...] = jnp.maximum(h0 * s0_ref[...] + b0_ref[...], 0.0) * mask

    def conv3x3(x_f32, j):
        """3x3 conv: 3 bf16 matmuls (N=384) + 8 aligned XLU rolls, f32 acc."""
        x_bf = x_f32.astype(jnp.bfloat16)
        acc = None
        for dh in range(3):
            y = jnp.dot(x_bf, w_ref[0, j, dh],
                        preferred_element_type=jnp.float32)      # (NP, 3*CH)
            for dw in range(3):
                d = (dh - 1) * WP + (dw - 1)      # flat-row offset of this tap
                part = y[:, dw * CH:(dw + 1) * CH]
                if d != 0:
                    part = pltpu.roll(part, shift=(-d) % NPr, axis=0)
                acc = part if acc is None else acc + part
        return acc

    s = out_ref[...]
    # conv1 + BN + ReLU
    h = conv3x3(s, 0)
    h = jnp.maximum(h * scale_ref[0, 0] + bias_ref[0, 0], 0.0) * mask
    # conv2 + BN, residual add, ReLU
    h2 = conv3x3(h, 1)
    h2 = h2 * scale_ref[0, 1] + bias_ref[0, 1]
    out_ref[...] = jnp.maximum(h2 + s, 0.0) * mask


def head_conv1x1_kernel(s_ref, w_ref, scale_ref, bias_ref, out_ref):
    """Fused value (128->3) / policy (128->32) 1x1 convs + BN + ReLU.

    Weights/output are zero-padded to 128 lanes so the store is lane-dense."""
    acc = jnp.dot(s_ref[...], w_ref[...], preferred_element_type=jnp.float32)
    out_ref[...] = jnp.maximum(acc * scale_ref[...] + bias_ref[...], 0.0)


def head_fc_kernel(vflat_ref, pflat_ref, w1_ref, b1_ref, w2_ref, b2_ref,
                   wp_ref, bp_ref, p_out, v_out):
    """fc1+ReLU, fc2+tanh (value); fc + softmax (= exp(log_softmax)) (policy)."""
    h = jnp.dot(vflat_ref[...], w1_ref[...],
                preferred_element_type=jnp.float32) + b1_ref[...]
    h = jnp.maximum(h, 0.0)
    v = jnp.tanh(jnp.sum(h * w2_ref[...], axis=-1, keepdims=True) + b2_ref[...])
    logits = jnp.dot(pflat_ref[...], wp_ref[...],
                     preferred_element_type=jnp.float32) + bp_ref[...]
    m = jnp.max(logits, axis=-1, keepdims=True)
    e = jnp.exp(logits - m)
    p_out[...] = e / jnp.sum(e, axis=-1, keepdims=True)
    v_out[...] = v


# --------------------------- wrapper / glue ----------------------------------

def _fs(shape):
    """Full-array BlockSpec for a grid=(1,) call."""
    nd = len(shape)
    return pl.BlockSpec(shape, lambda i, _n=nd: (0,) * _n)


def connectnet_forward(x, params):
    """x: (N, 3, 6, 7) float32 (PyTorch NCHW). Returns (policy (N,7), value (N,1))."""
    N = x.shape[0]
    NP = N * PP

    # glue: NCHW -> NHWC, im2col over the zero-padded (8,9) frame -> (NP, 32)
    x_nhwc = jnp.transpose(x.reshape(N, 3, H, W), (0, 2, 3, 1))   # (N,6,7,3)
    x_p2 = jnp.pad(x_nhwc, ((0, 0), (2, 2), (2, 2), (0, 0)))      # (N,10,11,3)
    patches = [x_p2[:, dh:dh + HP, dw:dw + WP, :]
               for dh in range(3) for dw in range(3)]
    x_im2col = jnp.concatenate(patches, axis=-1).reshape(NP, 27)
    x_im2col = jnp.pad(x_im2col, ((0, 0), (0, 5)))                # (NP, 32)

    # mask of interior (real-board) rows within each 72-row padded frame
    jj = np.arange(PP)
    interior = ((jj // WP >= 1) & (jj // WP <= H)
                & (jj % WP >= 1) & (jj % WP <= W))
    mask = jnp.asarray(np.tile(interior.astype(np.float32)[:, None], (N, 1)))

    # --- fused trunk: ConvolutionBlock + 19 ResBlocks in one pallas_call -----
    s_pad = pl.pallas_call(
        tower_kernel,
        out_shape=jax.ShapeDtypeStruct((NP, CH), jnp.float32),
        grid=(NBLOCKS,),
        in_specs=[
            pl.BlockSpec((NP, 32), lambda i: (0, 0)),
            pl.BlockSpec((32, CH), lambda i: (0, 0)),
            pl.BlockSpec((1, CH), lambda i: (0, 0)),
            pl.BlockSpec((1, CH), lambda i: (0, 0)),
            pl.BlockSpec((1, 2, 3, CH, 3 * CH), lambda i: (i, 0, 0, 0, 0)),
            pl.BlockSpec((1, 2, 1, CH), lambda i: (i, 0, 0, 0)),
            pl.BlockSpec((1, 2, 1, CH), lambda i: (i, 0, 0, 0)),
            pl.BlockSpec((NP, 1), lambda i: (0, 0)),
        ],
        out_specs=pl.BlockSpec((NP, CH), lambda i: (0, 0)),
        compiler_params=pltpu.CompilerParams(
            dimension_semantics=("arbitrary",),
            vmem_limit_bytes=32 * 1024 * 1024),
    )(x_im2col, params["w0"], params["scale0"], params["bias0"],
      params["res_w"], params["res_scale"], params["res_bias"], mask)

    # glue: extract interior board positions -> (N*42, 128)
    s_int = s_pad.reshape(N, HP, WP, CH)[:, 1:1 + H, 1:1 + W, :] \
                 .reshape(N * H * W, CH)

    # --- OutBlock 1x1 convs (value cols 0:3, policy cols 3:35; lane-padded) --
    feat = pl.pallas_call(
        head_conv1x1_kernel,
        out_shape=jax.ShapeDtypeStruct((N * H * W, 128), jnp.float32),
        grid=(1,),
        in_specs=[_fs(s_int.shape), _fs(params["w_head"].shape),
                  _fs(params["scale_head"].shape),
                  _fs(params["bias_head"].shape)],
        out_specs=_fs((N * H * W, 128)),
    )(s_int, params["w_head"], params["scale_head"], params["bias_head"])

    # glue: flatten in PyTorch NCHW order (index = c*42 + h*7 + w)
    feat = feat.reshape(N, H * W, 128)
    vflat = jnp.transpose(feat[:, :, :3], (0, 2, 1)).reshape(N, 3 * H * W)
    pflat = jnp.transpose(feat[:, :, 3:35], (0, 2, 1)).reshape(N, 32 * H * W)

    # --- OutBlock FC heads ---
    p, v = pl.pallas_call(
        head_fc_kernel,
        out_shape=(jax.ShapeDtypeStruct((N, 7), jnp.float32),
                   jax.ShapeDtypeStruct((N, 1), jnp.float32)),
        grid=(1,),
        in_specs=[_fs(vflat.shape), _fs(pflat.shape),
                  _fs(params["fc1_w"].shape), _fs(params["fc1_b"].shape),
                  _fs(params["fc2_w"].shape), _fs(params["fc2_b"].shape),
                  _fs(params["fc_w"].shape), _fs(params["fc_b"].shape)],
        out_specs=(_fs((N, 7)), _fs((N, 1))),
    )(vflat, pflat, params["fc1_w"], params["fc1_b"],
      params["fc2_w"], params["fc2_b"], params["fc_w"], params["fc_b"])
    return p, v


# ------------------------ deterministic parameters ---------------------------

def init_params(key):
    ks = iter(jax.random.split(key, 40))

    def nrm(shape, std):
        return std * jax.random.normal(next(ks), shape, jnp.float32)

    def bn(shape):  # returns folded (scale, shift) for inference-mode BN
        gamma = 1.0 + 0.1 * jax.random.normal(next(ks), shape, jnp.float32)
        beta = 0.1 * jax.random.normal(next(ks), shape, jnp.float32)
        mean = 0.1 * jax.random.normal(next(ks), shape, jnp.float32)
        var = 0.5 + jax.random.uniform(next(ks), shape, jnp.float32)
        scale = gamma / jnp.sqrt(var + BN_EPS)
        return scale, beta - mean * scale

    # ConvolutionBlock: Conv2d(3,128,3,pad=1,bias=True) + BN, as an im2col
    # matmul weight (27 -> pad 32, 128); row k*3+c = tap k (k=3*dh+dw), chan c.
    w0 = nrm((27, CH), (2.0 / (3 * 9)) ** 0.5)
    w0 = jnp.pad(w0, ((0, 5), (0, 0)))                            # (32, 128)
    b0 = nrm((CH,), 0.02)
    s0, sh0 = bn((CH,))
    scale0 = s0.reshape(1, CH)
    bias0 = (sh0 + b0 * s0).reshape(1, CH)

    # 19 ResBlocks: 2x [Conv2d(128,128,3,pad=1,bias=False) + BN].
    # Weights stored bf16 as (block, conv, dh, Cin, 3*Cout): the 3 dw taps of
    # one kernel row are stacked on the lane axis -> each 3x3 conv is three
    # (NP,128)@(128,384) bf16 matmuls with f32 accumulation.
    res_w = nrm((NBLOCKS, 2, 3, 3, CH, CH), (2.0 / (9 * CH)) ** 0.5)
    res_w = jnp.transpose(res_w, (0, 1, 2, 4, 3, 5)) \
               .reshape(NBLOCKS, 2, 3, CH, 3 * CH).astype(jnp.bfloat16)
    rs, rsh = bn((NBLOCKS, 2, CH))
    res_scale = rs.reshape(NBLOCKS, 2, 1, CH)
    res_bias = rsh.reshape(NBLOCKS, 2, 1, CH)

    # OutBlock 1x1 convs (value 128->3, policy 128->32) + BN, fused on the
    # output-channel axis and zero-padded to 128 lanes (lane-dense store).
    wv = nrm((CH, 3), (2.0 / CH) ** 0.5)
    bv = nrm((3,), 0.02)
    sv, shv = bn((3,))
    wp_ = nrm((CH, 32), (2.0 / CH) ** 0.5)
    bp_ = nrm((32,), 0.02)
    sp, shp = bn((32,))
    w_head = jnp.pad(jnp.concatenate([wv, wp_], axis=1), ((0, 0), (0, 93)))
    scale_head = jnp.pad(jnp.concatenate([sv, sp]), (0, 93)).reshape(1, 128)
    bias_head = jnp.pad(jnp.concatenate([shv + bv * sv, shp + bp_ * sp]),
                        (0, 93)).reshape(1, 128)

    # FC layers (stored (in,out) for right-multiplication; fc2 stored as (1,32))
    fc1_w = nrm((3 * H * W, 32), (1.0 / (3 * H * W)) ** 0.5)
    fc1_b = nrm((32,), 0.02).reshape(1, 32)
    fc2_w = nrm((1, 32), (1.0 / 32) ** 0.5)
    fc2_b = nrm((1,), 0.02).reshape(1, 1)
    fc_w = nrm((32 * H * W, 7), (1.0 / (32 * H * W)) ** 0.5)
    fc_b = nrm((7,), 0.02).reshape(1, 7)

    return dict(w0=w0, scale0=scale0, bias0=bias0,
                res_w=res_w, res_scale=res_scale, res_bias=res_bias,
                w_head=w_head, scale_head=scale_head, bias_head=bias_head,
                fc1_w=fc1_w, fc1_b=fc1_b, fc2_w=fc2_w, fc2_b=fc2_b,
                fc_w=fc_w, fc_b=fc_b)


if __name__ == "__main__":
    key = jax.random.PRNGKey(0)
    pkey, xkey = jax.random.split(key)
    params = init_params(pkey)
    x = jax.random.normal(xkey, (2, 3, 6, 7), jnp.float32)   # (N,C,H,W) NCHW

    p, v = jax.jit(connectnet_forward)(x, params)
    p, v = jax.block_until_ready((p, v))

    assert p.shape == (2, 7) and v.shape == (2, 1)
    assert bool(jnp.all(jnp.isfinite(p))) and bool(jnp.all(jnp.isfinite(v)))
    assert bool(jnp.allclose(jnp.sum(p, axis=-1), 1.0, atol=1e-4))
    assert bool(jnp.all(jnp.abs(v) <= 1.0))
    print("KERNEL_OK")
</pallas_src>

<mosaic_0001>
module attributes {stable_mosaic.version = 11 : i64} {
  func.func @head_conv1x1_kernel(%arg0: i32, %arg1: memref<84x128xf32, #tpu.memory_space<vmem>>, %arg2: memref<128x128xf32, #tpu.memory_space<vmem>>, %arg3: memref<1x128xf32, #tpu.memory_space<vmem>>, %arg4: memref<1x128xf32, #tpu.memory_space<vmem>>, %arg5: memref<84x128xf32, #tpu.memory_space<vmem>>) attributes {dimension_semantics = [#tpu.dimension_semantics<arbitrary>], iteration_bounds = array<i64: 1>, scalar_prefetch = 0 : i64, scratch_operands = 0 : i64, tpu.core_type = #tpu.core_type<tc>, window_params = [{pipeline_mode = #tpu.pipeline_mode<synchronous>, transform_indices = @transform_0, window_bounds = array<i64: 84, 128>}, {pipeline_mode = #tpu.pipeline_mode<synchronous>, transform_indices = @transform_1, window_bounds = array<i64: 128, 128>}, {pipeline_mode = #tpu.pipeline_mode<synchronous>, transform_indices = @transform_2, window_bounds = array<i64: 1, 128>}, {pipeline_mode = #tpu.pipeline_mode<synchronous>, transform_indices = @transform_3, window_bounds = array<i64: 1, 128>}, {pipeline_mode = #tpu.pipeline_mode<synchronous>, transform_indices = @transform_4, window_bounds = array<i64: 84, 128>}]} {
    %c0 = arith.constant 0 : index
    %c0_0 = arith.constant 0 : index
    %0 = vector.load %arg1[%c0, %c0_0] : memref<84x128xf32, #tpu.memory_space<vmem>>, vector<84x128xf32>
    %c0_1 = arith.constant 0 : index
    %c0_2 = arith.constant 0 : index
    %1 = vector.load %arg2[%c0_1, %c0_2] : memref<128x128xf32, #tpu.memory_space<vmem>>, vector<128x128xf32>
    %cst = arith.constant dense<0.000000e+00> : vector<84x128xf32>
    %2 = tpu.matmul %0, %1, %cst {dimension_numbers = #tpu.dot_dimension_numbers<[1], [0], [0], [1], [0, 0, 1, 1], [], []>} : vector<84x128xf32>, vector<128x128xf32>, vector<84x128xf32> -> vector<84x128xf32>
    %c0_3 = arith.constant 0 : index
    %c0_4 = arith.constant 0 : index
    %3 = vector.load %arg3[%c0_3, %c0_4] : memref<1x128xf32, #tpu.memory_space<vmem>>, vector<1x128xf32>
    %4 = vector.broadcast %3 : vector<1x128xf32> to vector<84x128xf32>
    %5 = arith.mulf %2, %4 : vector<84x128xf32>
    %c0_5 = arith.constant 0 : index
    %c0_6 = arith.constant 0 : index
    %6 = vector.load %arg4[%c0_5, %c0_6] : memref<1x128xf32, #tpu.memory_space<vmem>>, vector<1x128xf32>
    %7 = vector.broadcast %6 : vector<1x128xf32> to vector<84x128xf32>
    %8 = arith.addf %5, %7 : vector<84x128xf32>
    %cst_7 = arith.constant 0.000000e+00 : f32
    %9 = vector.broadcast %cst_7 : f32 to vector<84x128xf32>
    %10 = arith.maximumf %8, %9 : vector<84x128xf32>
    %c0_8 = arith.constant 0 : index
    %c0_9 = arith.constant 0 : index
    %11 = vector.load %arg5[%c0_8, %c0_9] : memref<84x128xf32, #tpu.memory_space<vmem>>, vector<84x128xf32>
    tpu.vector_store %arg5[%c0_8, %c0_9], %10 {strides = array<i32>} : memref<84x128xf32, #tpu.memory_space<vmem>>, vector<84x128xf32>,
    return
  }
  func.func @transform_0(%arg0: i32) -> (i32, i32) {
    %c0_i32 = arith.constant 0 : i32
    %c0_i32_0 = arith.constant 0 : i32
    %c0_i32_1 = arith.constant 0 : i32
    return %c0_i32, %c0_i32_0 : i32, i32
  }
  func.func @transform_1(%arg0: i32) -> (i32, i32) {
    %c0_i32 = arith.constant 0 : i32
    %c0_i32_0 = arith.constant 0 : i32
    %c0_i32_1 = arith.constant 0 : i32
    return %c0_i32, %c0_i32_0 : i32, i32
  }
  func.func @transform_2(%arg0: i32) -> (i32, i32) {
    %c0_i32 = arith.constant 0 : i32
    %c0_i32_0 = arith.constant 0 : i32
    %c0_i32_1 = arith.constant 0 : i32
    return %c0_i32, %c0_i32_0 : i32, i32
  }
  func.func @transform_3(%arg0: i32) -> (i32, i32) {
    %c0_i32 = arith.constant 0 : i32
    %c0_i32_0 = arith.constant 0 : i32
    %c0_i32_1 = arith.constant 0 : i32
    return %c0_i32, %c0_i32_0 : i32, i32
  }
  func.func @transform_4(%arg0: i32) -> (i32, i32) {
    %c0_i32 = arith.constant 0 : i32
    %c0_i32_0 = arith.constant 0 : i32
    %c0_i32_1 = arith.constant 0 : i32
    return %c0_i32, %c0_i32_0 : i32, i32
  }
}

module attributes {stable_mosaic.version = 11 : i64} {
  func.func @tower_kernel(%arg0: i32, %arg1: memref<144x32xf32, #tpu.memory_space<vmem>>, %arg2: memref<32x128xf32, #tpu.memory_space<vmem>>, %arg3: memref<1x128xf32, #tpu.memory_space<vmem>>, %arg4: memref<1x128xf32, #tpu.memory_space<vmem>>, %arg5: memref<1x2x3x128x384xbf16, #tpu.memory_space<vmem>>, %arg6: memref<1x2x1x128xf32, #tpu.memory_space<vmem>>, %arg7: memref<1x2x1x128xf32, #tpu.memory_space<vmem>>, %arg8: memref<144x1xf32, #tpu.memory_space<vmem>>, %arg9: memref<144x128xf32, #tpu.memory_space<vmem>>) attributes {dimension_semantics = [#tpu.dimension_semantics<arbitrary>], iteration_bounds = array<i64: 19>, scalar_prefetch = 0 : i64, scratch_operands = 0 : i64, tpu.core_type = #tpu.core_type<tc>, window_params = [{pipeline_mode = #tpu.pipeline_mode<synchronous>, transform_indices = @transform_0, window_bounds = array<i64: 144, 32>}, {pipeline_mode = #tpu.pipeline_mode<synchronous>, transform_indices = @transform_1, window_bounds = array<i64: 32, 128>}, {pipeline_mode = #tpu.pipeline_mode<synchronous>, transform_indices = @transform_2, window_bounds = array<i64: 1, 128>}, {pipeline_mode = #tpu.pipeline_mode<synchronous>, transform_indices = @transform_3, window_bounds = array<i64: 1, 128>}, {transform_indices = @transform_4, window_bounds = array<i64: 1, 2, 3, 128, 384>}, {transform_indices = @transform_5, window_bounds = array<i64: 1, 2, 1, 128>}, {transform_indices = @transform_6, window_bounds = array<i64: 1, 2, 1, 128>}, {pipeline_mode = #tpu.pipeline_mode<synchronous>, transform_indices = @transform_7, window_bounds = array<i64: 144, 1>}, {pipeline_mode = #tpu.pipeline_mode<synchronous>, transform_indices = @transform_8, window_bounds = array<i64: 144, 128>}]} {
    %c0 = arith.constant 0 : index
    %c0_0 = arith.constant 0 : index
    %0 = vector.load %arg8[%c0, %c0_0] : memref<144x1xf32, #tpu.memory_space<vmem>>, vector<144x1xf32>
    %c0_i32 = arith.constant 0 : i32
    %1 = arith.cmpi eq, %arg0, %c0_i32 : i32
    %2 = arith.extui %1 : i1 to i32
    %c0_i32_1 = arith.constant 0 : i32
    %3 = arith.cmpi ne, %2, %c0_i32_1 : i32
    scf.if %3 {
      %c0_65 = arith.constant 0 : index
      %c0_66 = arith.constant 0 : index
      %101 = vector.load %arg1[%c0_65, %c0_66] : memref<144x32xf32, #tpu.memory_space<vmem>>, vector<144x32xf32>
      %c0_67 = arith.constant 0 : index
      %c0_68 = arith.constant 0 : index
      %102 = vector.load %arg2[%c0_67, %c0_68] : memref<32x128xf32, #tpu.memory_space<vmem>>, vector<32x128xf32>
      %cst_69 = arith.constant dense<0.000000e+00> : vector<144x128xf32>
      %103 = tpu.matmul %101, %102, %cst_69 {dimension_numbers = #tpu.dot_dimension_numbers<[1], [0], [0], [1], [0, 0, 1, 1], [], []>} : vector<144x32xf32>, vector<32x128xf32>, vector<144x128xf32> -> vector<144x128xf32>
      %c0_70 = arith.constant 0 : index
      %c0_71 = arith.constant 0 : index
      %104 = vector.load %arg3[%c0_70, %c0_71] : memref<1x128xf32, #tpu.memory_space<vmem>>, vector<1x128xf32>
      %105 = vector.broadcast %104 : vector<1x128xf32> to vector<144x128xf32>
      %106 = arith.mulf %103, %105 : vector<144x128xf32>
      %c0_72 = arith.constant 0 : index
      %c0_73 = arith.constant 0 : index
      %107 = vector.load %arg4[%c0_72, %c0_73] : memref<1x128xf32, #tpu.memory_space<vmem>>, vector<1x128xf32>
      %108 = vector.broadcast %107 : vector<1x128xf32> to vector<144x128xf32>
      %109 = arith.addf %106, %108 : vector<144x128xf32>
      %cst_74 = arith.constant 0.000000e+00 : f32
      %110 = vector.broadcast %cst_74 : f32 to vector<144x128xf32>
      %111 = arith.maximumf %109, %110 : vector<144x128xf32>
      %112 = vector.broadcast %0 : vector<144x1xf32> to vector<144x128xf32>
      %113 = arith.mulf %111, %112 : vector<144x128xf32>
      %c0_75 = arith.constant 0 : index
      %c0_76 = arith.constant 0 : index
      %114 = vector.load %arg9[%c0_75, %c0_76] : memref<144x128xf32, #tpu.memory_space<vmem>>, vector<144x128xf32>
      tpu.vector_store %arg9[%c0_75, %c0_76], %113 {strides = array<i32>} : memref<144x128xf32, #tpu.memory_space<vmem>>, vector<144x128xf32>,
    } else {
    }
    %c0_2 = arith.constant 0 : index
    %c0_3 = arith.constant 0 : index
    %4 = vector.load %arg9[%c0_2, %c0_3] : memref<144x128xf32, #tpu.memory_space<vmem>>, vector<144x128xf32>
    %5 = arith.truncf %4 : vector<144x128xf32> to vector<144x128xbf16>
    %c0_4 = arith.constant 0 : index
    %c0_5 = arith.constant 0 : index
    %c0_6 = arith.constant 0 : index
    %c0_7 = arith.constant 0 : index
    %c0_8 = arith.constant 0 : index
    %6 = vector.load %arg5[%c0_4, %c0_5, %c0_6, %c0_7, %c0_8] : memref<1x2x3x128x384xbf16, #tpu.memory_space<vmem>>, vector<1x1x1x128x384xbf16>
    %7 = vector.shape_cast %6 : vector<1x1x1x128x384xbf16> to vector<128x384xbf16>
    %cst = arith.constant dense<0.000000e+00> : vector<144x384xf32>
    %8 = tpu.matmul %5, %7, %cst {dimension_numbers = #tpu.dot_dimension_numbers<[1], [0], [0], [1], [0, 0, 1, 1], [], []>} : vector<144x128xbf16>, vector<128x384xbf16>, vector<144x384xf32> -> vector<144x384xf32>
    %9 = vector.extract_strided_slice %8 {offsets = [0, 0], sizes = [144, 128], strides = [1, 1]} : vector<144x384xf32> to vector<144x128xf32>
    %c10_i32 = arith.constant 10 : i32
    %10 = tpu.dynamic_rotate %9 by %c10_i32 dim 0 : vector<144x128xf32>, i32 -> vector<144x128xf32>
    %11 = vector.extract_strided_slice %8 {offsets = [0, 128], sizes = [144, 128], strides = [1, 1]} : vector<144x384xf32> to vector<144x128xf32>
    %c9_i32 = arith.constant 9 : i32
    %12 = tpu.dynamic_rotate %11 by %c9_i32 dim 0 : vector<144x128xf32>, i32 -> vector<144x128xf32>
    %13 = arith.addf %10, %12 : vector<144x128xf32>
    %14 = vector.extract_strided_slice %8 {offsets = [0, 256], sizes = [144, 128], strides = [1, 1]} : vector<144x384xf32> to vector<144x128xf32>
    %c8_i32 = arith.constant 8 : i32
    %15 = tpu.dynamic_rotate %14 by %c8_i32 dim 0 : vector<144x128xf32>, i32 -> vector<144x128xf32>
    %16 = arith.addf %13, %15 : vector<144x128xf32>
    %c0_9 = arith.constant 0 : index
    %c0_10 = arith.constant 0 : index
    %c1 = arith.constant 1 : index
    %c0_11 = arith.constant 0 : index
    %c0_12 = arith.constant 0 : index
    %17 = vector.load %arg5[%c0_9, %c0_10, %c1, %c0_11, %c0_12] : memref<1x2x3x128x384xbf16, #tpu.memory_space<vmem>>, vector<1x1x1x128x384xbf16>
    %18 = vector.shape_cast %17 : vector<1x1x1x128x384xbf16> to vector<128x384xbf16>
    %cst_13 = arith.constant dense<0.000000e+00> : vector<144x384xf32>
    %19 = tpu.matmul %5, %18, %cst_13 {dimension_numbers = #tpu.dot_dimension_numbers<[1], [0], [0], [1], [0, 0, 1, 1], [], []>} : vector<144x128xbf16>, vector<128x384xbf16>, vector<144x384xf32> -> vector<144x384xf32>
    %20 = vector.extract_strided_slice %19 {offsets = [0, 0], sizes = [144, 128], strides = [1, 1]} : vector<144x384xf32> to vector<144x128xf32>
    %c1_i32 = arith.constant 1 : i32
    %21 = tpu.dynamic_rotate %20 by %c1_i32 dim 0 : vector<144x128xf32>, i32 -> vector<144x128xf32>
    %22 = arith.addf %16, %21 : vector<144x128xf32>
    %23 = vector.extract_strided_slice %19 {offsets = [0, 128], sizes = [144, 128], strides = [1, 1]} : vector<144x384xf32> to vector<144x128xf32>
    %24 = arith.addf %22, %23 : vector<144x128xf32>
    %25 = vector.extract_strided_slice %19 {offsets = [0, 256], sizes = [144, 128], strides = [1, 1]} : vector<144x384xf32> to vector<144x128xf32>
    %c143_i32 = arith.constant 143 : i32
    %26 = tpu.dynamic_rotate %25 by %c143_i32 dim 0 : vector<144x128xf32>, i32 -> vector<144x128xf32>
    %27 = arith.addf %24, %26 : vector<144x128xf32>
    %c0_14 = arith.constant 0 : index
    %c0_15 = arith.constant 0 : index
    %c2 = arith.constant 2 : index
    %c0_16 = arith.constant 0 : index
    %c0_17 = arith.constant 0 : index
    %28 = vector.load %arg5[%c0_14, %c0_15, %c2, %c0_16, %c0_17] : memref<1x2x3x128x384xbf16, #tpu.memory_space<vmem>>, vector<1x1x1x128x384xbf16>
    %29 = vector.shape_cast %28 : vector<1x1x1x128x384xbf16> to vector<128x384xbf16>
    %cst_18 = arith.constant dense<0.000000e+00> : vector<144x384xf32>
    %30 = tpu.matmul %5, %29, %cst_18 {dimension_numbers = #tpu.dot_dimension_numbers<[1], [0], [0], [1], [0, 0, 1, 1], [], []>} : vector<144x128xbf16>, vector<128x384xbf16>, vector<144x384xf32> -> vector<144x384xf32>
    %31 = vector.extract_strided_slice %30 {offsets = [0, 0], sizes = [144, 128], strides = [1, 1]} : vector<144x384xf32> to vector<144x128xf32>
    %c136_i32 = arith.constant 136 : i32
    %32 = tpu.dynamic_rotate %31 by %c136_i32 dim 0 : vector<144x128xf32>, i32 -> vector<144x128xf32>
    %33 = arith.addf %27, %32 : vector<144x128xf32>
    %34 = vector.extract_strided_slice %30 {offsets = [0, 128], sizes = [144, 128], strides = [1, 1]} : vector<144x384xf32> to vector<144x128xf32>
    %c135_i32 = arith.constant 135 : i32
    %35 = tpu.dynamic_rotate %34 by %c135_i32 dim 0 : vector<144x128xf32>, i32 -> vector<144x128xf32>
    %36 = arith.addf %33, %35 : vector<144x128xf32>
    %37 = vector.extract_strided_slice %30 {offsets = [0, 256], sizes = [144, 128], strides = [1, 1]} : vector<144x384xf32> to vector<144x128xf32>
    %c134_i32 = arith.constant 134 : i32
    %38 = tpu.dynamic_rotate %37 by %c134_i32 dim 0 : vector<144x128xf32>, i32 -> vector<144x128xf32>
    %39 = arith.addf %36, %38 : vector<144x128xf32>
    %c0_19 = arith.constant 0 : index
    %c0_20 = arith.constant 0 : index
    %c0_21 = arith.constant 0 : index
    %c0_22 = arith.constant 0 : index
    %40 = vector.load %arg6[%c0_19, %c0_20, %c0_21, %c0_22] : memref<1x2x1x128xf32, #tpu.memory_space<vmem>>, vector<1x1x1x128xf32>
    %41 = vector.shape_cast %40 : vector<1x1x1x128xf32> to vector<1x128xf32>
    %42 = vector.broadcast %41 : vector<1x128xf32> to vector<144x128xf32>
    %43 = arith.mulf %39, %42 : vector<144x128xf32>
    %c0_23 = arith.constant 0 : index
    %c0_24 = arith.constant 0 : index
    %c0_25 = arith.constant 0 : index
    %c0_26 = arith.constant 0 : index
    %44 = vector.load %arg7[%c0_23, %c0_24, %c0_25, %c0_26] : memref<1x2x1x128xf32, #tpu.memory_space<vmem>>, vector<1x1x1x128xf32>
    %45 = vector.shape_cast %44 : vector<1x1x1x128xf32> to vector<1x128xf32>
    %46 = vector.broadcast %45 : vector<1x128xf32> to vector<144x128xf32>
    %47 = arith.addf %43, %46 : vector<144x128xf32>
    %cst_27 = arith.constant 0.000000e+00 : f32
    %48 = vector.broadcast %cst_27 : f32 to vector<144x128xf32>
    %49 = arith.maximumf %47, %48 : vector<144x128xf32>
    %50 = vector.broadcast %0 : vector<144x1xf32> to vector<144x128xf32>
    %51 = arith.mulf %49, %50 : vector<144x128xf32>
    %52 = arith.truncf %51 : vector<144x128xf32> to vector<144x128xbf16>
    %c0_28 = arith.constant 0 : index
    %c1_29 = arith.constant 1 : index
    %c0_30 = arith.constant 0 : index
    %c0_31 = arith.constant 0 : index
    %c0_32 = arith.constant 0 : index
    %53 = vector.load %arg5[%c0_28, %c1_29, %c0_30, %c0_31, %c0_32] : memref<1x2x3x128x384xbf16, #tpu.memory_space<vmem>>, vector<1x1x1x128x384xbf16>
    %54 = vector.shape_cast %53 : vector<1x1x1x128x384xbf16> to vector<128x384xbf16>
    %cst_33 = arith.constant dense<0.000000e+00> : vector<144x384xf32>
    %55 = tpu.matmul %52, %54, %cst_33 {dimension_numbers = #tpu.dot_dimension_numbers<[1], [0], [0], [1], [0, 0, 1, 1], [], []>} : vector<144x128xbf16>, vector<128x384xbf16>, vector<144x384xf32> -> vector<144x384xf32>
    %56 = vector.extract_strided_slice %55 {offsets = [0, 0], sizes = [144, 128], strides = [1, 1]} : vector<144x384xf32> to vector<144x128xf32>
    %c10_i32_34 = arith.constant 10 : i32
    %57 = tpu.dynamic_rotate %56 by %c10_i32_34 dim 0 : vector<144x128xf32>, i32 -> vector<144x128xf32>
    %58 = vector.extract_strided_slice %55 {offsets = [0, 128], sizes = [144, 128], strides = [1, 1]} : vector<144x384xf32> to vector<144x128xf32>
    %c9_i32_35 = arith.constant 9 : i32
    %59 = tpu.dynamic_rotate %58 by %c9_i32_35 dim 0 : vector<144x128xf32>, i32 -> vector<144x128xf32>
    %60 = arith.addf %57, %59 : vector<144x128xf32>
    %61 = vector.extract_strided_slice %55 {offsets = [0, 256], sizes = [144, 128], strides = [1, 1]} : vector<144x384xf32> to vector<144x128xf32>
    %c8_i32_36 = arith.constant 8 : i32
    %62 = tpu.dynamic_rotate %61 by %c8_i32_36 dim 0 : vector<144x128xf32>, i32 -> vector<144x128xf32>
    %63 = arith.addf %60, %62 : vector<144x128xf32>
    %c0_37 = arith.constant 0 : index
    %c1_38 = arith.constant 1 : index
    %c1_39 = arith.constant 1 : index
    %c0_40 = arith.constant 0 : index
    %c0_41 = arith.constant 0 : index
    %64 = vector.load %arg5[%c0_37, %c1_38, %c1_39, %c0_40, %c0_41] : memref<1x2x3x128x384xbf16, #tpu.memory_space<vmem>>, vector<1x1x1x128x384xbf16>
    %65 = vector.shape_cast %64 : vector<1x1x1x128x384xbf16> to vector<128x384xbf16>
    %cst_42 = arith.constant dense<0.000000e+00> : vector<144x384xf32>
    %66 = tpu.matmul %52, %65, %cst_42 {dimension_numbers = #tpu.dot_dimension_numbers<[1], [0], [0], [1], [0, 0, 1, 1], [], []>} : vector<144x128xbf16>, vector<128x384xbf16>, vector<144x384xf32> -> vector<144x384xf32>
    %67 = vector.extract_strided_slice %66 {offsets = [0, 0], sizes = [144, 128], strides = [1, 1]} : vector<144x384xf32> to vector<144x128xf32>
    %c1_i32_43 = arith.constant 1 : i32
    %68 = tpu.dynamic_rotate %67 by %c1_i32_43 dim 0 : vector<144x128xf32>, i32 -> vector<144x128xf32>
    %69 = arith.addf %63, %68 : vector<144x128xf32>
    %70 = vector.extract_strided_slice %66 {offsets = [0, 128], sizes = [144, 128], strides = [1, 1]} : vector<144x384xf32> to vector<144x128xf32>
    %71 = arith.addf %69, %70 : vector<144x128xf32>
    %72 = vector.extract_strided_slice %66 {offsets = [0, 256], sizes = [144, 128], strides = [1, 1]} : vector<144x384xf32> to vector<144x128xf32>
    %c143_i32_44 = arith.constant 143 : i32
    %73 = tpu.dynamic_rotate %72 by %c143_i32_44 dim 0 : vector<144x128xf32>, i32 -> vector<144x128xf32>
    %74 = arith.addf %71, %73 : vector<144x128xf32>
    %c0_45 = arith.constant 0 : index
    %c1_46 = arith.constant 1 : index
    %c2_47 = arith.constant 2 : index
    %c0_48 = arith.constant 0 : index
    %c0_49 = arith.constant 0 : index
    %75 = vector.load %arg5[%c0_45, %c1_46, %c2_47, %c0_48, %c0_49] : memref<1x2x3x128x384xbf16, #tpu.memory_space<vmem>>, vector<1x1x1x128x384xbf16>
    %76 = vector.shape_cast %75 : vector<1x1x1x128x384xbf16> to vector<128x384xbf16>
    %cst_50 = arith.constant dense<0.000000e+00> : vector<144x384xf32>
    %77 = tpu.matmul %52, %76, %cst_50 {dimension_numbers = #tpu.dot_dimension_numbers<[1], [0], [0], [1], [0, 0, 1, 1], [], []>} : vector<144x128xbf16>, vector<128x384xbf16>, vector<144x384xf32> -> vector<144x384xf32>
    %78 = vector.extract_strided_slice %77 {offsets = [0, 0], sizes = [144, 128], strides = [1, 1]} : vector<144x384xf32> to vector<144x128xf32>
    %c136_i32_51 = arith.constant 136 : i32
    %79 = tpu.dynamic_rotate %78 by %c136_i32_51 dim 0 : vector<144x128xf32>, i32 -> vector<144x128xf32>
    %80 = arith.addf %74, %79 : vector<144x128xf32>
    %81 = vector.extract_strided_slice %77 {offsets = [0, 128], sizes = [144, 128], strides = [1, 1]} : vector<144x384xf32> to vector<144x128xf32>
    %c135_i32_52 = arith.constant 135 : i32
    %82 = tpu.dynamic_rotate %81 by %c135_i32_52 dim 0 : vector<144x128xf32>, i32 -> vector<144x128xf32>
    %83 = arith.addf %80, %82 : vector<144x128xf32>
    %84 = vector.extract_strided_slice %77 {offsets = [0, 256], sizes = [144, 128], strides = [1, 1]} : vector<144x384xf32> to vector<144x128xf32>
    %c134_i32_53 = arith.constant 134 : i32
    %85 = tpu.dynamic_rotate %84 by %c134_i32_53 dim 0 : vector<144x128xf32>, i32 -> vector<144x128xf32>
    %86 = arith.addf %83, %85 : vector<144x128xf32>
    %c0_54 = arith.constant 0 : index
    %c1_55 = arith.constant 1 : index
    %c0_56 = arith.constant 0 : index
    %c0_57 = arith.constant 0 : index
    %87 = vector.load %arg6[%c0_54, %c1_55, %c0_56, %c0_57] : memref<1x2x1x128xf32, #tpu.memory_space<vmem>>, vector<1x1x1x128xf32>
    %88 = vector.shape_cast %87 : vector<1x1x1x128xf32> to vector<1x128xf32>
    %89 = vector.broadcast %88 : vector<1x128xf32> to vector<144x128xf32>
    %90 = arith.mulf %86, %89 : vector<144x128xf32>
    %c0_58 = arith.constant 0 : index
    %c1_59 = arith.constant 1 : index
    %c0_60 = arith.constant 0 : index
    %c0_61 = arith.constant 0 : index
    %91 = vector.load %arg7[%c0_58, %c1_59, %c0_60, %c0_61] : memref<1x2x1x128xf32, #tpu.memory_space<vmem>>, vector<1x1x1x128xf32>
    %92 = vector.shape_cast %91 : vector<1x1x1x128xf32> to vector<1x128xf32>
    %93 = vector.broadcast %92 : vector<1x128xf32> to vector<144x128xf32>
    %94 = arith.addf %90, %93 : vector<144x128xf32>
    %95 = arith.addf %94, %4 : vector<144x128xf32>
    %cst_62 = arith.constant 0.000000e+00 : f32
    %96 = vector.broadcast %cst_62 : f32 to vector<144x128xf32>
    %97 = arith.maximumf %95, %96 : vector<144x128xf32>
    %98 = vector.broadcast %0 : vector<144x1xf32> to vector<144x128xf32>
    %99 = arith.mulf %97, %98 : vector<144x128xf32>
    %c0_63 = arith.constant 0 : index
    %c0_64 = arith.constant 0 : index
    %100 = vector.load %arg9[%c0_63, %c0_64] : memref<144x128xf32, #tpu.memory_space<vmem>>, vector<144x128xf32>
    tpu.vector_store %arg9[%c0_63, %c0_64], %99 {strides = array<i32>} : memref<144x128xf32, #tpu.memory_space<vmem>>, vector<144x128xf32>,
    return
  }
  func.func @transform_0(%arg0: i32) -> (i32, i32) {
    %c0_i32 = arith.constant 0 : i32
    %c0_i32_0 = arith.constant 0 : i32
    %c0_i32_1 = arith.constant 0 : i32
    return %c0_i32, %c0_i32_0 : i32, i32
  }
  func.func @transform_1(%arg0: i32) -> (i32, i32) {
    %c0_i32 = arith.constant 0 : i32
    %c0_i32_0 = arith.constant 0 : i32
    %c0_i32_1 = arith.constant 0 : i32
    return %c0_i32, %c0_i32_0 : i32, i32
  }
  func.func @transform_2(%arg0: i32) -> (i32, i32) {
    %c0_i32 = arith.constant 0 : i32
    %c0_i32_0 = arith.constant 0 : i32
    %c0_i32_1 = arith.constant 0 : i32
    return %c0_i32, %c0_i32_0 : i32, i32
  }
  func.func @transform_3(%arg0: i32) -> (i32, i32) {
    %c0_i32 = arith.constant 0 : i32
    %c0_i32_0 = arith.constant 0 : i32
    %c0_i32_1 = arith.constant 0 : i32
    return %c0_i32, %c0_i32_0 : i32, i32
  }
  func.func @transform_4(%arg0: i32) -> (i32, i32, i32, i32, i32) {
    %c0_i32 = arith.constant 0 : i32
    %c0_i32_0 = arith.constant 0 : i32
    %c0_i32_1 = arith.constant 0 : i32
    %c0_i32_2 = arith.constant 0 : i32
    %c0_i32_3 = arith.constant 0 : i32
    return %arg0, %c0_i32, %c0_i32_0, %c0_i32_1, %c0_i32_2 : i32, i32, i32, i32, i32
  }
  func.func @transform_5(%arg0: i32) -> (i32, i32, i32, i32) {
    %c0_i32 = arith.constant 0 : i32
    %c0_i32_0 = arith.constant 0 : i32
    %c0_i32_1 = arith.constant 0 : i32
    %c0_i32_2 = arith.constant 0 : i32
    return %arg0, %c0_i32, %c0_i32_0, %c0_i32_1 : i32, i32, i32, i32
  }
  func.func @transform_6(%arg0: i32) -> (i32, i32, i32, i32) {
    %c0_i32 = arith.constant 0 : i32
    %c0_i32_0 = arith.constant 0 : i32
    %c0_i32_1 = arith.constant 0 : i32
    %c0_i32_2 = arith.constant 0 : i32
    return %arg0, %c0_i32, %c0_i32_0, %c0_i32_1 : i32, i32, i32, i32
  }
  func.func @transform_7(%arg0: i32) -> (i32, i32) {
    %c0_i32 = arith.constant 0 : i32
    %c0_i32_0 = arith.constant 0 : i32
    %c0_i32_1 = arith.constant 0 : i32
    return %c0_i32, %c0_i32_0 : i32, i32
  }
  func.func @transform_8(%arg0: i32) -> (i32, i32) {
    %c0_i32 = arith.constant 0 : i32
    %c0_i32_0 = arith.constant 0 : i32
    %c0_i32_1 = arith.constant 0 : i32
    return %c0_i32, %c0_i32_0 : i32, i32
  }
}

module attributes {stable_mosaic.version = 11 : i64} {
  func.func @head_fc_kernel(%arg0: i32, %arg1: memref<2x126xf32, #tpu.memory_space<vmem>>, %arg2: memref<2x1344xf32, #tpu.memory_space<vmem>>, %arg3: memref<126x32xf32, #tpu.memory_space<vmem>>, %arg4: memref<1x32xf32, #tpu.memory_space<vmem>>, %arg5: memref<1x32xf32, #tpu.memory_space<vmem>>, %arg6: memref<1x1xf32, #tpu.memory_space<vmem>>, %arg7: memref<1344x7xf32, #tpu.memory_space<vmem>>, %arg8: memref<1x7xf32, #tpu.memory_space<vmem>>, %arg9: memref<2x7xf32, #tpu.memory_space<vmem>>, %arg10: memref<2x1xf32, #tpu.memory_space<vmem>>) attributes {dimension_semantics = [#tpu.dimension_semantics<arbitrary>], iteration_bounds = array<i64: 1>, scalar_prefetch = 0 : i64, scratch_operands = 0 : i64, tpu.core_type = #tpu.core_type<tc>, window_params = [{pipeline_mode = #tpu.pipeline_mode<synchronous>, transform_indices = @transform_0, window_bounds = array<i64: 2, 126>}, {pipeline_mode = #tpu.pipeline_mode<synchronous>, transform_indices = @transform_1, window_bounds = array<i64: 2, 1344>}, {pipeline_mode = #tpu.pipeline_mode<synchronous>, transform_indices = @transform_2, window_bounds = array<i64: 126, 32>}, {pipeline_mode = #tpu.pipeline_mode<synchronous>, transform_indices = @transform_3, window_bounds = array<i64: 1, 32>}, {pipeline_mode = #tpu.pipeline_mode<synchronous>, transform_indices = @transform_4, window_bounds = array<i64: 1, 32>}, {pipeline_mode = #tpu.pipeline_mode<synchronous>, transform_indices = @transform_5, window_bounds = array<i64: 1, 1>}, {pipeline_mode = #tpu.pipeline_mode<synchronous>, transform_indices = @transform_6, window_bounds = array<i64: 1344, 7>}, {pipeline_mode = #tpu.pipeline_mode<synchronous>, transform_indices = @transform_7, window_bounds = array<i64: 1, 7>}, {pipeline_mode = #tpu.pipeline_mode<synchronous>, transform_indices = @transform_8, window_bounds = array<i64: 2, 7>}, {pipeline_mode = #tpu.pipeline_mode<synchronous>, transform_indices = @transform_9, window_bounds = array<i64: 2, 1>}]} {
    %c0 = arith.constant 0 : index
    %c0_0 = arith.constant 0 : index
    %0 = vector.load %arg1[%c0, %c0_0] : memref<2x126xf32, #tpu.memory_space<vmem>>, vector<2x126xf32>
    %c0_1 = arith.constant 0 : index
    %c0_2 = arith.constant 0 : index
    %1 = vector.load %arg3[%c0_1, %c0_2] : memref<126x32xf32, #tpu.memory_space<vmem>>, vector<126x32xf32>
    %cst = arith.constant dense<0.000000e+00> : vector<2x32xf32>
    %2 = tpu.matmul %0, %1, %cst {dimension_numbers = #tpu.dot_dimension_numbers<[1], [0], [0], [1], [0, 0, 1, 1], [], []>} : vector<2x126xf32>, vector<126x32xf32>, vector<2x32xf32> -> vector<2x32xf32>
    %c0_3 = arith.constant 0 : index
    %c0_4 = arith.constant 0 : index
    %3 = vector.load %arg4[%c0_3, %c0_4] : memref<1x32xf32, #tpu.memory_space<vmem>>, vector<1x32xf32>
    %4 = vector.broadcast %3 : vector<1x32xf32> to vector<2x32xf32>
    %5 = arith.addf %2, %4 : vector<2x32xf32>
    %cst_5 = arith.constant 0.000000e+00 : f32
    %6 = vector.broadcast %cst_5 : f32 to vector<2x32xf32>
    %7 = arith.maximumf %5, %6 : vector<2x32xf32>
    %c0_6 = arith.constant 0 : index
    %c0_7 = arith.constant 0 : index
    %8 = vector.load %arg5[%c0_6, %c0_7] : memref<1x32xf32, #tpu.memory_space<vmem>>, vector<1x32xf32>
    %9 = vector.broadcast %8 : vector<1x32xf32> to vector<2x32xf32>
    %10 = arith.mulf %7, %9 : vector<2x32xf32>
    %cst_8 = arith.constant dense<0.000000e+00> : vector<2xf32>
    %11 = vector.multi_reduction <add>, %10, %cst_8 [1] : vector<2x32xf32> to vector<2xf32>
    %12 = vector.shape_cast %11 : vector<2xf32> to vector<2x1xf32>
    %c0_9 = arith.constant 0 : index
    %c0_10 = arith.constant 0 : index
    %13 = vector.load %arg6[%c0_9, %c0_10] : memref<1x1xf32, #tpu.memory_space<vmem>>, vector<1x1xf32>
    %14 = vector.broadcast %13 : vector<1x1xf32> to vector<2x1xf32>
    %15 = arith.addf %12, %14 : vector<2x1xf32>
    %16 = math.tanh %15 : vector<2x1xf32>
    %c0_11 = arith.constant 0 : index
    %c0_12 = arith.constant 0 : index
    %17 = vector.load %arg2[%c0_11, %c0_12] : memref<2x1344xf32, #tpu.memory_space<vmem>>, vector<2x1344xf32>
    %c0_13 = arith.constant 0 : index
    %c0_14 = arith.constant 0 : index
    %18 = vector.load %arg7[%c0_13, %c0_14] : memref<1344x7xf32, #tpu.memory_space<vmem>>, vector<1344x7xf32>
    %cst_15 = arith.constant dense<0.000000e+00> : vector<2x7xf32>
    %19 = tpu.matmul %17, %18, %cst_15 {dimension_numbers = #tpu.dot_dimension_numbers<[1], [0], [0], [1], [0, 0, 1, 1], [], []>} : vector<2x1344xf32>, vector<1344x7xf32>, vector<2x7xf32> -> vector<2x7xf32>
    %c0_16 = arith.constant 0 : index
    %c0_17 = arith.constant 0 : index
    %20 = vector.load %arg8[%c0_16, %c0_17] : memref<1x7xf32, #tpu.memory_space<vmem>>, vector<1x7xf32>
    %21 = vector.broadcast %20 : vector<1x7xf32> to vector<2x7xf32>
    %22 = arith.addf %19, %21 : vector<2x7xf32>
    %cst_18 = arith.constant dense<0xFF800000> : vector<2xf32>
    %23 = vector.multi_reduction <maximumf>, %22, %cst_18 [1] : vector<2x7xf32> to vector<2xf32>
    %24 = vector.shape_cast %23 : vector<2xf32> to vector<2x1xf32>
    %25 = vector.broadcast %24 : vector<2x1xf32> to vector<2x7xf32>
    %26 = arith.subf %22, %25 : vector<2x7xf32>
    %27 = math.exp %26 : vector<2x7xf32>
    %cst_19 = arith.constant dense<0.000000e+00> : vector<2xf32>
    %28 = vector.multi_reduction <add>, %27, %cst_19 [1] : vector<2x7xf32> to vector<2xf32>
    %29 = vector.shape_cast %28 : vector<2xf32> to vector<2x1xf32>
    %30 = vector.broadcast %29 : vector<2x1xf32> to vector<2x7xf32>
    %31 = arith.divf %27, %30 : vector<2x7xf32>
    %c0_20 = arith.constant 0 : index
    %c0_21 = arith.constant 0 : index
    %32 = vector.load %arg9[%c0_20, %c0_21] : memref<2x7xf32, #tpu.memory_space<vmem>>, vector<2x7xf32>
    tpu.vector_store %arg9[%c0_20, %c0_21], %31 {strides = array<i32>} : memref<2x7xf32, #tpu.memory_space<vmem>>, vector<2x7xf32>,
    %c0_22 = arith.constant 0 : index
    %c0_23 = arith.constant 0 : index
    %33 = vector.load %arg10[%c0_22, %c0_23] : memref<2x1xf32, #tpu.memory_space<vmem>>, vector<2x1xf32>
    tpu.vector_store %arg10[%c0_22, %c0_23], %16 {strides = array<i32>} : memref<2x1xf32, #tpu.memory_space<vmem>>, vector<2x1xf32>,
    return
  }
  func.func @transform_0(%arg0: i32) -> (i32, i32) {
    %c0_i32 = arith.constant 0 : i32
    %c0_i32_0 = arith.constant 0 : i32
    %c0_i32_1 = arith.constant 0 : i32
    return %c0_i32, %c0_i32_0 : i32, i32
  }
  func.func @transform_1(%arg0: i32) -> (i32, i32) {
    %c0_i32 = arith.constant 0 : i32
    %c0_i32_0 = arith.constant 0 : i32
    %c0_i32_1 = arith.constant 0 : i32
    return %c0_i32, %c0_i32_0 : i32, i32
  }
  func.func @transform_2(%arg0: i32) -> (i32, i32) {
    %c0_i32 = arith.constant 0 : i32
    %c0_i32_0 = arith.constant 0 : i32
    %c0_i32_1 = arith.constant 0 : i32
    return %c0_i32, %c0_i32_0 : i32, i32
  }
  func.func @transform_3(%arg0: i32) -> (i32, i32) {
    %c0_i32 = arith.constant 0 : i32
    %c0_i32_0 = arith.constant 0 : i32
    %c0_i32_1 = arith.constant 0 : i32
    return %c0_i32, %c0_i32_0 : i32, i32
  }
  func.func @transform_4(%arg0: i32) -> (i32, i32) {
    %c0_i32 = arith.constant 0 : i32
    %c0_i32_0 = arith.constant 0 : i32
    %c0_i32_1 = arith.constant 0 : i32
    return %c0_i32, %c0_i32_0 : i32, i32
  }
  func.func @transform_5(%arg0: i32) -> (i32, i32) {
    %c0_i32 = arith.constant 0 : i32
    %c0_i32_0 = arith.constant 0 : i32
    %c0_i32_1 = arith.constant 0 : i32
    return %c0_i32, %c0_i32_0 : i32, i32
  }
  func.func @transform_6(%arg0: i32) -> (i32, i32) {
    %c0_i32 = arith.constant 0 : i32
    %c0_i32_0 = arith.constant 0 : i32
    %c0_i32_1 = arith.constant 0 : i32
    return %c0_i32, %c0_i32_0 : i32, i32
  }
  func.func @transform_7(%arg0: i32) -> (i32, i32) {
    %c0_i32 = arith.constant 0 : i32
    %c0_i32_0 = arith.constant 0 : i32
    %c0_i32_1 = arith.constant 0 : i32
    return %c0_i32, %c0_i32_0 : i32, i32
  }
  func.func @transform_8(%arg0: i32) -> (i32, i32) {
    %c0_i32 = arith.constant 0 : i32
    %c0_i32_0 = arith.constant 0 : i32
    %c0_i32_1 = arith.constant 0 : i32
    return %c0_i32, %c0_i32_0 : i32, i32
  }
  func.func @transform_9(%arg0: i32) -> (i32, i32) {
    %c0_i32 = arith.constant 0 : i32
    %c0_i32_0 = arith.constant 0 : i32
    %c0_i32_1 = arith.constant 0 : i32
    return %c0_i32, %c0_i32_0 : i32, i32
  }
}

</mosaic_0001>

<llo_original>
// kernel: connectnet_forward.4
$region0: #{connectnet_forward.4}
  #allocation0 [shape = 'u32[]', space=smem, size = 0x4, offset = 0x4, fixed_abs, tag = 'smem constant byte address 0x4 - core index']
  #allocation1 [shape = 'u32[144,128]{1,0:T(1,128)}', space=vmem, size = 0x12000, scoped, tag = 'internal scratch']
  %s0 = inlined_call_operand.vmem [shape: f32[84,128], index: 0, kind: input, shape index: {}]
  %s1 = inlined_call_operand.vmem [shape: f32[128,128], index: 1, kind: input, shape index: {}]
  %s2 = inlined_call_operand.vmem [shape: f32[1,128], index: 2, kind: input, shape index: {}]
  %s3 = inlined_call_operand.vmem [shape: f32[1,128], index: 3, kind: input, shape index: {}]
  %s4 = inlined_call_operand.vmem [shape: f32[84,128], index: 4, kind: output, shape index: {}]
  %s5 = sld [smem:[#allocation0]]
  $region26: #{connectnet_forward.4} parent=0
    _
  %s7 = ssub.s32 1, %s5
  %s8 = scalar_select 0, %s7, %s5
  // Predicated region
  $region2: #{connectnet_forward.4} parent=0 // pred_check
    _
  $region3: #{connectnet_forward.4} parent=0 // pred_check_branch
    %10 = sbr.rel (0) target = $region5
  $region4: #{connectnet_forward.4} parent=0 // pred_region
    _
  $region5: #{connectnet_forward.4} parent=0 // pred_fallthru
    _
  // Predicated region
  $region6: #{connectnet_forward.4} parent=0 // pred_check
    _
  $region7: #{connectnet_forward.4} parent=0 // pred_check_branch
    %12 = sbr.rel (0) target = $region9
  $region8: #{connectnet_forward.4} parent=0 // pred_region
    _
  $region9: #{connectnet_forward.4} parent=0 // pred_fallthru
    _
  // Predicated region
  $region10: #{connectnet_forward.4} parent=0 // pred_check
    _
  $region11: #{connectnet_forward.4} parent=0 // pred_check_branch
    %14 = sbr.rel (0) target = $region13
  $region12: #{connectnet_forward.4} parent=0 // pred_region
    _
  $region13: #{connectnet_forward.4} parent=0 // pred_fallthru
    _
  // Predicated region
  $region14: #{connectnet_forward.4} parent=0 // pred_check
    _
  $region15: #{connectnet_forward.4} parent=0 // pred_check_branch
    %16 = sbr.rel (0) target = $region17
  $region16: #{connectnet_forward.4} parent=0 // pred_region
    _
  $region17: #{connectnet_forward.4} parent=0 // pred_fallthru
    _
  %v17 = vld [vmem:[%s0] sm:$0xff]
  %v18 = vld [vmem:[%s0 + $0x8] sm:$0xff]
  %v19 = vld [vmem:[%s0 + $0x10] sm:$0xff]
  %v20 = vld [vmem:[%s0 + $0x18] sm:$0xff]
  %v21 = vld [vmem:[%s0 + $0x20] sm:$0xff]
  %v22 = vld [vmem:[%s0 + $0x28] sm:$0xff]
  %v23 = vld [vmem:[%s0 + $0x30] sm:$0xff]
  %v24 = vld [vmem:[%s0 + $0x38] sm:$0xff]
  %v25 = vld [vmem:[%s0 + $0x40] sm:$0xff]
  %v26 = vld [vmem:[%s0 + $0x48] sm:$0xff]
  %v27 = vld [vmem:[%s0 + $0x50] sm:$0xf]
  %v28 = vld [vmem:[%s1] sm:$0xff]
  %v29 = vld [vmem:[%s1 + $0x8] sm:$0xff]
  %v30 = vld [vmem:[%s1 + $0x10] sm:$0xff]
  %v31 = vld [vmem:[%s1 + $0x18] sm:$0xff]
  %v32 = vld [vmem:[%s1 + $0x20] sm:$0xff]
  %v33 = vld [vmem:[%s1 + $0x28] sm:$0xff]
  %v34 = vld [vmem:[%s1 + $0x30] sm:$0xff]
  %v35 = vld [vmem:[%s1 + $0x38] sm:$0xff]
  %v36 = vld [vmem:[%s1 + $0x40] sm:$0xff]
  %v37 = vld [vmem:[%s1 + $0x48] sm:$0xff]
  %v38 = vld [vmem:[%s1 + $0x50] sm:$0xff]
  %v39 = vld [vmem:[%s1 + $0x58] sm:$0xff]
  %v40 = vld [vmem:[%s1 + $0x60] sm:$0xff]
  %v41 = vld [vmem:[%s1 + $0x68] sm:$0xff]
  %v42 = vld [vmem:[%s1 + $0x70] sm:$0xff]
  %v43 = vld [vmem:[%s1 + $0x78] sm:$0xff]
  %44 = vmatprep.subr.mxu0 0.0
  %45 = vmatpush1.msra.mxu0 %v28
  %46 = vmatprep.subr.mxu0 0.0
  %47 = vmatpush1.msra.mxu0 %v29
  %48 = vmatprep.subr.mxu0 0.0
  %49 = vmatpush1.msra.mxu0 %v30
  %50 = vmatprep.subr.mxu0 0.0
  %51 = vmatpush1.msra.mxu0 %v31
  %52 = vmatprep.subr.mxu0 0.0
  %53 = vmatpush1.msra.mxu0 %v32
  %54 = vmatprep.subr.mxu0 0.0
  %55 = vmatpush1.msra.mxu0 %v33
  %56 = vmatprep.subr.mxu0 0.0
  %57 = vmatpush1.msra.mxu0 %v34
  %58 = vmatprep.subr.mxu0 0.0
  %59 = vmatpush1.msra.mxu0 %v35
  %60 = vmatprep.subr.mxu0 0.0
  %61 = vmatpush1.msra.mxu0 %v36
  %62 = vmatprep.subr.mxu0 0.0
  %63 = vmatpush1.msra.mxu0 %v37
  %64 = vmatprep.subr.mxu0 0.0
  %65 = vmatpush1.msra.mxu0 %v38
  %66 = vmatprep.subr.mxu0 0.0
  %67 = vmatpush1.msra.mxu0 %v39
  %68 = vmatprep.subr.mxu0 0.0
  %69 = vmatpush1.msra.mxu0 %v40
  %70 = vmatprep.subr.mxu0 0.0
  %71 = vmatpush1.msra.mxu0 %v41
  %72 = vmatprep.subr.mxu0 0.0
  %73 = vmatpush1.msra.mxu0 %v42
  %74 = vmatprep.subr.mxu0 0.0
  %75 = vmatpush1.msra.mxu0 %v43
  %76 = vmatprep.subr.mxu0 0.0
  %77 = vmatpush1.msra.mxu0 0.0
  %78 = vmatprep.subr.mxu0 0.0
  %79 = vmatpush1.msra.mxu0 0.0
  %80 = vmatprep.subr.mxu0 0.0
  %81 = vmatpush1.msra.mxu0 0.0
  %82 = vmatprep.subr.mxu0 0.0
  %83 = vmatpush1.msra.mxu0 0.0
  %84 = vmatprep.subr.mxu0 0.0
  %85 = vmatpush1.msra.mxu0 0.0
  %86 = vmatprep.subr.mxu0 0.0
  %87 = vmatpush1.msra.mxu0 0.0
  %88 = vmatprep.subr.mxu0 0.0
  %89 = vmatpush1.msra.mxu0 0.0
  %90 = vmatprep.subr.mxu0 0.0
  %91 = vmatpush1.msra.mxu0 0.0
  %92 = vmatprep.subr.mxu0 0.0
  %93 = vmatpush1.msra.mxu0 0.0
  %94 = vmatprep.subr.mxu0 0.0
  %95 = vmatpush1.msra.mxu0 0.0
  %96 = vmatprep.subr.mxu0 0.0
  %97 = vmatpush1.msra.mxu0 0.0
  %98 = vmatprep.subr.mxu0 0.0
  %99 = vmatpush1.msra.mxu0 0.0
  %100 = vmatprep.subr.mxu0 0.0
  %101 = vmatpush1.msra.mxu0 0.0
  %102 = vmatprep.subr.mxu0 0.0
  %103 = vmatpush1.msra.mxu0 0.0
  %104 = vmatprep.subr.mxu0 0.0
  %105 = vmatpush1.msra.mxu0 0.0
  %106 = vmatprep.subr.mxu0 0.0
  %107 = vmatpush1.msra.mxu0 0.0
  %108 = vmatprep.mubr.f32.mxu0 0.0
  %109 = vmatmul.mubr.f32.gmra.mrb[0].mxu0 %v17
  %v110 = vpop.f32.mrb[0].mxu0
  %v111 = vadd.f32 0.0, %v110
  %v112 = vpop.f32.mrb[0].mxu0
  %113 = vmatprep.mubr.f32.mxu0 0.0
  %114 = vmatmul.mubr.f32.gmra.mrb[0].mxu0 %v18
  %v115 = vpop.f32.mrb[0].mxu0
  %v116 = vadd.f32 0.0, %v115
  %v117 = vpop.f32.mrb[0].mxu0
  %118 = vmatprep.mubr.f32.mxu0 0.0
  %119 = vmatmul.mubr.f32.gmra.mrb[0].mxu0 %v19
  %v120 = vpop.f32.mrb[0].mxu0
  %v121 = vadd.f32 0.0, %v120
  %v122 = vpop.f32.mrb[0].mxu0
  %123 = vmatprep.mubr.f32.mxu0 0.0
  %124 = vmatmul.mubr.f32.gmra.mrb[0].mxu0 %v20
  %v125 = vpop.f32.mrb[0].mxu0
  %v126 = vadd.f32 0.0, %v125
  %v127 = vpop.f32.mrb[0].mxu0
  %128 = vmatprep.mubr.f32.mxu0 0.0
  %129 = vmatmul.mubr.f32.gmra.mrb[0].mxu0 %v21
  %v130 = vpop.f32.mrb[0].mxu0
  %v131 = vadd.f32 0.0, %v130
  %v132 = vpop.f32.mrb[0].mxu0
  %133 = vmatprep.mubr.f32.mxu0 0.0
  %134 = vmatmul.mubr.f32.gmra.mrb[0].mxu0 %v22
  %v135 = vpop.f32.mrb[0].mxu0
  %v136 = vadd.f32 0.0, %v135
  %v137 = vpop.f32.mrb[0].mxu0
  %138 = vmatprep.mubr.f32.mxu0 0.0
  %139 = vmatmul.mubr.f32.gmra.mrb[0].mxu0 %v23
  %v140 = vpop.f32.mrb[0].mxu0
  %v141 = vadd.f32 0.0, %v140
  %v142 = vpop.f32.mrb[0].mxu0
  %143 = vmatprep.mubr.f32.mxu0 0.0
  %144 = vmatmul.mubr.f32.gmra.mrb[0].mxu0 %v24
  %v145 = vpop.f32.mrb[0].mxu0
  %v146 = vadd.f32 0.0, %v145
  %v147 = vpop.f32.mrb[0].mxu0
  %148 = vmatprep.mubr.f32.mxu0 0.0
  %149 = vmatmul.mubr.f32.gmra.mrb[0].mxu0 %v25
  %v150 = vpop.f32.mrb[0].mxu0
  %v151 = vadd.f32 0.0, %v150
  %v152 = vpop.f32.mrb[0].mxu0
  %153 = vmatprep.mubr.f32.mxu0 0.0
  %154 = vmatmul.mubr.f32.gmra.mrb[0].mxu0 %v26
  %v155 = vpop.f32.mrb[0].mxu0
  %v156 = vadd.f32 0.0, %v155
  %v157 = vpop.f32.mrb[0].mxu0
  %158 = vmatprep.mubr.f32.mxu0 0.0
  %159 = vmatmul.mubr.f32.gmra.mrb[0].mxu0 %v27
  %v160 = vpop.f32.mrb[0].mxu0
  %v161 = vadd.f32 0.0, %v160
  %v162 = vpop.f32.mrb[0].mxu0
  %163 = vdwg.mxu0
  %v164 = vld [vmem:[%s2] sm:$0x1]
  %v166 = vlaneseq
  %v167 = vshrl.u32 %v166, 7
  %v168 = vsub.s32 0, %v167
  %v169 = vrot.slane %v164, %v168
  %v171 = vmul.f32 %v111, %v169
  %v172 = vmul.f32 %v116, %v169
  %v173 = vmul.f32 %v121, %v169
  %v174 = vmul.f32 %v126, %v169
  %v175 = vmul.f32 %v131, %v169
  %v176 = vmul.f32 %v136, %v169
  %v177 = vmul.f32 %v141, %v169
  %v178 = vmul.f32 %v146, %v169
  %v179 = vmul.f32 %v151, %v169
  %v180 = vmul.f32 %v156, %v169
  %v181 = vmul.f32 %v161, %v169
  %v182 = vld [vmem:[%s3] sm:$0x1]
  %v184 = vlaneseq
  %v185 = vshrl.u32 %v184, 7
  %v186 = vsub.s32 0, %v185
  %v187 = vrot.slane %v182, %v186
  %v189 = vadd.f32 %v171, %v187
  %v190 = vadd.f32 %v172, %v187
  %v191 = vadd.f32 %v173, %v187
  %v192 = vadd.f32 %v174, %v187
  %v193 = vadd.f32 %v175, %v187
  %v194 = vadd.f32 %v176, %v187
  %v195 = vadd.f32 %v177, %v187
  %v196 = vadd.f32 %v178, %v187
  %v197 = vadd.f32 %v179, %v187
  %v198 = vadd.f32 %v180, %v187
  %v199 = vadd.f32 %v181, %v187
  %v200 = vmax.f32 %v189, 0.0
  %v201 = vmax.f32 %v190, 0.0
  %v202 = vmax.f32 %v191, 0.0
  %v203 = vmax.f32 %v192, 0.0
  %v204 = vmax.f32 %v193, 0.0
  %v205 = vmax.f32 %v194, 0.0
  %v206 = vmax.f32 %v195, 0.0
  %v207 = vmax.f32 %v196, 0.0
  %v208 = vmax.f32 %v197, 0.0
  %v209 = vmax.f32 %v198, 0.0
  %v210 = vmax.f32 %v199, 0.0
  %211 = vst [vmem:[%s4] sm:$0xff] %v200
  %212 = vst [vmem:[%s4 + $0x8] sm:$0xff] %v201
  %213 = vst [vmem:[%s4 + $0x10] sm:$0xff] %v202
  %214 = vst [vmem:[%s4 + $0x18] sm:$0xff] %v203
  %215 = vst [vmem:[%s4 + $0x20] sm:$0xff] %v204
  %216 = vst [vmem:[%s4 + $0x28] sm:$0xff] %v205
  %217 = vst [vmem:[%s4 + $0x30] sm:$0xff] %v206
  %218 = vst [vmem:[%s4 + $0x38] sm:$0xff] %v207
  %219 = vst [vmem:[%s4 + $0x40] sm:$0xff] %v208
  %220 = vst [vmem:[%s4 + $0x48] sm:$0xff] %v209
  %221 = vst [vmem:[%s4 + $0x50] sm:$0xf] %v210
  // Predicated region
  $region18: #{connectnet_forward.4} parent=0 // pred_check
    _
  $region19: #{connectnet_forward.4} parent=0 // pred_check_branch
    %223 = sbr.rel (0) target = $region21
  $region20: #{connectnet_forward.4} parent=0 // pred_region
    _
  $region21: #{connectnet_forward.4} parent=0 // pred_fallthru
    _
  // Predicated region
  $region22: #{connectnet_forward.4} parent=0 // pred_check
    _
  $region23: #{connectnet_forward.4} parent=0 // pred_check_branch
    %225 = sbr.rel (0) target = $region25
  $region24: #{connectnet_forward.4} parent=0 // pred_region
    _
  $region25: #{connectnet_forward.4} parent=0 // pred_fallthru
    _

// kernel: connectnet_forward.5
$region0: #{connectnet_forward.5}
  #allocation0 [shape = 'u32[]', space=smem, size = 0x4, offset = 0x4, fixed_abs, tag = 'smem constant byte address 0x4 - core index']
  #allocation1 [shape = 'u32[144,128]{1,0:T(1,128)}', space=vmem, size = 0x12000, scoped, tag = 'internal scratch']
  #allocation2 [shape = 'f32[1,1]{1,0:T(1,128)S(1)}', space=vmem, size = 0x200, scoped, tag = 'scoped memory for connectnet_forward.5']
  %s0 = inlined_call_operand.vmem [shape: f32[2,126], index: 0, kind: input, shape index: {}]
  %s1 = inlined_call_operand.vmem [shape: f32[2,1344], index: 1, kind: input, shape index: {}]
  %s2 = inlined_call_operand.vmem [shape: f32[126,32], index: 2, kind: input, shape index: {}]
  %s3 = inlined_call_operand.vmem [shape: f32[1,32], index: 3, kind: input, shape index: {}]
  %s4 = inlined_call_operand.vmem [shape: f32[1,32], index: 4, kind: input, shape index: {}]
  %s5 = inlined_call_operand.<no memory space> [shape: f32[1,1], index: 5, kind: input, shape index: {}]
  %s6 = inlined_call_operand.vmem [shape: f32[1344,7], index: 6, kind: input, shape index: {}]
  %s7 = inlined_call_operand.vmem [shape: f32[1,7], index: 7, kind: input, shape index: {}]
  %s8 = inlined_call_operand.hbm [shape: f32[2,7], index: 8, kind: output, shape index: {0}]
  %s9 = inlined_call_operand.vmem [shape: f32[2,1], index: 9, kind: output, shape index: {1}]
  %10 = xla_tuple %s8, %s9
  %s11 = sld [smem:[#allocation0]]
  $region50: #{connectnet_forward.5} parent=0
    _
  %s13 = ssub.s32 1, %s11
  %s14 = scalar_select 0, %s13, %s11
  %v15 = vstv %s5
  %16 = vst [vmem:[#allocation2] sm:$0x1] %v15
  $region1: #{connectnet_forward.5} parent=0
    #allocation3 [shape = 'u8[1024]{0}', space=vmem, size = 0x400, scoped, tag = 'output window, operand 0, single buffered']
    #allocation4 [shape = 's32[1]{0}', space=sflag, size = 0x4, scoped, tag = 'scoped memory for connectnet_forward.5']
    %17 = vsyncpa [#allocation4], 0
    // Predicated region
    $region2: #{connectnet_forward.5} parent=1 // pred_check
      _
    $region3: #{connectnet_forward.5} parent=1 // pred_check_branch
      %19 = sbr.rel (0) target = $region5
    $region4: #{connectnet_forward.5} parent=1 // pred_region
      _
    $region5: #{connectnet_forward.5} parent=1 // pred_fallthru
      _
    // Predicated region
    $region6: #{connectnet_forward.5} parent=1 // pred_check
      _
    $region7: #{connectnet_forward.5} parent=1 // pred_check_branch
      %21 = sbr.rel (0) target = $region9
    $region8: #{connectnet_forward.5} parent=1 // pred_region
      _
    $region9: #{connectnet_forward.5} parent=1 // pred_fallthru
      _
    // Predicated region
    $region10: #{connectnet_forward.5} parent=1 // pred_check
      _
    $region11: #{connectnet_forward.5} parent=1 // pred_check_branch
      %23 = sbr.rel (0) target = $region13
    $region12: #{connectnet_forward.5} parent=1 // pred_region
      _
    $region13: #{connectnet_forward.5} parent=1 // pred_fallthru
      _
    // Predicated region
    $region14: #{connectnet_forward.5} parent=1 // pred_check
      _
    $region15: #{connectnet_forward.5} parent=1 // pred_check_branch
      %25 = sbr.rel (0) target = $region17
    $region16: #{connectnet_forward.5} parent=1 // pred_region
      _
    $region17: #{connectnet_forward.5} parent=1 // pred_fallthru
      _
    // Predicated region
    $region18: #{connectnet_forward.5} parent=1 // pred_check
      _
    $region19: #{connectnet_forward.5} parent=1 // pred_check_branch
      %27 = sbr.rel (0) target = $region21
    $region20: #{connectnet_forward.5} parent=1 // pred_region
      _
    $region21: #{connectnet_forward.5} parent=1 // pred_fallthru
      _
    // Predicated region
    $region22: #{connectnet_forward.5} parent=1 // pred_check
      _
    $region23: #{connectnet_forward.5} parent=1 // pred_check_branch
      %29 = sbr.rel (0) target = $region25
    $region24: #{connectnet_forward.5} parent=1 // pred_region
      _
    $region25: #{connectnet_forward.5} parent=1 // pred_fallthru
      _
    // Predicated region
    $region26: #{connectnet_forward.5} parent=1 // pred_check
      _
    $region27: #{connectnet_forward.5} parent=1 // pred_check_branch
      %31 = sbr.rel (0) target = $region29
    $region28: #{connectnet_forward.5} parent=1 // pred_region
      _
    $region29: #{connectnet_forward.5} parent=1 // pred_fallthru
      _
    // Predicated region
    $region30: #{connectnet_forward.5} parent=1 // pred_check
      _
    $region31: #{connectnet_forward.5} parent=1 // pred_check_branch
      %33 = sbr.rel (0) target = $region33
    $region32: #{connectnet_forward.5} parent=1 // pred_region
      _
    $region33: #{connectnet_forward.5} parent=1 // pred_fallthru
      _
    %v34 = vld [vmem:[%s0] sm:$0x3]
    %v35 = vld [vmem:[%s2] sm:$0xff]
    %v36 = vld [vmem:[%s2 + $0x8] sm:$0xff]
    %v37 = vld [vmem:[%s2 + $0x10] sm:$0xff]
    %v38 = vld [vmem:[%s2 + $0x18] sm:$0xff]
    %v39 = vld [vmem:[%s2 + $0x20] sm:$0xff]
    %v40 = vld [vmem:[%s2 + $0x28] sm:$0xff]
    %v41 = vld [vmem:[%s2 + $0x30] sm:$0xff]
    %v42 = vld [vmem:[%s2 + $0x38] sm:$0xff]
    %v43 = vld [vmem:[%s2 + $0x40] sm:$0xff]
    %v44 = vld [vmem:[%s2 + $0x48] sm:$0xff]
    %v45 = vld [vmem:[%s2 + $0x50] sm:$0xff]
    %v46 = vld [vmem:[%s2 + $0x58] sm:$0xff]
    %v47 = vld [vmem:[%s2 + $0x60] sm:$0xff]
    %v48 = vld [vmem:[%s2 + $0x68] sm:$0xff]
    %v49 = vld [vmem:[%s2 + $0x70] sm:$0xff]
    %v50 = vld [vmem:[%s2 + $0x78] sm:$0x3f]
    %v51 = vld [vmem:[%s3] sm:$0x1]
    %v53 = vlaneseq
    %v54 = vshrl.u32 %v53, 7
    %v55 = vsub.s32 0, %v54
    %v56 = vrot.slane %v51, %v55
    %vm58 = vcmask 1031168
    %v60 = vsel %vm58, %v34, 0
    %vm62 = vcmask 1045504
    %v64 = vsel %vm62, %v50, 0
    %66 = vmatprep.subr.mxu0 0.0
    %67 = vmatpush1.msra.mxu0 %v35
    %68 = vmatprep.subr.mxu0 0.0
    %69 = vmatpush1.msra.mxu0 %v36
    %70 = vmatprep.subr.mxu0 0.0
    %71 = vmatpush1.msra.mxu0 %v37
    %72 = vmatprep.subr.mxu0 0.0
    %73 = vmatpush1.msra.mxu0 %v38
    %74 = vmatprep.subr.mxu0 0.0
    %75 = vmatpush1.msra.mxu0 %v39
    %76 = vmatprep.subr.mxu0 0.0
    %77 = vmatpush1.msra.mxu0 %v40
    %78 = vmatprep.subr.mxu0 0.0
    %79 = vmatpush1.msra.mxu0 %v41
    %80 = vmatprep.subr.mxu0 0.0
    %81 = vmatpush1.msra.mxu0 %v42
    %82 = vmatprep.subr.mxu0 0.0
    %83 = vmatpush1.msra.mxu0 %v43
    %84 = vmatprep.subr.mxu0 0.0
    %85 = vmatpush1.msra.mxu0 %v44
    %86 = vmatprep.subr.mxu0 0.0
    %87 = vmatpush1.msra.mxu0 %v45
    %88 = vmatprep.subr.mxu0 0.0
    %89 = vmatpush1.msra.mxu0 %v46
    %90 = vmatprep.subr.mxu0 0.0
    %91 = vmatpush1.msra.mxu0 %v47
    %92 = vmatprep.subr.mxu0 0.0
    %93 = vmatpush1.msra.mxu0 %v48
    %94 = vmatprep.subr.mxu0 0.0
    %95 = vmatpush1.msra.mxu0 %v49
    %96 = vmatprep.subr.mxu0 0.0
    %97 = vmatpush1.msra.mxu0 %v64
    %98 = vmatprep.subr.mxu0 0.0
    %99 = vmatpush1.msra.mxu0 0.0
    %100 = vmatprep.subr.mxu0 0.0
    %101 = vmatpush1.msra.mxu0 0.0
    %102 = vmatprep.subr.mxu0 0.0
    %103 = vmatpush1.msra.mxu0 0.0
    %104 = vmatprep.subr.mxu0 0.0
    %105 = vmatpush1.msra.mxu0 0.0
    %106 = vmatprep.subr.mxu0 0.0
    %107 = vmatpush1.msra.mxu0 0.0
    %108 = vmatprep.subr.mxu0 0.0
    %109 = vmatpush1.msra.mxu0 0.0
    %110 = vmatprep.subr.mxu0 0.0
    %111 = vmatpush1.msra.mxu0 0.0
    %112 = vmatprep.subr.mxu0 0.0
    %113 = vmatpush1.msra.mxu0 0.0
    %114 = vmatprep.subr.mxu0 0.0
    %115 = vmatpush1.msra.mxu0 0.0
    %116 = vmatprep.subr.mxu0 0.0
    %117 = vmatpush1.msra.mxu0 0.0
    %118 = vmatprep.subr.mxu0 0.0
    %119 = vmatpush1.msra.mxu0 0.0
    %120 = vmatprep.subr.mxu0 0.0
    %121 = vmatpush1.msra.mxu0 0.0
    %122 = vmatprep.subr.mxu0 0.0
    %123 = vmatpush1.msra.mxu0 0.0
    %124 = vmatprep.subr.mxu0 0.0
    %125 = vmatpush1.msra.mxu0 0.0
    %126 = vmatprep.subr.mxu0 0.0
    %127 = vmatpush1.msra.mxu0 0.0
    %128 = vmatprep.subr.mxu0 0.0
    %129 = vmatpush1.msra.mxu0 0.0
    %130 = vmatprep.mubr.f32.mxu0 0.0
    %131 = vmatmul.mubr.f32.gmra.mrb[0].mxu0 %v60
    %v132 = vpop.f32.mrb[0].mxu0
    %v133 = vadd.f32 %v56, %v132
    %v134 = vpop.f32.mrb[0].mxu0
    %135 = vdwg.mxu0
    %v136 = vmax.f32 %v133, 0.0
    %v137 = vld [vmem:[%s4] sm:$0x1]
    %v139 = vlaneseq
    %v140 = vshrl.u32 %v139, 7
    %v141 = vsub.s32 0, %v140
    %v142 = vrot.slane %v137, %v141
    %v144 = vmul.f32 %v136, %v142
    %vm145 = vcmask 254976
    %v146 = vsel %vm145, %v144, 0.0
    %147 = vadd.xlane.f32.xlu0 %v146
    %v148 = vpop.xlane.xlu0 %147
    %v149 = vld [vmem:[#allocation2] sm:$0x1]
    %v151 = vlaneseq
    %v152 = vshrl.u32 %v151, 7
    %v153 = vsub.s32 0, %v152
    %v154 = vrot.slane %v149, %v153
    %v156 = vadd.f32 %v148, %v154
    %v157 = vtanh.pop %v156
    %v158 = vld [vmem:[%s1] sm:$0xff]
    %v159 = vld [vmem:[%s1 + $0x8] sm:$0xff]
    %v160 = vld [vmem:[%s1 + $0x10] sm:$0x3f]
    %v161 = vld [vmem:[%s6] sm:$0xff]
    %v162 = vld [vmem:[%s6 + $0x8] sm:$0xff]
    %v163 = vld [vmem:[%s6 + $0x10] sm:$0xff]
    %v164 = vld [vmem:[%s6 + $0x18] sm:$0xff]
    %v165 = vld [vmem:[%s6 + $0x20] sm:$0xff]
    %v166 = vld [vmem:[%s6 + $0x28] sm:$0xff]
    %v167 = vld [vmem:[%s6 + $0x30] sm:$0xff]
    %v168 = vld [vmem:[%s6 + $0x38] sm:$0xff]
    %v169 = vld [vmem:[%s6 + $0x40] sm:$0xff]
    %v170 = vld [vmem:[%s6 + $0x48] sm:$0xff]
    %v171 = vld [vmem:[%s6 + $0x50] sm:$0xff]
    %v172 = vld [vmem:[%s6 + $0x58] sm:$0xff]
    %v173 = vld [vmem:[%s6 + $0x60] sm:$0xff]
    %v174 = vld [vmem:[%s6 + $0x68] sm:$0xff]
    %v175 = vld [vmem:[%s6 + $0x70] sm:$0xff]
    %v176 = vld [vmem:[%s6 + $0x78] sm:$0xff]
    %v177 = vld [vmem:[%s6 + $0x80] sm:$0xff]
    %v178 = vld [vmem:[%s6 + $0x88] sm:$0xff]
    %v179 = vld [vmem:[%s6 + $0x90] sm:$0xff]
    %v180 = vld [vmem:[%s6 + $0x98] sm:$0xff]
    %v181 = vld [vmem:[%s6 + $0xa0] sm:$0xff]
    %v182 = vld [vmem:[%s6 + $0xa8] sm:$0xff]
    %v183 = vld [vmem:[%s6 + $0xb0] sm:$0xff]
    %v184 = vld [vmem:[%s6 + $0xb8] sm:$0xff]
    %v185 = vld [vmem:[%s6 + $0xc0] sm:$0xff]
    %v186 = vld [vmem:[%s6 + $0xc8] sm:$0xff]
    %v187 = vld [vmem:[%s6 + $0xd0] sm:$0xff]
    %v188 = vld [vmem:[%s6 + $0xd8] sm:$0xff]
    %v189 = vld [vmem:[%s6 + $0xe0] sm:$0xff]
    %v190 = vld [vmem:[%s6 + $0xe8] sm:$0xff]
    %v191 = vld [vmem:[%s6 + $0xf0] sm:$0xff]
    %v192 = vld [vmem:[%s6 + $0xf8] sm:$0xff]
    %v193 = vld [vmem:[%s6 + $0x100] sm:$0xff]
    %v194 = vld [vmem:[%s6 + $0x108] sm:$0xff]
    %v195 = vld [vmem:[%s6 + $0x110] sm:$0xff]
    %v196 = vld [vmem:[%s6 + $0x118] sm:$0xff]
    %v197 = vld [vmem:[%s6 + $0x120] sm:$0xff]
    %v198 = vld [vmem:[%s6 + $0x128] sm:$0xff]
    %v199 = vld [vmem:[%s6 + $0x130] sm:$0xff]
    %v200 = vld [vmem:[%s6 + $0x138] sm:$0xff]
    %v201 = vld [vmem:[%s6 + $0x140] sm:$0xff]
    %v202 = vld [vmem:[%s6 + $0x148] sm:$0xff]
    %v203 = vld [vmem:[%s6 + $0x150] sm:$0xff]
    %v204 = vld [vmem:[%s6 + $0x158] sm:$0xff]
    %v205 = vld [vmem:[%s6 + $0x160] sm:$0xff]
    %v206 = vld [vmem:[%s6 + $0x168] sm:$0xff]
    %v207 = vld [vmem:[%s6 + $0x170] sm:$0xff]
    %v208 = vld [vmem:[%s6 + $0x178] sm:$0xff]
    %v209 = vld [vmem:[%s6 + $0x180] sm:$0xff]
    %v210 = vld [vmem:[%s6 + $0x188] sm:$0xff]
    %v211 = vld [vmem:[%s6 + $0x190] sm:$0xff]
    %v212 = vld [vmem:[%s6 + $0x198] sm:$0xff]
    %v213 = vld [vmem:[%s6 + $0x1a0] sm:$0xff]
    %v214 = vld [vmem:[%s6 + $0x1a8] sm:$0xff]
    %v215 = vld [vmem:[%s6 + $0x1b0] sm:$0xff]
    %v216 = vld [vmem:[%s6 + $0x1b8] sm:$0xff]
    %v217 = vld [vmem:[%s6 + $0x1c0] sm:$0xff]
    %v218 = vld [vmem:[%s6 + $0x1c8] sm:$0xff]
    %v219 = vld [vmem:[%s6 + $0x1d0] sm:$0xff]
    %v220 = vld [vmem:[%s6 + $0x1d8] sm:$0xff]
    %v221 = vld [vmem:[%s6 + $0x1e0] sm:$0xff]
    %v222 = vld [vmem:[%s6 + $0x1e8] sm:$0xff]
    %v223 = vld [vmem:[%s6 + $0x1f0] sm:$0xff]
    %v224 = vld [vmem:[%s6 + $0x1f8] sm:$0xff]
    %v225 = vld [vmem:[%s6 + $0x200] sm:$0xff]
    %v226 = vld [vmem:[%s6 + $0x208] sm:$0xff]
    %v227 = vld [vmem:[%s6 + $0x210] sm:$0xff]
    %v228 = vld [vmem:[%s6 + $0x218] sm:$0xff]
    %v229 = vld [vmem:[%s6 + $0x220] sm:$0xff]
    %v230 = vld [vmem:[%s6 + $0x228] sm:$0xff]
    %v231 = vld [vmem:[%s6 + $0x230] sm:$0xff]
    %v232 = vld [vmem:[%s6 + $0x238] sm:$0xff]
    %v233 = vld [vmem:[%s6 + $0x240] sm:$0xff]
    %v234 = vld [vmem:[%s6 + $0x248] sm:$0xff]
    %v235 = vld [vmem:[%s6 + $0x250] sm:$0xff]
    %v236 = vld [vmem:[%s6 + $0x258] sm:$0xff]
    %v237 = vld [vmem:[%s6 + $0x260] sm:$0xff]
    %v238 = vld [vmem:[%s6 + $0x268] sm:$0xff]
    %v239 = vld [vmem:[%s6 + $0x270] sm:$0xff]
    %v240 = vld [vmem:[%s6 + $0x278] sm:$0xff]
    %v241 = vld [vmem:[%s6 + $0x280] sm:$0xff]
    %v242 = vld [vmem:[%s6 + $0x288] sm:$0xff]
    %v243 = vld [vmem:[%s6 + $0x290] sm:$0xff]
    %v244 = vld [vmem:[%s6 + $0x298] sm:$0xff]
    %v245 = vld [vmem:[%s6 + $0x2a0] sm:$0xff]
    %v246 = vld [vmem:[%s6 + $0x2a8] sm:$0xff]
    %v247 = vld [vmem:[%s6 + $0x2b0] sm:$0xff]
    %v248 = vld [vmem:[%s6 + $0x2b8] sm:$0xff]
    %v249 = vld [vmem:[%s6 + $0x2c0] sm:$0xff]
    %v250 = vld [vmem:[%s6 + $0x2c8] sm:$0xff]
    %v251 = vld [vmem:[%s6 + $0x2d0] sm:$0xff]
    %v252 = vld [vmem:[%s6 + $0x2d8] sm:$0xff]
    %v253 = vld [vmem:[%s6 + $0x2e0] sm:$0xff]
    %v254 = vld [vmem:[%s6 + $0x2e8] sm:$0xff]
    %v255 = vld [vmem:[%s6 + $0x2f0] sm:$0xff]
    %v256 = vld [vmem:[%s6 + $0x2f8] sm:$0xff]
    %v257 = vld [vmem:[%s6 + $0x300] sm:$0xff]
    %v258 = vld [vmem:[%s6 + $0x308] sm:$0xff]
    %v259 = vld [vmem:[%s6 + $0x310] sm:$0xff]
    %v260 = vld [vmem:[%s6 + $0x318] sm:$0xff]
    %v261 = vld [vmem:[%s6 + $0x320] sm:$0xff]
    %v262 = vld [vmem:[%s6 + $0x328] sm:$0xff]
    %v263 = vld [vmem:[%s6 + $0x330] sm:$0xff]
    %v264 = vld [vmem:[%s6 + $0x338] sm:$0xff]
    %v265 = vld [vmem:[%s6 + $0x340] sm:$0xff]
    %v266 = vld [vmem:[%s6 + $0x348] sm:$0xff]
    %v267 = vld [vmem:[%s6 + $0x350] sm:$0xff]
    %v268 = vld [vmem:[%s6 + $0x358] sm:$0xff]
    %v269 = vld [vmem:[%s6 + $0x360] sm:$0xff]
    %v270 = vld [vmem:[%s6 + $0x368] sm:$0xff]
    %v271 = vld [vmem:[%s6 + $0x370] sm:$0xff]
    %v272 = vld [vmem:[%s6 + $0x378] sm:$0xff]
    %v273 = vld [vmem:[%s6 + $0x380] sm:$0xff]
    %v274 = vld [vmem:[%s6 + $0x388] sm:$0xff]
    %v275 = vld [vmem:[%s6 + $0x390] sm:$0xff]
    %v276 = vld [vmem:[%s6 + $0x398] sm:$0xff]
    %v277 = vld [vmem:[%s6 + $0x3a0] sm:$0xff]
    %v278 = vld [vmem:[%s6 + $0x3a8] sm:$0xff]
    %v279 = vld [vmem:[%s6 + $0x3b0] sm:$0xff]
    %v280 = vld [vmem:[%s6 + $0x3b8] sm:$0xff]
    %v281 = vld [vmem:[%s6 + $0x3c0] sm:$0xff]
    %v282 = vld [vmem:[%s6 + $0x3c8] sm:$0xff]
    %v283 = vld [vmem:[%s6 + $0x3d0] sm:$0xff]
    %v284 = vld [vmem:[%s6 + $0x3d8] sm:$0xff]
    %v285 = vld [vmem:[%s6 + $0x3e0] sm:$0xff]
    %v286 = vld [vmem:[%s6 + $0x3e8] sm:$0xff]
    %v287 = vld [vmem:[%s6 + $0x3f0] sm:$0xff]
    %v288 = vld [vmem:[%s6 + $0x3f8] sm:$0xff]
    %v289 = vld [vmem:[%s6 + $0x400] sm:$0xff]
    %v290 = vld [vmem:[%s6 + $0x408] sm:$0xff]
    %v291 = vld [vmem:[%s6 + $0x410] sm:$0xff]
    %v292 = vld [vmem:[%s6 + $0x418] sm:$0xff]
    %v293 = vld [vmem:[%s6 + $0x420] sm:$0xff]
    %v294 = vld [vmem:[%s6 + $0x428] sm:$0xff]
    %v295 = vld [vmem:[%s6 + $0x430] sm:$0xff]
    %v296 = vld [vmem:[%s6 + $0x438] sm:$0xff]
    %v297 = vld [vmem:[%s6 + $0x440] sm:$0xff]
    %v298 = vld [vmem:[%s6 + $0x448] sm:$0xff]
    %v299 = vld [vmem:[%s6 + $0x450] sm:$0xff]
    %v300 = vld [vmem:[%s6 + $0x458] sm:$0xff]
    %v301 = vld [vmem:[%s6 + $0x460] sm:$0xff]
    %v302 = vld [vmem:[%s6 + $0x468] sm:$0xff]
    %v303 = vld [vmem:[%s6 + $0x470] sm:$0xff]
    %v304 = vld [vmem:[%s6 + $0x478] sm:$0xff]
    %v305 = vld [vmem:[%s6 + $0x480] sm:$0xff]
    %v306 = vld [vmem:[%s6 + $0x488] sm:$0xff]
    %v307 = vld [vmem:[%s6 + $0x490] sm:$0xff]
    %v308 = vld [vmem:[%s6 + $0x498] sm:$0xff]
    %v309 = vld [vmem:[%s6 + $0x4a0] sm:$0xff]
    %v310 = vld [vmem:[%s6 + $0x4a8] sm:$0xff]
    %v311 = vld [vmem:[%s6 + $0x4b0] sm:$0xff]
    %v312 = vld [vmem:[%s6 + $0x4b8] sm:$0xff]
    %v313 = vld [vmem:[%s6 + $0x4c0] sm:$0xff]
    %v314 = vld [vmem:[%s6 + $0x4c8] sm:$0xff]
    %v315 = vld [vmem:[%s6 + $0x4d0] sm:$0xff]
    %v316 = vld [vmem:[%s6 + $0x4d8] sm:$0xff]
    %v317 = vld [vmem:[%s6 + $0x4e0] sm:$0xff]
    %v318 = vld [vmem:[%s6 + $0x4e8] sm:$0xff]
    %v319 = vld [vmem:[%s6 + $0x4f0] sm:$0xff]
    %v320 = vld [vmem:[%s6 + $0x4f8] sm:$0xff]
    %v321 = vld [vmem:[%s6 + $0x500] sm:$0xff]
    %v322 = vld [vmem:[%s6 + $0x508] sm:$0xff]
    %v323 = vld [vmem:[%s6 + $0x510] sm:$0xff]
    %v324 = vld [vmem:[%s6 + $0x518] sm:$0xff]
    %v325 = vld [vmem:[%s6 + $0x520] sm:$0xff]
    %v326 = vld [vmem:[%s6 + $0x528] sm:$0xff]
    %v327 = vld [vmem:[%s6 + $0x530] sm:$0xff]
    %v328 = vld [vmem:[%s6 + $0x538] sm:$0xff]
    %v329 = vld [vmem:[%s7] sm:$0x1]
    %v331 = vlaneseq
    %v332 = vshrl.u32 %v331, 7
    %v333 = vsub.s32 0, %v332
    %v334 = vrot.slane %v329, %v333
    %v339 = vcombine.high %v158, %v158
    %v341 = vunpack.c.l.s4 1983009808
    %v342 = vunpack.c.0.s8 %v341
    %v343 = vlaneseq
    %v344 = vshrl.u32 %v343, 7
    %v345 = vsub.s32 %v342, %v344
    %v346 = vrot.slane %v158, %v345
    %v348 = vunpack.c.l.s4 1983009808
    %v349 = vunpack.c.0.s8 %v348
    %v350 = vlaneseq
    %v351 = vshrl.u32 %v350, 7
    %v352 = vsub.s32 %v349, %v351
    %v353 = vrot.slane %v339, %v352
    %v354 = vcombine.high %v346, %v346
    %v355 = vcombine.high %v353, %v353
    %v356 = vcombine.high %v159, %v159
    %v358 = vunpack.c.l.s4 1983009808
    %v359 = vunpack.c.0.s8 %v358
    %v360 = vlaneseq
    %v361 = vshrl.u32 %v360, 7
    %v362 = vsub.s32 %v359, %v361
    %v363 = vrot.slane %v159, %v362
    %v365 = vunpack.c.l.s4 1983009808
    %v366 = vunpack.c.0.s8 %v365
    %v367 = vlaneseq
    %v368 = vshrl.u32 %v367, 7
    %v369 = vsub.s32 %v366, %v368
    %v370 = vrot.slane %v356, %v369
    %v371 = vcombine.high %v363, %v363
    %v372 = vcombine.high %v370, %v370
    %v373 = vcombine.high %v160, %v160
    %v375 = vunpack.c.l.s4 1983009808
    %v376 = vunpack.c.0.s8 %v375
    %v377 = vlaneseq
    %v378 = vshrl.u32 %v377, 7
    %v379 = vsub.s32 %v376, %v378
    %v380 = vrot.slane %v160, %v379
    %v382 = vunpack.c.l.s4 1983009808
    %v383 = vunpack.c.0.s8 %v382
    %v384 = vlaneseq
    %v385 = vshrl.u32 %v384, 7
    %v386 = vsub.s32 %v383, %v385
    %v387 = vrot.slane %v373, %v386
    %v388 = vcombine.high %v380, %v380
    %vm399 = vcmask 523264
    %v400 = vsel %vm399, %v387, 0
    %402 = vmatprep.subr.mxu0 0.0
    %403 = vmatpush1.msra.mxu0 %v161
    %404 = vmatprep.subr.mxu0 0.0
    %405 = vmatpush1.msra.mxu0 %v162
    %406 = vmatprep.subr.mxu0 0.0
    %407 = vmatpush1.msra.mxu0 %v163
    %408 = vmatprep.subr.mxu0 0.0
    %409 = vmatpush1.msra.mxu0 %v164
    %410 = vmatprep.subr.mxu0 0.0
    %411 = vmatpush1.msra.mxu0 %v165
    %412 = vmatprep.subr.mxu0 0.0
    %413 = vmatpush1.msra.mxu0 %v166
    %414 = vmatprep.subr.mxu0 0.0
    %415 = vmatpush1.msra.mxu0 %v167
    %416 = vmatprep.subr.mxu0 0.0
    %417 = vmatpush1.msra.mxu0 %v168
    %418 = vmatprep.subr.mxu0 0.0
    %419 = vmatpush1.msra.mxu0 %v169
    %420 = vmatprep.subr.mxu0 0.0
    %421 = vmatpush1.msra.mxu0 %v170
    %422 = vmatprep.subr.mxu0 0.0
    %423 = vmatpush1.msra.mxu0 %v171
    %424 = vmatprep.subr.mxu0 0.0
    %425 = vmatpush1.msra.mxu0 %v172
    %426 = vmatprep.subr.mxu0 0.0
    %427 = vmatpush1.msra.mxu0 %v173
    %428 = vmatprep.subr.mxu0 0.0
    %429 = vmatpush1.msra.mxu0 %v174
    %430 = vmatprep.subr.mxu0 0.0
    %431 = vmatpush1.msra.mxu0 %v175
    %432 = vmatprep.subr.mxu0 0.0
    %433 = vmatpush1.msra.mxu0 %v176
    %434 = vmatprep.subr.mxu0 0.0
    %435 = vmatpush1.msra.mxu0 %v177
    %436 = vmatprep.subr.mxu0 0.0
    %437 = vmatpush1.msra.mxu0 %v178
    %438 = vmatprep.subr.mxu0 0.0
    %439 = vmatpush1.msra.mxu0 %v179
    %440 = vmatprep.subr.mxu0 0.0
    %441 = vmatpush1.msra.mxu0 %v180
    %442 = vmatprep.subr.mxu0 0.0
    %443 = vmatpush1.msra.mxu0 %v181
    %444 = vmatprep.subr.mxu0 0.0
    %445 = vmatpush1.msra.mxu0 %v182
    %446 = vmatprep.subr.mxu0 0.0
    %447 = vmatpush1.msra.mxu0 %v183
    %448 = vmatprep.subr.mxu0 0.0
    %449 = vmatpush1.msra.mxu0 %v184
    %450 = vmatprep.subr.mxu0 0.0
    %451 = vmatpush1.msra.mxu0 %v185
    %452 = vmatprep.subr.mxu0 0.0
    %453 = vmatpush1.msra.mxu0 %v186
    %454 = vmatprep.subr.mxu0 0.0
    %455 = vmatpush1.msra.mxu0 %v187
    %456 = vmatprep.subr.mxu0 0.0
    %457 = vmatpush1.msra.mxu0 %v188
    %458 = vmatprep.subr.mxu0 0.0
    %459 = vmatpush1.msra.mxu0 %v189
    %460 = vmatprep.subr.mxu0 0.0
    %461 = vmatpush1.msra.mxu0 %v190
    %462 = vmatprep.subr.mxu0 0.0
    %463 = vmatpush1.msra.mxu0 %v191
    %464 = vmatprep.subr.mxu0 0.0
    %465 = vmatpush1.msra.mxu0 %v192
    %466 = vmatprep.mubr.f32.mxu0 %v354
    %467 = vmatmul.mubr.f32.gmra.mrb[0].mxu0 %v346
    %v468 = vpop.f32.mrb[0].mxu0
    %v469 = vadd.f32 %v334, %v468
    %v470 = vpop.f32.mrb[0].mxu0
    %471 = vdwg.mxu0
    %472 = vmatprep.subr.mxu0 0.0
    %473 = vmatpush1.msra.mxu0 %v193
    %474 = vmatprep.subr.mxu0 0.0
    %475 = vmatpush1.msra.mxu0 %v194
    %476 = vmatprep.subr.mxu0 0.0
    %477 = vmatpush1.msra.mxu0 %v195
    %478 = vmatprep.subr.mxu0 0.0
    %479 = vmatpush1.msra.mxu0 %v196
    %480 = vmatprep.subr.mxu0 0.0
    %481 = vmatpush1.msra.mxu0 %v197
    %482 = vmatprep.subr.mxu0 0.0
    %483 = vmatpush1.msra.mxu0 %v198
    %484 = vmatprep.subr.mxu0 0.0
    %485 = vmatpush1.msra.mxu0 %v199
    %486 = vmatprep.subr.mxu0 0.0
    %487 = vmatpush1.msra.mxu0 %v200
    %488 = vmatprep.subr.mxu0 0.0
    %489 = vmatpush1.msra.mxu0 %v201
    %490 = vmatprep.subr.mxu0 0.0
    %491 = vmatpush1.msra.mxu0 %v202
    %492 = vmatprep.subr.mxu0 0.0
    %493 = vmatpush1.msra.mxu0 %v203
    %494 = vmatprep.subr.mxu0 0.0
    %495 = vmatpush1.msra.mxu0 %v204
    %496 = vmatprep.subr.mxu0 0.0
    %497 = vmatpush1.msra.mxu0 %v205
    %498 = vmatprep.subr.mxu0 0.0
    %499 = vmatpush1.msra.mxu0 %v206
    %500 = vmatprep.subr.mxu0 0.0
    %501 = vmatpush1.msra.mxu0 %v207
    %502 = vmatprep.subr.mxu0 0.0
    %503 = vmatpush1.msra.mxu0 %v208
    %504 = vmatprep.subr.mxu0 0.0
    %505 = vmatpush1.msra.mxu0 %v209
    %506 = vmatprep.subr.mxu0 0.0
    %507 = vmatpush1.msra.mxu0 %v210
    %508 = vmatprep.subr.mxu0 0.0
    %509 = vmatpush1.msra.mxu0 %v211
    %510 = vmatprep.subr.mxu0 0.0
    %511 = vmatpush1.msra.mxu0 %v212
    %512 = vmatprep.subr.mxu0 0.0
    %513 = vmatpush1.msra.mxu0 %v213
    %514 = vmatprep.subr.mxu0 0.0
    %515 = vmatpush1.msra.mxu0 %v214
    %516 = vmatprep.subr.mxu0 0.0
    %517 = vmatpush1.msra.mxu0 %v215
    %518 = vmatprep.subr.mxu0 0.0
    %519 = vmatpush1.msra.mxu0 %v216
    %520 = vmatprep.subr.mxu0 0.0
    %521 = vmatpush1.msra.mxu0 %v217
    %522 = vmatprep.subr.mxu0 0.0
    %523 = vmatpush1.msra.mxu0 %v218
    %524 = vmatprep.subr.mxu0 0.0
    %525 = vmatpush1.msra.mxu0 %v219
    %526 = vmatprep.subr.mxu0 0.0
    %527 = vmatpush1.msra.mxu0 %v220
    %528 = vmatprep.subr.mxu0 0.0
    %529 = vmatpush1.msra.mxu0 %v221
    %530 = vmatprep.subr.mxu0 0.0
    %531 = vmatpush1.msra.mxu0 %v222
    %532 = vmatprep.subr.mxu0 0.0
    %533 = vmatpush1.msra.mxu0 %v223
    %534 = vmatprep.subr.mxu0 0.0
    %535 = vmatpush1.msra.mxu0 %v224
    %536 = vmatprep.mubr.f32.mxu0 %v355
    %537 = vmatmul.mubr.f32.gmra.mrb[0].mxu0 %v353
    %v538 = vpop.f32.mrb[0].mxu0
    %v539 = vadd.f32 %v469, %v538
    %v540 = vpop.f32.mrb[0].mxu0
    %541 = vdwg.mxu0
    %542 = vmatprep.subr.mxu0 0.0
    %543 = vmatpush1.msra.mxu0 %v225
    %544 = vmatprep.subr.mxu0 0.0
    %545 = vmatpush1.msra.mxu0 %v226
    %546 = vmatprep.subr.mxu0 0.0
    %547 = vmatpush1.msra.mxu0 %v227
    %548 = vmatprep.subr.mxu0 0.0
    %549 = vmatpush1.msra.mxu0 %v228
    %550 = vmatprep.subr.mxu0 0.0
    %551 = vmatpush1.msra.mxu0 %v229
    %552 = vmatprep.subr.mxu0 0.0
    %553 = vmatpush1.msra.mxu0 %v230
    %554 = vmatprep.subr.mxu0 0.0
    %555 = vmatpush1.msra.mxu0 %v231
    %556 = vmatprep.subr.mxu0 0.0
    %557 = vmatpush1.msra.mxu0 %v232
    %558 = vmatprep.subr.mxu0 0.0
    %559 = vmatpush1.msra.mxu0 %v233
    %560 = vmatprep.subr.mxu0 0.0
    %561 = vmatpush1.msra.mxu0 %v234
    %562 = vmatprep.subr.mxu0 0.0
    %563 = vmatpush1.msra.mxu0 %v235
    %564 = vmatprep.subr.mxu0 0.0
    %565 = vmatpush1.msra.mxu0 %v236
    %566 = vmatprep.subr.mxu0 0.0
    %567 = vmatpush1.msra.mxu0 %v237
    %568 = vmatprep.subr.mxu0 0.0
    %569 = vmatpush1.msra.mxu0 %v238
    %570 = vmatprep.subr.mxu0 0.0
    %571 = vmatpush1.msra.mxu0 %v239
    %572 = vmatprep.subr.mxu0 0.0
    %573 = vmatpush1.msra.mxu0 %v240
    %574 = vmatprep.subr.mxu0 0.0
    %575 = vmatpush1.msra.mxu0 %v241
    %576 = vmatprep.subr.mxu0 0.0
    %577 = vmatpush1.msra.mxu0 %v242
    %578 = vmatprep.subr.mxu0 0.0
    %579 = vmatpush1.msra.mxu0 %v243
    %580 = vmatprep.subr.mxu0 0.0
    %581 = vmatpush1.msra.mxu0 %v244
    %582 = vmatprep.subr.mxu0 0.0
    %583 = vmatpush1.msra.mxu0 %v245
    %584 = vmatprep.subr.mxu0 0.0
    %585 = vmatpush1.msra.mxu0 %v246
    %586 = vmatprep.subr.mxu0 0.0
    %587 = vmatpush1.msra.mxu0 %v247
    %588 = vmatprep.subr.mxu0 0.0
    %589 = vmatpush1.msra.mxu0 %v248
    %590 = vmatprep.subr.mxu0 0.0
    %591 = vmatpush1.msra.mxu0 %v249
    %592 = vmatprep.subr.mxu0 0.0
    %593 = vmatpush1.msra.mxu0 %v250
    %594 = vmatprep.subr.mxu0 0.0
    %595 = vmatpush1.msra.mxu0 %v251
    %596 = vmatprep.subr.mxu0 0.0
    %597 = vmatpush1.msra.mxu0 %v252
    %598 = vmatprep.subr.mxu0 0.0
    %599 = vmatpush1.msra.mxu0 %v253
    %600 = vmatprep.subr.mxu0 0.0
    %601 = vmatpush1.msra.mxu0 %v254
    %602 = vmatprep.subr.mxu0 0.0
    %603 = vmatpush1.msra.mxu0 %v255
    %604 = vmatprep.subr.mxu0 0.0
    %605 = vmatpush1.msra.mxu0 %v256
    %606 = vmatprep.mubr.f32.mxu0 %v371
    %607 = vmatmul.mubr.f32.gmra.mrb[0].mxu0 %v363
    %v608 = vpop.f32.mrb[0].mxu0
    %v609 = vadd.f32 %v539, %v608
    %v610 = vpop.f32.mrb[0].mxu0
    %611 = vdwg.mxu0
    %612 = vmatprep.subr.mxu0 0.0
    %613 = vmatpush1.msra.mxu0 %v257
    %614 = vmatprep.subr.mxu0 0.0
    %615 = vmatpush1.msra.mxu0 %v258
    %616 = vmatprep.subr.mxu0 0.0
    %617 = vmatpush1.msra.mxu0 %v259
    %618 = vmatprep.subr.mxu0 0.0
    %619 = vmatpush1.msra.mxu0 %v260
    %620 = vmatprep.subr.mxu0 0.0
    %621 = vmatpush1.msra.mxu0 %v261
    %622 = vmatprep.subr.mxu0 0.0
    %623 = vmatpush1.msra.mxu0 %v262
    %624 = vmatprep.subr.mxu0 0.0
    %625 = vmatpush1.msra.mxu0 %v263
    %626 = vmatprep.subr.mxu0 0.0
    %627 = vmatpush1.msra.mxu0 %v264
    %628 = vmatprep.subr.mxu0 0.0
    %629 = vmatpush1.msra.mxu0 %v265
    %630 = vmatprep.subr.mxu0 0.0
    %631 = vmatpush1.msra.mxu0 %v266
    %632 = vmatprep.subr.mxu0 0.0
    %633 = vmatpush1.msra.mxu0 %v267
    %634 = vmatprep.subr.mxu0 0.0
    %635 = vmatpush1.msra.mxu0 %v268
    %636 = vmatprep.subr.mxu0 0.0
    %637 = vmatpush1.msra.mxu0 %v269
    %638 = vmatprep.subr.mxu0 0.0
    %639 = vmatpush1.msra.mxu0 %v270
    %640 = vmatprep.subr.mxu0 0.0
    %641 = vmatpush1.msra.mxu0 %v271
    %642 = vmatprep.subr.mxu0 0.0
    %643 = vmatpush1.msra.mxu0 %v272
    %644 = vmatprep.subr.mxu0 0.0
    %645 = vmatpush1.msra.mxu0 %v273
    %646 = vmatprep.subr.mxu0 0.0
    %647 = vmatpush1.msra.mxu0 %v274
    %648 = vmatprep.subr.mxu0 0.0
    %649 = vmatpush1.msra.mxu0 %v275
    %650 = vmatprep.subr.mxu0 0.0
    %651 = vmatpush1.msra.mxu0 %v276
    %652 = vmatprep.subr.mxu0 0.0
    %653 = vmatpush1.msra.mxu0 %v277
    %654 = vmatprep.subr.mxu0 0.0
    %655 = vmatpush1.msra.mxu0 %v278
    %656 = vmatprep.subr.mxu0 0.0
    %657 = vmatpush1.msra.mxu0 %v279
    %658 = vmatprep.subr.mxu0 0.0
    %659 = vmatpush1.msra.mxu0 %v280
    %660 = vmatprep.subr.mxu0 0.0
    %661 = vmatpush1.msra.mxu0 %v281
    %662 = vmatprep.subr.mxu0 0.0
    %663 = vmatpush1.msra.mxu0 %v282
    %664 = vmatprep.subr.mxu0 0.0
    %665 = vmatpush1.msra.mxu0 %v283
    %666 = vmatprep.subr.mxu0 0.0
    %667 = vmatpush1.msra.mxu0 %v284
    %668 = vmatprep.subr.mxu0 0.0
    %669 = vmatpush1.msra.mxu0 %v285
    %670 = vmatprep.subr.mxu0 0.0
    %671 = vmatpush1.msra.mxu0 %v286
    %672 = vmatprep.subr.mxu0 0.0
    %673 = vmatpush1.msra.mxu0 %v287
    %674 = vmatprep.subr.mxu0 0.0
    %675 = vmatpush1.msra.mxu0 %v288
    %676 = vmatprep.mubr.f32.mxu0 %v372
    %677 = vmatmul.mubr.f32.gmra.mrb[0].mxu0 %v370
    %v678 = vpop.f32.mrb[0].mxu0
    %v679 = vadd.f32 %v609, %v678
    %v680 = vpop.f32.mrb[0].mxu0
    %681 = vdwg.mxu0
    %682 = vmatprep.subr.mxu0 0.0
    %683 = vmatpush1.msra.mxu0 %v289
    %684 = vmatprep.subr.mxu0 0.0
    %685 = vmatpush1.msra.mxu0 %v290
    %686 = vmatprep.subr.mxu0 0.0
    %687 = vmatpush1.msra.mxu0 %v291
    %688 = vmatprep.subr.mxu0 0.0
    %689 = vmatpush1.msra.mxu0 %v292
    %690 = vmatprep.subr.mxu0 0.0
    %691 = vmatpush1.msra.mxu0 %v293
    %692 = vmatprep.subr.mxu0 0.0
    %693 = vmatpush1.msra.mxu0 %v294
    %694 = vmatprep.subr.mxu0 0.0
    %695 = vmatpush1.msra.mxu0 %v295
    %696 = vmatprep.subr.mxu0 0.0
    %697 = vmatpush1.msra.mxu0 %v296
    %698 = vmatprep.subr.mxu0 0.0
    %699 = vmatpush1.msra.mxu0 %v297
    %700 = vmatprep.subr.mxu0 0.0
    %701 = vmatpush1.msra.mxu0 %v298
    %702 = vmatprep.subr.mxu0 0.0
    %703 = vmatpush1.msra.mxu0 %v299
    %704 = vmatprep.subr.mxu0 0.0
    %705 = vmatpush1.msra.mxu0 %v300
    %706 = vmatprep.subr.mxu0 0.0
    %707 = vmatpush1.msra.mxu0 %v301
    %708 = vmatprep.subr.mxu0 0.0
    %709 = vmatpush1.msra.mxu0 %v302
    %710 = vmatprep.subr.mxu0 0.0
    %711 = vmatpush1.msra.mxu0 %v303
    %712 = vmatprep.subr.mxu0 0.0
    %713 = vmatpush1.msra.mxu0 %v304
    %714 = vmatprep.subr.mxu0 0.0
    %715 = vmatpush1.msra.mxu0 %v305
    %716 = vmatprep.subr.mxu0 0.0
    %717 = vmatpush1.msra.mxu0 %v306
    %718 = vmatprep.subr.mxu0 0.0
    %719 = vmatpush1.msra.mxu0 %v307
    %720 = vmatprep.subr.mxu0 0.0
    %721 = vmatpush1.msra.mxu0 %v308
    %722 = vmatprep.subr.mxu0 0.0
    %723 = vmatpush1.msra.mxu0 %v309
    %724 = vmatprep.subr.mxu0 0.0
    %725 = vmatpush1.msra.mxu0 %v310
    %726 = vmatprep.subr.mxu0 0.0
    %727 = vmatpush1.msra.mxu0 %v311
    %728 = vmatprep.subr.mxu0 0.0
    %729 = vmatpush1.msra.mxu0 %v312
    %730 = vmatprep.subr.mxu0 0.0
    %731 = vmatpush1.msra.mxu0 %v313
    %732 = vmatprep.subr.mxu0 0.0
    %733 = vmatpush1.msra.mxu0 %v314
    %734 = vmatprep.subr.mxu0 0.0
    %735 = vmatpush1.msra.mxu0 %v315
    %736 = vmatprep.subr.mxu0 0.0
    %737 = vmatpush1.msra.mxu0 %v316
    %738 = vmatprep.subr.mxu0 0.0
    %739 = vmatpush1.msra.mxu0 %v317
    %740 = vmatprep.subr.mxu0 0.0
    %741 = vmatpush1.msra.mxu0 %v318
    %742 = vmatprep.subr.mxu0 0.0
    %743 = vmatpush1.msra.mxu0 %v319
    %744 = vmatprep.subr.mxu0 0.0
    %745 = vmatpush1.msra.mxu0 %v320
    %746 = vmatprep.mubr.f32.mxu0 %v388
    %747 = vmatmul.mubr.f32.gmra.mrb[0].mxu0 %v380
    %v748 = vpop.f32.mrb[0].mxu0
    %v749 = vadd.f32 %v679, %v748
    %v750 = vpop.f32.mrb[0].mxu0
    %751 = vdwg.mxu0
    %752 = vmatprep.subr.mxu0 0.0
    %753 = vmatpush1.msra.mxu0 %v321
    %754 = vmatprep.subr.mxu0 0.0
    %755 = vmatpush1.msra.mxu0 %v322
    %756 = vmatprep.subr.mxu0 0.0
    %757 = vmatpush1.msra.mxu0 %v323
    %758 = vmatprep.subr.mxu0 0.0
    %759 = vmatpush1.msra.mxu0 %v324
    %760 = vmatprep.subr.mxu0 0.0
    %761 = vmatpush1.msra.mxu0 %v325
    %762 = vmatprep.subr.mxu0 0.0
    %763 = vmatpush1.msra.mxu0 %v326
    %764 = vmatprep.subr.mxu0 0.0
    %765 = vmatpush1.msra.mxu0 %v327
    %766 = vmatprep.subr.mxu0 0.0
    %767 = vmatpush1.msra.mxu0 %v328
    %768 = vmatprep.subr.mxu0 0.0
    %769 = vmatpush1.msra.mxu0 0.0
    %770 = vmatprep.subr.mxu0 0.0
    %771 = vmatpush1.msra.mxu0 0.0
    %772 = vmatprep.subr.mxu0 0.0
    %773 = vmatpush1.msra.mxu0 0.0
    %774 = vmatprep.subr.mxu0 0.0
    %775 = vmatpush1.msra.mxu0 0.0
    %776 = vmatprep.subr.mxu0 0.0
    %777 = vmatpush1.msra.mxu0 0.0
    %778 = vmatprep.subr.mxu0 0.0
    %779 = vmatpush1.msra.mxu0 0.0
    %780 = vmatprep.subr.mxu0 0.0
    %781 = vmatpush1.msra.mxu0 0.0
    %782 = vmatprep.subr.mxu0 0.0
    %783 = vmatpush1.msra.mxu0 0.0
    %784 = vmatprep.subr.mxu0 0.0
    %785 = vmatpush1.msra.mxu0 0.0
    %786 = vmatprep.subr.mxu0 0.0
    %787 = vmatpush1.msra.mxu0 0.0
    %788 = vmatprep.subr.mxu0 0.0
    %789 = vmatpush1.msra.mxu0 0.0
    %790 = vmatprep.subr.mxu0 0.0
    %791 = vmatpush1.msra.mxu0 0.0
    %792 = vmatprep.subr.mxu0 0.0
    %793 = vmatpush1.msra.mxu0 0.0
    %794 = vmatprep.subr.mxu0 0.0
    %795 = vmatpush1.msra.mxu0 0.0
    %796 = vmatprep.subr.mxu0 0.0
    %797 = vmatpush1.msra.mxu0 0.0
    %798 = vmatprep.subr.mxu0 0.0
    %799 = vmatpush1.msra.mxu0 0.0
    %800 = vmatprep.subr.mxu0 0.0
    %801 = vmatpush1.msra.mxu0 0.0
    %802 = vmatprep.subr.mxu0 0.0
    %803 = vmatpush1.msra.mxu0 0.0
    %804 = vmatprep.subr.mxu0 0.0
    %805 = vmatpush1.msra.mxu0 0.0
    %806 = vmatprep.subr.mxu0 0.0
    %807 = vmatpush1.msra.mxu0 0.0
    %808 = vmatprep.subr.mxu0 0.0
    %809 = vmatpush1.msra.mxu0 0.0
    %810 = vmatprep.subr.mxu0 0.0
    %811 = vmatpush1.msra.mxu0 0.0
    %812 = vmatprep.subr.mxu0 0.0
    %813 = vmatpush1.msra.mxu0 0.0
    %814 = vmatprep.subr.mxu0 0.0
    %815 = vmatpush1.msra.mxu0 0.0
    %816 = vmatprep.mubr.f32.mxu0 0.0
    %817 = vmatmul.mubr.f32.gmra.mrb[0].mxu0 %v400
    %v818 = vpop.f32.mrb[0].mxu0
    %v819 = vadd.f32 %v749, %v818
    %v820 = vpop.f32.mrb[0].mxu0
    %821 = vdwg.mxu0
    %vm822 = vcmask 50176
    %v823 = vsel %vm822, %v819, -inf
    %824 = vmax.xlane.f32.xlu0 %v823
    %v825 = vpop.xlane.xlu0 %824
    %v826 = vsub.f32 %v819, %v825
    %v827 = vmul.f32 %v826, 1.442695
    %v828 = vpow.pop %v827
    %v829 = vsel %vm822, %v828, 0.0
    %830 = vadd.xlane.f32.xlu0 %v829
    %v831 = vpop.xlane.xlu0 %830
    %v832 = vrcp.pop %v831
    %v833 = vmul.f32 %v828, %v832
    %834 = vst.msk [vmem:[#allocation3] sm:$0x3] %vm822, %v833
    %vm835 = vcmask 1024
    %836 = vst.msk [vmem:[%s9] sm:$0x3] %vm835, %v157
    // Predicated region
    $region34: #{connectnet_forward.5} parent=1 // pred_check
      _
    $region35: #{connectnet_forward.5} parent=1 // pred_check_branch
      %838 = sbr.rel (0) target = $region37
    $region36: #{connectnet_forward.5} parent=1 // pred_region
      %s840 = ssub.s32 32, 32
      %841 = vsyncadd [#allocation4], %s840
      %s843 = sshll.u32 [#allocation3], 4
      %s844 = int_to_ptr.vmem [resolvable:$true] %s843
      %846 = dma.vmem_to_hbm [thread:$0]  %s844, 32, %s8, [#allocation4]
    $region37: #{connectnet_forward.5} parent=1 // pred_fallthru
      _
    // Predicated region
    $region38: #{connectnet_forward.5} parent=1 // pred_check
      _
    $region39: #{connectnet_forward.5} parent=1 // pred_check_branch
      %848 = sbr.rel (0) target = $region41
    $region40: #{connectnet_forward.5} parent=1 // pred_region
      _
    $region41: #{connectnet_forward.5} parent=1 // pred_fallthru
      _
    // Predicated region
    $region42: #{connectnet_forward.5} parent=1 // pred_check
      _
    $region43: #{connectnet_forward.5} parent=1 // pred_check_branch
      %850 = sbr.rel (0) target = $region45
    $region44: #{connectnet_forward.5} parent=1 // pred_region
      %851 = dma.done [#allocation4], 32
    $region45: #{connectnet_forward.5} parent=1 // pred_fallthru
      _
    // Predicated region
    $region46: #{connectnet_forward.5} parent=1 // pred_check
      _
    $region47: #{connectnet_forward.5} parent=1 // pred_check_branch
      %853 = sbr.rel (0) target = $region49
    $region48: #{connectnet_forward.5} parent=1 // pred_region
      _
    $region49: #{connectnet_forward.5} parent=1 // pred_fallthru
      _
    %854 = vsyncpa [#allocation4], 1

// kernel: connectnet_forward.3
$region0: #{connectnet_forward.3}
  #allocation0 [shape = 'u32[]', space=smem, size = 0x4, offset = 0x4, fixed_abs, tag = 'smem constant byte address 0x4 - core index']
  #allocation1 [shape = 'u32[144,128]{1,0:T(1,128)}', space=vmem, size = 0x12000, scoped, tag = 'internal scratch']
  %s0 = inlined_call_operand.vmem [shape: f32[144,32], index: 0, kind: input, shape index: {}]
  %s1 = inlined_call_operand.hbm [shape: f32[32,128], index: 1, kind: input, shape index: {}]
  %s2 = inlined_call_operand.hbm [shape: f32[1,128], index: 2, kind: input, shape index: {}]
  %s3 = inlined_call_operand.hbm [shape: f32[1,128], index: 3, kind: input, shape index: {}]
  %s4 = inlined_call_operand.hbm [shape: bf16[19,2,3,128,384], index: 4, kind: input, shape index: {}]
  %s5 = inlined_call_operand.hbm [shape: f32[19,2,1,128], index: 5, kind: input, shape index: {}]
  %s6 = inlined_call_operand.hbm [shape: f32[19,2,1,128], index: 6, kind: input, shape index: {}]
  %s7 = inlined_call_operand.hbm [shape: f32[144,1], index: 7, kind: input, shape index: {}]
  %s8 = inlined_call_operand.vmem [shape: f32[144,128], index: 8, kind: output, shape index: {}]
  %s9 = sld [smem:[#allocation0]]
  $region97: #{connectnet_forward.3} parent=0
    _
  %s11 = ssub.s32 1, %s9
  %s12 = scalar_select 0, %s11, %s9
  $region1: #{connectnet_forward.3} parent=0
    #allocation2 [shape = 'u8[16384]{0}', space=vmem, size = 0x4000, scoped, tag = 'input window, operand 1, single buffered']
    #allocation3 [shape = 's32[2]{0}', space=sflag, size = 0x8, scoped, tag = 'scoped memory for connectnet_forward.3']
    #allocation4 [shape = 'u8[512]{0}', space=vmem, size = 0x400, scoped, tag = 'input window, operand 2, single buffered']
    #allocation5 [shape = 's32[1]{0}', space=sflag, size = 0x4, scoped, tag = 'scoped memory for connectnet_forward.3']
    #allocation6 [shape = 'u8[512]{0}', space=vmem, size = 0x400, scoped, tag = 'input window, operand 3, single buffered']
    #allocation7 [shape = 'u8[1179648]{0}', space=vmem, size = 0x120000, scoped, tag = 'input window, operand 4']
    #allocation8 [shape = 's32[2]{0}', space=sflag, size = 0x8, scoped, tag = 'scoped memory for connectnet_forward.3']
    #allocation9 [shape = 'u8[2048]{0}', space=vmem, size = 0x800, scoped, tag = 'input window, operand 5']
    #allocation10 [shape = 'u8[2048]{0}', space=vmem, size = 0x800, scoped, tag = 'input window, operand 6']
    #allocation11 [shape = 's32[2]{0}', space=sflag, size = 0x8, scoped, tag = 'scoped memory for connectnet_forward.3']
    #allocation12 [shape = 'u8[73728]{0}', space=vmem, size = 0x12000, scoped, tag = 'input window, operand 7, single buffered']
    %13 = vsyncpa [#allocation3], 0
    %14 = vsyncpa [#allocation5], 0
    %15 = vsyncpa [#allocation8], 0
    %s16 = scalar_lea.sflag [#allocation8], 1
    %17 = vsyncpa %s16, 0
    %18 = vsyncpa [#allocation11], 0
    %s19 = scalar_lea.sflag [#allocation11], 1
    %20 = vsyncpa %s19, 0
    loop: start=0, step=1, limit=21
    $region2: #{connectnet_forward.3} parent=1 // loop_pre_header
      _
    $region3: #{connectnet_forward.3} parent=1 // loop_header
      %s22 = sphi 0, %s26
      %p23 = scmp.ge.s32.totalorder %s22, 21
      %s30 = sphi 0, %s30
      %s32 = sphi 0, %s30
      %s33 = sphi 0, %s32
      %s47 = sphi 0, %s33
      %s51 = sphi 0, %s51
      %s53 = sphi 0, %s51
      %s54 = sphi 0, %s53
      %s68 = sphi 0, %s54
      %s72 = sphi 0, %s72
      %s74 = sphi 0, %s72
      %s75 = sphi 0, %s74
      %s89 = sphi 0, %s75
      %s93 = sphi 0, %s93
      %s95 = sphi 0, %s93
      %s96 = sphi 0, %s95
      %s110 = sphi 0, %s96
      %s116 = sphi 0, %s118
      %s119 = sphi 0, %s116
      %s120 = sphi 0, %s119
      %s136 = sphi 0, %s120
      %s142 = sphi 0, %s144
      %s145 = sphi 0, %s142
      %s146 = sphi 0, %s145
      %s162 = sphi 0, %s146
      %s168 = sphi 0, %s170
      %s171 = sphi 0, %s168
      %s172 = sphi 0, %s171
      %s188 = sphi 0, %s172
      %s192 = sphi 0, %s192
      %s194 = sphi 0, %s192
      %s195 = sphi 0, %s194
      %s209 = sphi 0, %s195
      %s213 = sphi 0, %s213
      %s215 = sphi 0, %s213
      %s216 = sphi 0, %s215
      %s230 = sphi 0, %s216
    $region4: #{connectnet_forward.3} parent=1 // loop_header_branch
      %25 = sbr.rel (%p23) target = $region8
    $region5: #{connectnet_forward.3} parent=1 // loop_body
      %s27 = ssub.s32 %s22, 1
      %s28 = ssub.s32 %s22, 2
      %s29 = sadd.s32 %s22, 1
      %s31 = sadd.s32 %s30, 1
      %p34 = scmp.eq.s32.totalorder %s22, 18
      %p35 = scmp.ne.s32.totalorder %s30, %s32
      %p36 = scmp.eq.s32.totalorder %s22, 0
      %p37 = por %p35, %p36
      %p38 = scmp.ne.s32.totalorder %s30, %s32
      %p39 = scmp.eq.s32.totalorder %s27, 18
      %p40 = por %p38, %p39
      %p41 = scmp.ne.s32.totalorder %s32, %s33
      %p42 = scmp.eq.s32.totalorder %s27, 0
      %p43 = por %p41, %p42
      %p44 = scmp.ne.s32.totalorder %s32, %s33
      %p45 = scmp.eq.s32.totalorder %s28, 18
      %p46 = por %p44, %p45
      %p48 = scmp.ne.s32.totalorder %s33, %s47
      %p49 = scmp.eq.s32.totalorder %s28, 0
      %p50 = por %p48, %p49
      %s52 = sadd.s32 %s51, 1
      %p55 = scmp.eq.s32.totalorder %s22, 18
      %p56 = scmp.ne.s32.totalorder %s51, %s53
      %p57 = scmp.eq.s32.totalorder %s22, 0
      %p58 = por %p56, %p57
      %p59 = scmp.ne.s32.totalorder %s51, %s53
      %p60 = scmp.eq.s32.totalorder %s27, 18
      %p61 = por %p59, %p60
      %p62 = scmp.ne.s32.totalorder %s53, %s54
      %p63 = scmp.eq.s32.totalorder %s27, 0
      %p64 = por %p62, %p63
      %p65 = scmp.ne.s32.totalorder %s53, %s54
      %p66 = scmp.eq.s32.totalorder %s28, 18
      %p67 = por %p65, %p66
      %p69 = scmp.ne.s32.totalorder %s54, %s68
      %p70 = scmp.eq.s32.totalorder %s28, 0
      %p71 = por %p69, %p70
      %s73 = sadd.s32 %s72, 1
      %p76 = scmp.eq.s32.totalorder %s22, 18
      %p77 = scmp.ne.s32.totalorder %s72, %s74
      %p78 = scmp.eq.s32.totalorder %s22, 0
      %p79 = por %p77, %p78
      %p80 = scmp.ne.s32.totalorder %s72, %s74
      %p81 = scmp.eq.s32.totalorder %s27, 18
      %p82 = por %p80, %p81
      %p83 = scmp.ne.s32.totalorder %s74, %s75
      %p84 = scmp.eq.s32.totalorder %s27, 0
      %p85 = por %p83, %p84
      %p86 = scmp.ne.s32.totalorder %s74, %s75
      %p87 = scmp.eq.s32.totalorder %s28, 18
      %p88 = por %p86, %p87
      %p90 = scmp.ne.s32.totalorder %s75, %s89
      %p91 = scmp.eq.s32.totalorder %s28, 0
      %p92 = por %p90, %p91
      %s94 = sadd.s32 %s93, 1
      %p97 = scmp.eq.s32.totalorder %s22, 18
      %p98 = scmp.ne.s32.totalorder %s93, %s95
      %p99 = scmp.eq.s32.totalorder %s22, 0
      %p100 = por %p98, %p99
      %p101 = scmp.ne.s32.totalorder %s93, %s95
      %p102 = scmp.eq.s32.totalorder %s27, 18
      %p103 = por %p101, %p102
      %p104 = scmp.ne.s32.totalorder %s95, %s96
      %p105 = scmp.eq.s32.totalorder %s27, 0
      %p106 = por %p104, %p105
      %p107 = scmp.ne.s32.totalorder %s95, %s96
      %p108 = scmp.eq.s32.totalorder %s28, 18
      %p109 = por %p107, %p108
      %p111 = scmp.ne.s32.totalorder %s96, %s110
      %p112 = scmp.eq.s32.totalorder %s28, 0
      %p113 = por %p111, %p112
      %s114 = ssub.s32 %s22, %s29
      %p115 = scmp.eq.s32.totalorder %s114, 0
      %s117 = sadd.s32 %s116, 1
      %s118 = scalar_select %p115, %s116, %s117
      %p121 = pneg %p115
      %p122 = scmp.eq.s32.totalorder %s22, 18
      %p123 = por %p121, %p122
      %p124 = scmp.ne.s32.totalorder %s116, %s119
      %p125 = scmp.eq.s32.totalorder %s22, 0
      %p126 = por %p124, %p125
      %p127 = scmp.ne.s32.totalorder %s116, %s119
      %p128 = scmp.eq.s32.totalorder %s27, 18
      %p129 = por %p127, %p128
      %p130 = scmp.ne.s32.totalorder %s119, %s120
      %p131 = scmp.eq.s32.totalorder %s27, 0
      %p132 = por %p130, %p131
      %p133 = scmp.ne.s32.totalorder %s119, %s120
      %p134 = scmp.eq.s32.totalorder %s28, 18
      %p135 = por %p133, %p134
      %p137 = scmp.ne.s32.totalorder %s120, %s136
      %p138 = scmp.eq.s32.totalorder %s28, 0
      %p139 = por %p137, %p138
      %s140 = ssub.s32 %s22, %s29
      %p141 = scmp.eq.s32.totalorder %s140, 0
      %s143 = sadd.s32 %s142, 1
      %s144 = scalar_select %p141, %s142, %s143
      %p147 = pneg %p141
      %p148 = scmp.eq.s32.totalorder %s22, 18
      %p149 = por %p147, %p148
      %p150 = scmp.ne.s32.totalorder %s142, %s145
      %p151 = scmp.eq.s32.totalorder %s22, 0
      %p152 = por %p150, %p151
      %p153 = scmp.ne.s32.totalorder %s142, %s145
      %p154 = scmp.eq.s32.totalorder %s27, 18
      %p155 = por %p153, %p154
      %p156 = scmp.ne.s32.totalorder %s145, %s146
      %p157 = scmp.eq.s32.totalorder %s27, 0
      %p158 = por %p156, %p157
      %p159 = scmp.ne.s32.totalorder %s145, %s146
      %p160 = scmp.eq.s32.totalorder %s28, 18
      %p161 = por %p159, %p160
      %p163 = scmp.ne.s32.totalorder %s146, %s162
      %p164 = scmp.eq.s32.totalorder %s28, 0
      %p165 = por %p163, %p164
      %s166 = ssub.s32 %s22, %s29
      %p167 = scmp.eq.s32.totalorder %s166, 0
      %s169 = sadd.s32 %s168, 1
      %s170 = scalar_select %p167, %s168, %s169
      %p173 = pneg %p167
      %p174 = scmp.eq.s32.totalorder %s22, 18
      %p175 = por %p173, %p174
      %p176 = scmp.ne.s32.totalorder %s168, %s171
      %p177 = scmp.eq.s32.totalorder %s22, 0
      %p178 = por %p176, %p177
      %p179 = scmp.ne.s32.totalorder %s168, %s171
      %p180 = scmp.eq.s32.totalorder %s27, 18
      %p181 = por %p179, %p180
      %p182 = scmp.ne.s32.totalorder %s171, %s172
      %p183 = scmp.eq.s32.totalorder %s27, 0
      %p184 = por %p182, %p183
      %p185 = scmp.ne.s32.totalorder %s171, %s172
      %p186 = scmp.eq.s32.totalorder %s28, 18
      %p187 = por %p185, %p186
      %p189 = scmp.ne.s32.totalorder %s172, %s188
      %p190 = scmp.eq.s32.totalorder %s28, 0
      %p191 = por %p189, %p190
      %s193 = sadd.s32 %s192, 1
      %p196 = scmp.eq.s32.totalorder %s22, 18
      %p197 = scmp.ne.s32.totalorder %s192, %s194
      %p198 = scmp.eq.s32.totalorder %s22, 0
      %p199 = por %p197, %p198
      %p200 = scmp.ne.s32.totalorder %s192, %s194
      %p201 = scmp.eq.s32.totalorder %s27, 18
      %p202 = por %p200, %p201
      %p203 = scmp.ne.s32.totalorder %s194, %s195
      %p204 = scmp.eq.s32.totalorder %s27, 0
      %p205 = por %p203, %p204
      %p206 = scmp.ne.s32.totalorder %s194, %s195
      %p207 = scmp.eq.s32.totalorder %s28, 18
      %p208 = por %p206, %p207
      %p210 = scmp.ne.s32.totalorder %s195, %s209
      %p211 = scmp.eq.s32.totalorder %s28, 0
      %p212 = por %p210, %p211
      %s214 = sadd.s32 %s213, 1
      %p217 = scmp.eq.s32.totalorder %s22, 18
      %p218 = scmp.ne.s32.totalorder %s213, %s215
      %p219 = scmp.eq.s32.totalorder %s22, 0
      %p220 = por %p218, %p219
      %p221 = scmp.ne.s32.totalorder %s213, %s215
      %p222 = scmp.eq.s32.totalorder %s27, 18
      %p223 = por %p221, %p222
      %p224 = scmp.ne.s32.totalorder %s215, %s216
      %p225 = scmp.eq.s32.totalorder %s27, 0
      %p226 = por %p224, %p225
      %p227 = scmp.ne.s32.totalorder %s215, %s216
      %p228 = scmp.eq.s32.totalorder %s28, 18
      %p229 = por %p227, %p228
      %p231 = scmp.ne.s32.totalorder %s216, %s230
      %p232 = scmp.eq.s32.totalorder %s28, 0
      %p233 = por %p231, %p232
      %p234 = scmp.le.s32.totalorder 1, %s22
      %p235 = scmp.lt.s32.totalorder %s22, 20
      %p236 = pnand %p234, %p235
      %p237 = pneg %p236
      // Predicated region
      $region9: #{connectnet_forward.3} parent=5 // pred_check
        _
      $region10: #{connectnet_forward.3} parent=5 // pred_check_branch
        %239 = sbr.rel (%p236) target = $region12
      $region11: #{connectnet_forward.3} parent=5 // pred_region
        %s240 = ssub.s32 %s22, 1
        // Predicated region
        $region13: #{connectnet_forward.3} parent=11 // pred_check
          %p241 = pneg %p43
        $region14: #{connectnet_forward.3} parent=11 // pred_check_branch
          %243 = sbr.rel (%p241) target = $region16
        $region15: #{connectnet_forward.3} parent=11 // pred_region
          _
        $region16: #{connectnet_forward.3} parent=11 // pred_fallthru
          _
        // Predicated region
        $region17: #{connectnet_forward.3} parent=11 // pred_check
          %p244 = pneg %p64
        $region18: #{connectnet_forward.3} parent=11 // pred_check_branch
          %246 = sbr.rel (%p244) target = $region20
        $region19: #{connectnet_forward.3} parent=11 // pred_region
          %s248 = ssub.s32 512, 512
          %249 = vsyncadd [#allocation3], %s248
          %s250 = sshll.u32 [#allocation2], 4
          %s251 = int_to_ptr.vmem [resolvable:$true] %s250
          %256 = dma.hbm_to_vmem [thread:$0]  %s1, 512, %s251, [#allocation3], 128, 128, 8
        $region20: #{connectnet_forward.3} parent=11 // pred_fallthru
          _
        // Predicated region
        $region21: #{connectnet_forward.3} parent=11 // pred_check
          %p257 = pneg %p85
        $region22: #{connectnet_forward.3} parent=11 // pred_check_branch
          %259 = sbr.rel (%p257) target = $region24
        $region23: #{connectnet_forward.3} parent=11 // pred_region
          %s261 = ssub.s32 16, 16
          %262 = vsyncadd [#allocation5], %s261
          %s264 = sshll.u32 [#allocation4], 4
          %s265 = int_to_ptr.vmem [resolvable:$true] %s264
          %267 = dma.hbm_to_vmem [thread:$0]  %s2, 16, %s265, [#allocation5]
        $region24: #{connectnet_forward.3} parent=11 // pred_fallthru
          _
        // Predicated region
        $region25: #{connectnet_forward.3} parent=11 // pred_check
          %p268 = pneg %p106
        $region26: #{connectnet_forward.3} parent=11 // pred_check_branch
          %270 = sbr.rel (%p268) target = $region28
        $region27: #{connectnet_forward.3} parent=11 // pred_region
          %s272 = ssub.s32 16, 16
          %273 = vsyncadd [#allocation5], %s272
          %s275 = sshll.u32 [#allocation6], 4
          %s276 = int_to_ptr.vmem [resolvable:$true] %s275
          %278 = dma.hbm_to_vmem [thread:$0]  %s3, 16, %s276, [#allocation5]
        $region28: #{connectnet_forward.3} parent=11 // pred_fallthru
          _
        // Predicated region
        $region29: #{connectnet_forward.3} parent=11 // pred_check
          %p279 = pneg %p205
        $region30: #{connectnet_forward.3} parent=11 // pred_check_branch
          %281 = sbr.rel (%p279) target = $region32
        $region31: #{connectnet_forward.3} parent=11 // pred_region
          %s283 = ssub.s32 2304, 2304
          %284 = vsyncadd [#allocation11], %s283
          %s285 = sshll.u32 [#allocation12], 4
          %s286 = int_to_ptr.vmem [resolvable:$true] %s285
          %291 = dma.hbm_to_vmem [thread:$0]  %s7, 2304, %s286, [#allocation11], 128, 128, 8
        $region32: #{connectnet_forward.3} parent=11 // pred_fallthru
          _
      $region12: #{connectnet_forward.3} parent=5 // pred_fallthru
        _
      %p292 = scmp.lt.s32.totalorder %s22, 19
      // Predicated region
      $region33: #{connectnet_forward.3} parent=5 // pred_check
        %p293 = pneg %p292
      $region34: #{connectnet_forward.3} parent=5 // pred_check_branch
        %295 = sbr.rel (%p293) target = $region36
      $region35: #{connectnet_forward.3} parent=5 // pred_region
        // Predicated region
        $region37: #{connectnet_forward.3} parent=35 // pred_check
          %p296 = pneg %p126
        $region38: #{connectnet_forward.3} parent=35 // pred_check_branch
          %298 = sbr.rel (%p296) target = $region40
        $region39: #{connectnet_forward.3} parent=35 // pred_region
          %s299 = sand.u32 %s22, 1
          %s300 = scalar_lea.sflag [#allocation8], %s299
          %s301 = sand.u32 %s116, 1
          %s302 = smul.addr %s301, 1152
          %s303 = scalar_lea.vmem [#allocation7], %s302
          %s305 = ssub.s32 18432, 18432
          %306 = vsyncadd %s300, %s305
          %s307 = smul.addr %s22, 288
          %s308 = smul.addr %s307, 64
          %s309 = scalar_lea.hbm %s4, %s308
          %s310 = sshll.u32 %s303, 4
          %s311 = int_to_ptr.vmem [resolvable:$true] %s310
          %316 = dma.hbm_to_vmem [thread:$0]  %s309, 18432, %s311, %s300, 192, 192, 12
        $region40: #{connectnet_forward.3} parent=35 // pred_fallthru
          _
        // Predicated region
        $region41: #{connectnet_forward.3} parent=35 // pred_check
          %p317 = pneg %p152
        $region42: #{connectnet_forward.3} parent=35 // pred_check_branch
          %319 = sbr.rel (%p317) target = $region44
        $region43: #{connectnet_forward.3} parent=35 // pred_region
          %s320 = sand.u32 %s22, 1
          %s321 = scalar_lea.sflag [#allocation8], %s320
          %s322 = sand.u32 %s142, 1
          %s323 = smul.addr %s322, 2
          %s324 = scalar_lea.vmem [#allocation9], %s323
          %s326 = ssub.s32 32, 32
          %327 = vsyncadd %s321, %s326
          %s328 = smul.addr %s22, 2
          %s329 = smul.addr %s328, 16
          %s330 = scalar_lea.hbm %s5, %s329
          %s331 = sshll.u32 %s324, 4
          %s332 = int_to_ptr.vmem [resolvable:$true] %s331
          %337 = dma.hbm_to_vmem [thread:$0]  %s330, 32, %s332, %s321, 16, 16, 1
        $region44: #{connectnet_forward.3} parent=35 // pred_fallthru
          _
        // Predicated region
        $region45: #{connectnet_forward.3} parent=35 // pred_check
          %p338 = pneg %p178
        $region46: #{connectnet_forward.3} parent=35 // pred_check_branch
          %340 = sbr.rel (%p338) target = $region48
        $region47: #{connectnet_forward.3} parent=35 // pred_region
          %s341 = sand.u32 %s22, 1
          %s342 = scalar_lea.sflag [#allocation11], %s341
          %s343 = sand.u32 %s168, 1
          %s344 = smul.addr %s343, 2
          %s345 = scalar_lea.vmem [#allocation10], %s344
          %s347 = ssub.s32 32, 32
          %348 = vsyncadd %s342, %s347
          %s349 = smul.addr %s22, 2
          %s350 = smul.addr %s349, 16
          %s351 = scalar_lea.hbm %s6, %s350
          %s352 = sshll.u32 %s345, 4
          %s353 = int_to_ptr.vmem [resolvable:$true] %s352
          %358 = dma.hbm_to_vmem [thread:$0]  %s351, 32, %s353, %s342, 16, 16, 1
        $region48: #{connectnet_forward.3} parent=35 // pred_fallthru
          _
      $region36: #{connectnet_forward.3} parent=5 // pred_fallthru
        _
      %p359 = scmp.le.s32.totalorder 1, %s22
      %p360 = scmp.lt.s32.totalorder %s22, 20
      %p361 = pnand %p359, %p360
      %p362 = pneg %p361
      // Predicated region
      $region49: #{connectnet_forward.3} parent=5 // pred_check
        _
      $region50: #{connectnet_forward.3} parent=5 // pred_check_branch
        %364 = sbr.rel (%p361) target = $region52
      $region51: #{connectnet_forward.3} parent=5 // pred_region
        %s365 = ssub.s32 %s22, 1
        // Predicated region
        $region53: #{connectnet_forward.3} parent=51 // pred_check
          %p366 = pneg %p64
        $region54: #{connectnet_forward.3} parent=51 // pred_check_branch
          %368 = sbr.rel (%p366) target = $region56
        $region55: #{connectnet_forward.3} parent=51 // pred_region
          %369 = dma.done [#allocation3], 512
        $region56: #{connectnet_forward.3} parent=51 // pred_fallthru
          _
        // Predicated region
        $region57: #{connectnet_forward.3} parent=51 // pred_check
          %p370 = pneg %p85
        $region58: #{connectnet_forward.3} parent=51 // pred_check_branch
          %372 = sbr.rel (%p370) target = $region60
        $region59: #{connectnet_forward.3} parent=51 // pred_region
          %373 = dma.done [#allocation5], 16
        $region60: #{connectnet_forward.3} parent=51 // pred_fallthru
          _
        // Predicated region
        $region61: #{connectnet_forward.3} parent=51 // pred_check
          %p374 = pneg %p106
        $region62: #{connectnet_forward.3} parent=51 // pred_check_branch
          %376 = sbr.rel (%p374) target = $region64
        $region63: #{connectnet_forward.3} parent=51 // pred_region
          %377 = dma.done [#allocation5], 16
        $region64: #{connectnet_forward.3} parent=51 // pred_fallthru
          _
        %s378 = sand.u32 %s27, 1
        %s379 = scalar_lea.sflag [#allocation8], %s378
        %s380 = sand.u32 %s119, 1
        %s381 = smul.addr %s380, 1152
        %s382 = scalar_lea.vmem [#allocation7], %s381
        // Predicated region
        $region65: #{connectnet_forward.3} parent=51 // pred_check
          %p383 = pneg %p132
        $region66: #{connectnet_forward.3} parent=51 // pred_check_branch
          %385 = sbr.rel (%p383) target = $region68
        $region67: #{connectnet_forward.3} parent=51 // pred_region
          %386 = dma.done %s379, 18432
        $region68: #{connectnet_forward.3} parent=51 // pred_fallthru
          _
        %s387 = sand.u32 %s27, 1
        %s388 = scalar_lea.sflag [#allocation8], %s387
        %s389 = sand.u32 %s145, 1
        %s390 = smul.addr %s389, 2
        %s391 = scalar_lea.vmem [#allocation9], %s390
        // Predicated region
        $region69: #{connectnet_forward.3} parent=51 // pred_check
          %p392 = pneg %p158
        $region70: #{connectnet_forward.3} parent=51 // pred_check_branch
          %394 = sbr.rel (%p392) target = $region72
        $region71: #{connectnet_forward.3} parent=51 // pred_region
          %395 = dma.done %s388, 32
        $region72: #{connectnet_forward.3} parent=51 // pred_fallthru
          _
        %s396 = sand.u32 %s27, 1
        %s397 = scalar_lea.sflag [#allocation11], %s396
        %s398 = sand.u32 %s171, 1
        %s399 = smul.addr %s398, 2
        %s400 = scalar_lea.vmem [#allocation10], %s399
        // Predicated region
        $region73: #{connectnet_forward.3} parent=51 // pred_check
          %p401 = pneg %p184
        $region74: #{connectnet_forward.3} parent=51 // pred_check_branch
          %403 = sbr.rel (%p401) target = $region76
        $region75: #{connectnet_forward.3} parent=51 // pred_region
          %404 = dma.done %s397, 32
        $region76: #{connectnet_forward.3} parent=51 // pred_fallthru
          _
        // Predicated region
        $region77: #{connectnet_forward.3} parent=51 // pred_check
          %p405 = pneg %p205
        $region78: #{connectnet_forward.3} parent=51 // pred_check_branch
          %407 = sbr.rel (%p405) target = $region80
        $region79: #{connectnet_forward.3} parent=51 // pred_region
          %408 = dma.done [#allocation11], 2304
        $region80: #{connectnet_forward.3} parent=51 // pred_fallthru
          _
        %p409 = pneg %p43
        %p410 = pneg %p40
        %p411 = pneg %p64
        %p412 = pneg %p61
        %p413 = pneg %p85
        %p414 = pneg %p82
        %p415 = pneg %p106
        %p416 = pneg %p103
        %s417 = sand.u32 %s27, 1
        %s418 = scalar_lea.sflag [#allocation8], %s417
        %s419 = sand.u32 %s119, 1
        %s420 = smul.addr %s419, 1152
        %s421 = scalar_lea.vmem [#allocation7], %s420
        %p422 = pneg %p132
        %p423 = pneg %p129
        %s424 = sand.u32 %s27, 1
        %s425 = scalar_lea.sflag [#allocation8], %s424
        %s426 = sand.u32 %s145, 1
        %s427 = smul.addr %s426, 2
        %s428 = scalar_lea.vmem [#allocation9], %s427
        %p429 = pneg %p158
        %p430 = pneg %p155
        %s431 = sand.u32 %s27, 1
        %s432 = scalar_lea.sflag [#allocation11], %s431
        %s433 = sand.u32 %s171, 1
        %s434 = smul.addr %s433, 2
        %s435 = scalar_lea.vmem [#allocation10], %s434
        %p436 = pneg %p184
        %p437 = pneg %p181
        %p438 = pneg %p205
        %p439 = pneg %p202
        %p440 = pneg %p226
        %p441 = pneg %p223
        %v443 = vld [vmem:[#allocation12] sm:$0xff]
        %v444 = vld [vmem:[#allocation12 + $0x8] sm:$0xff]
        %v445 = vld [vmem:[#allocation12 + $0x10] sm:$0xff]
        %v446 = vld [vmem:[#allocation12 + $0x18] sm:$0xff]
        %v447 = vld [vmem:[#allocation12 + $0x20] sm:$0xff]
        %v448 = vld [vmem:[#allocation12 + $0x28] sm:$0xff]
        %v449 = vld [vmem:[#allocation12 + $0x30] sm:$0xff]
        %v450 = vld [vmem:[#allocation12 + $0x38] sm:$0xff]
        %v451 = vld [vmem:[#allocation12 + $0x40] sm:$0xff]
        %v452 = vld [vmem:[#allocation12 + $0x48] sm:$0xff]
        %v453 = vld [vmem:[#allocation12 + $0x50] sm:$0xff]
        %v454 = vld [vmem:[#allocation12 + $0x58] sm:$0xff]
        %v455 = vld [vmem:[#allocation12 + $0x60] sm:$0xff]
        %v456 = vld [vmem:[#allocation12 + $0x68] sm:$0xff]
        %v457 = vld [vmem:[#allocation12 + $0x70] sm:$0xff]
        %v458 = vld [vmem:[#allocation12 + $0x78] sm:$0xff]
        %v459 = vld [vmem:[#allocation12 + $0x80] sm:$0xff]
        %v460 = vld [vmem:[#allocation12 + $0x88] sm:$0xff]
        %p461 = scmp.eq.s32.totalorder %s27, 0
        // Predicated region
        $region81: #{connectnet_forward.3} parent=51 // pred_check
          %p462 = pneg %p461
        $region82: #{connectnet_forward.3} parent=51 // pred_check_branch
          %464 = sbr.rel (%p462) target = $region84
        $region83: #{connectnet_forward.3} parent=51 // pred_region
          %v465 = vld [vmem:[%s0] sm:$0xff]
          %v466 = vld [vmem:[%s0 + $0x8] sm:$0xff]
          %v467 = vld [vmem:[%s0 + $0x10] sm:$0xff]
          %v468 = vld [vmem:[%s0 + $0x18] sm:$0xff]
          %v469 = vld [vmem:[%s0 + $0x20] sm:$0xff]
          %v470 = vld [vmem:[%s0 + $0x28] sm:$0xff]
          %v471 = vld [vmem:[%s0 + $0x30] sm:$0xff]
          %v472 = vld [vmem:[%s0 + $0x38] sm:$0xff]
          %v473 = vld [vmem:[%s0 + $0x40] sm:$0xff]
          %v474 = vld [vmem:[%s0 + $0x48] sm:$0xff]
          %v475 = vld [vmem:[%s0 + $0x50] sm:$0xff]
          %v476 = vld [vmem:[%s0 + $0x58] sm:$0xff]
          %v477 = vld [vmem:[%s0 + $0x60] sm:$0xff]
          %v478 = vld [vmem:[%s0 + $0x68] sm:$0xff]
          %v479 = vld [vmem:[%s0 + $0x70] sm:$0xff]
          %v480 = vld [vmem:[%s0 + $0x78] sm:$0xff]
          %v481 = vld [vmem:[%s0 + $0x80] sm:$0xff]
          %v482 = vld [vmem:[%s0 + $0x88] sm:$0xff]
          %v483 = vld [vmem:[#allocation2] sm:$0xff]
          %v484 = vld [vmem:[#allocation2 + $0x8] sm:$0xff]
          %v485 = vld [vmem:[#allocation2 + $0x10] sm:$0xff]
          %v486 = vld [vmem:[#allocation2 + $0x18] sm:$0xff]
          %vm487 = vcmask 261120
          %v489 = vsel %vm487, %v465, 0
          %v492 = vsel %vm487, %v466, 0
          %v495 = vsel %vm487, %v467, 0
          %v498 = vsel %vm487, %v468, 0
          %v501 = vsel %vm487, %v469, 0
          %v504 = vsel %vm487, %v470, 0
          %v507 = vsel %vm487, %v471, 0
          %v510 = vsel %vm487, %v472, 0
          %v513 = vsel %vm487, %v473, 0
          %v516 = vsel %vm487, %v474, 0
          %v519 = vsel %vm487, %v475, 0
          %v522 = vsel %vm487, %v476, 0
          %v525 = vsel %vm487, %v477, 0
          %v528 = vsel %vm487, %v478, 0
          %v531 = vsel %vm487, %v479, 0
          %v534 = vsel %vm487, %v480, 0
          %v537 = vsel %vm487, %v481, 0
          %v540 = vsel %vm487, %v482, 0
          %542 = vmatprep.subr.mxu0 0.0
          %543 = vmatpush1.msra.mxu0 %v483
          %544 = vmatprep.subr.mxu0 0.0
          %545 = vmatpush1.msra.mxu0 %v484
          %546 = vmatprep.subr.mxu0 0.0
          %547 = vmatpush1.msra.mxu0 %v485
          %548 = vmatprep.subr.mxu0 0.0
          %549 = vmatpush1.msra.mxu0 %v486
          %550 = vmatprep.subr.mxu0 0.0
          %551 = vmatpush1.msra.mxu0 0.0
          %552 = vmatprep.subr.mxu0 0.0
          %553 = vmatpush1.msra.mxu0 0.0
          %554 = vmatprep.subr.mxu0 0.0
          %555 = vmatpush1.msra.mxu0 0.0
          %556 = vmatprep.subr.mxu0 0.0
          %557 = vmatpush1.msra.mxu0 0.0
          %558 = vmatprep.subr.mxu0 0.0
          %559 = vmatpush1.msra.mxu0 0.0
          %560 = vmatprep.subr.mxu0 0.0
          %561 = vmatpush1.msra.mxu0 0.0
          %562 = vmatprep.subr.mxu0 0.0
          %563 = vmatpush1.msra.mxu0 0.0
          %564 = vmatprep.subr.mxu0 0.0
          %565 = vmatpush1.msra.mxu0 0.0
          %566 = vmatprep.subr.mxu0 0.0
          %567 = vmatpush1.msra.mxu0 0.0
          %568 = vmatprep.subr.mxu0 0.0
          %569 = vmatpush1.msra.mxu0 0.0
          %570 = vmatprep.subr.mxu0 0.0
          %571 = vmatpush1.msra.mxu0 0.0
          %572 = vmatprep.subr.mxu0 0.0
          %573 = vmatpush1.msra.mxu0 0.0
          %574 = vmatprep.subr.mxu0 0.0
          %575 = vmatpush1.msra.mxu0 0.0
          %576 = vmatprep.subr.mxu0 0.0
          %577 = vmatpush1.msra.mxu0 0.0
          %578 = vmatprep.subr.mxu0 0.0
          %579 = vmatpush1.msra.mxu0 0.0
          %580 = vmatprep.subr.mxu0 0.0
          %581 = vmatpush1.msra.mxu0 0.0
          %582 = vmatprep.subr.mxu0 0.0
          %583 = vmatpush1.msra.mxu0 0.0
          %584 = vmatprep.subr.mxu0 0.0
          %585 = vmatpush1.msra.mxu0 0.0
          %586 = vmatprep.subr.mxu0 0.0
          %587 = vmatpush1.msra.mxu0 0.0
          %588 = vmatprep.subr.mxu0 0.0
          %589 = vmatpush1.msra.mxu0 0.0
          %590 = vmatprep.subr.mxu0 0.0
          %591 = vmatpush1.msra.mxu0 0.0
          %592 = vmatprep.subr.mxu0 0.0
          %593 = vmatpush1.msra.mxu0 0.0
          %594 = vmatprep.subr.mxu0 0.0
          %595 = vmatpush1.msra.mxu0 0.0
          %596 = vmatprep.subr.mxu0 0.0
          %597 = vmatpush1.msra.mxu0 0.0
          %598 = vmatprep.subr.mxu0 0.0
          %599 = vmatpush1.msra.mxu0 0.0
          %600 = vmatprep.subr.mxu0 0.0
          %601 = vmatpush1.msra.mxu0 0.0
          %602 = vmatprep.subr.mxu0 0.0
          %603 = vmatpush1.msra.mxu0 0.0
          %604 = vmatprep.subr.mxu0 0.0
          %605 = vmatpush1.msra.mxu0 0.0
          %606 = vmatprep.mubr.f32.mxu0 0.0
          %607 = vmatmul.mubr.f32.gmra.mrb[0].mxu0 %v489
          %v608 = vpop.f32.mrb[0].mxu0
          %v609 = vadd.f32 0.0, %v608
          %v610 = vpop.f32.mrb[0].mxu0
          %611 = vmatprep.mubr.f32.mxu0 0.0
          %612 = vmatmul.mubr.f32.gmra.mrb[0].mxu0 %v492
          %v613 = vpop.f32.mrb[0].mxu0
          %v614 = vadd.f32 0.0, %v613
          %v615 = vpop.f32.mrb[0].mxu0
          %616 = vmatprep.mubr.f32.mxu0 0.0
          %617 = vmatmul.mubr.f32.gmra.mrb[0].mxu0 %v495
          %v618 = vpop.f32.mrb[0].mxu0
          %v619 = vadd.f32 0.0, %v618
          %v620 = vpop.f32.mrb[0].mxu0
          %621 = vmatprep.mubr.f32.mxu0 0.0
          %622 = vmatmul.mubr.f32.gmra.mrb[0].mxu0 %v498
          %v623 = vpop.f32.mrb[0].mxu0
          %v624 = vadd.f32 0.0, %v623
          %v625 = vpop.f32.mrb[0].mxu0
          %626 = vmatprep.mubr.f32.mxu0 0.0
          %627 = vmatmul.mubr.f32.gmra.mrb[0].mxu0 %v501
          %v628 = vpop.f32.mrb[0].mxu0
          %v629 = vadd.f32 0.0, %v628
          %v630 = vpop.f32.mrb[0].mxu0
          %631 = vmatprep.mubr.f32.mxu0 0.0
          %632 = vmatmul.mubr.f32.gmra.mrb[0].mxu0 %v504
          %v633 = vpop.f32.mrb[0].mxu0
          %v634 = vadd.f32 0.0, %v633
          %v635 = vpop.f32.mrb[0].mxu0
          %636 = vmatprep.mubr.f32.mxu0 0.0
          %637 = vmatmul.mubr.f32.gmra.mrb[0].mxu0 %v507
          %v638 = vpop.f32.mrb[0].mxu0
          %v639 = vadd.f32 0.0, %v638
          %v640 = vpop.f32.mrb[0].mxu0
          %641 = vmatprep.mubr.f32.mxu0 0.0
          %642 = vmatmul.mubr.f32.gmra.mrb[0].mxu0 %v510
          %v643 = vpop.f32.mrb[0].mxu0
          %v644 = vadd.f32 0.0, %v643
          %v645 = vpop.f32.mrb[0].mxu0
          %646 = vmatprep.mubr.f32.mxu0 0.0
          %647 = vmatmul.mubr.f32.gmra.mrb[0].mxu0 %v513
          %v648 = vpop.f32.mrb[0].mxu0
          %v649 = vadd.f32 0.0, %v648
          %v650 = vpop.f32.mrb[0].mxu0
          %651 = vmatprep.mubr.f32.mxu0 0.0
          %652 = vmatmul.mubr.f32.gmra.mrb[0].mxu0 %v516
          %v653 = vpop.f32.mrb[0].mxu0
          %v654 = vadd.f32 0.0, %v653
          %v655 = vpop.f32.mrb[0].mxu0
          %656 = vmatprep.mubr.f32.mxu0 0.0
          %657 = vmatmul.mubr.f32.gmra.mrb[0].mxu0 %v519
          %v658 = vpop.f32.mrb[0].mxu0
          %v659 = vadd.f32 0.0, %v658
          %v660 = vpop.f32.mrb[0].mxu0
          %661 = vmatprep.mubr.f32.mxu0 0.0
          %662 = vmatmul.mubr.f32.gmra.mrb[0].mxu0 %v522
          %v663 = vpop.f32.mrb[0].mxu0
          %v664 = vadd.f32 0.0, %v663
          %v665 = vpop.f32.mrb[0].mxu0
          %666 = vmatprep.mubr.f32.mxu0 0.0
          %667 = vmatmul.mubr.f32.gmra.mrb[0].mxu0 %v525
          %v668 = vpop.f32.mrb[0].mxu0
          %v669 = vadd.f32 0.0, %v668
          %v670 = vpop.f32.mrb[0].mxu0
          %671 = vmatprep.mubr.f32.mxu0 0.0
          %672 = vmatmul.mubr.f32.gmra.mrb[0].mxu0 %v528
          %v673 = vpop.f32.mrb[0].mxu0
          %v674 = vadd.f32 0.0, %v673
          %v675 = vpop.f32.mrb[0].mxu0
          %676 = vmatprep.mubr.f32.mxu0 0.0
          %677 = vmatmul.mubr.f32.gmra.mrb[0].mxu0 %v531
          %v678 = vpop.f32.mrb[0].mxu0
          %v679 = vadd.f32 0.0, %v678
          %v680 = vpop.f32.mrb[0].mxu0
          %681 = vmatprep.mubr.f32.mxu0 0.0
          %682 = vmatmul.mubr.f32.gmra.mrb[0].mxu0 %v534
          %v683 = vpop.f32.mrb[0].mxu0
          %v684 = vadd.f32 0.0, %v683
          %v685 = vpop.f32.mrb[0].mxu0
          %686 = vmatprep.mubr.f32.mxu0 0.0
          %687 = vmatmul.mubr.f32.gmra.mrb[0].mxu0 %v537
          %v688 = vpop.f32.mrb[0].mxu0
          %v689 = vadd.f32 0.0, %v688
          %v690 = vpop.f32.mrb[0].mxu0
          %691 = vmatprep.mubr.f32.mxu0 0.0
          %692 = vmatmul.mubr.f32.gmra.mrb[0].mxu0 %v540
          %v693 = vpop.f32.mrb[0].mxu0
          %v694 = vadd.f32 0.0, %v693
          %v695 = vpop.f32.mrb[0].mxu0
          %696 = vdwg.mxu0
          %v697 = vld [vmem:[#allocation4] sm:$0x1]
          %v699 = vlaneseq
          %v700 = vshrl.u32 %v699, 7
          %v701 = vsub.s32 0, %v700
          %v702 = vrot.slane %v697, %v701
          %v704 = vmul.f32 %v609, %v702
          %v705 = vmul.f32 %v614, %v702
          %v706 = vmul.f32 %v619, %v702
          %v707 = vmul.f32 %v624, %v702
          %v708 = vmul.f32 %v629, %v702
          %v709 = vmul.f32 %v634, %v702
          %v710 = vmul.f32 %v639, %v702
          %v711 = vmul.f32 %v644, %v702
          %v712 = vmul.f32 %v649, %v702
          %v713 = vmul.f32 %v654, %v702
          %v714 = vmul.f32 %v659, %v702
          %v715 = vmul.f32 %v664, %v702
          %v716 = vmul.f32 %v669, %v702
          %v717 = vmul.f32 %v674, %v702
          %v718 = vmul.f32 %v679, %v702
          %v719 = vmul.f32 %v684, %v702
          %v720 = vmul.f32 %v689, %v702
          %v721 = vmul.f32 %v694, %v702
          %v722 = vld [vmem:[#allocation6] sm:$0x1]
          %v724 = vlaneseq
          %v725 = vshrl.u32 %v724, 7
          %v726 = vsub.s32 0, %v725
          %v727 = vrot.slane %v722, %v726
          %v729 = vadd.f32 %v704, %v727
          %v730 = vadd.f32 %v705, %v727
          %v731 = vadd.f32 %v706, %v727
          %v732 = vadd.f32 %v707, %v727
          %v733 = vadd.f32 %v708, %v727
          %v734 = vadd.f32 %v709, %v727
          %v735 = vadd.f32 %v710, %v727
          %v736 = vadd.f32 %v711, %v727
          %v737 = vadd.f32 %v712, %v727
          %v738 = vadd.f32 %v713, %v727
          %v739 = vadd.f32 %v714, %v727
          %v740 = vadd.f32 %v715, %v727
          %v741 = vadd.f32 %v716, %v727
          %v742 = vadd.f32 %v717, %v727
          %v743 = vadd.f32 %v718, %v727
          %v744 = vadd.f32 %v719, %v727
          %v745 = vadd.f32 %v720, %v727
          %v746 = vadd.f32 %v721, %v727
          %v747 = vmax.f32 %v729, 0.0
          %v748 = vmax.f32 %v730, 0.0
          %v749 = vmax.f32 %v731, 0.0
          %v750 = vmax.f32 %v732, 0.0
          %v751 = vmax.f32 %v733, 0.0
          %v752 = vmax.f32 %v734, 0.0
          %v753 = vmax.f32 %v735, 0.0
          %v754 = vmax.f32 %v736, 0.0
          %v755 = vmax.f32 %v737, 0.0
          %v756 = vmax.f32 %v738, 0.0
          %v757 = vmax.f32 %v739, 0.0
          %v758 = vmax.f32 %v740, 0.0
          %v759 = vmax.f32 %v741, 0.0
          %v760 = vmax.f32 %v742, 0.0
          %v761 = vmax.f32 %v743, 0.0
          %v762 = vmax.f32 %v744, 0.0
          %v763 = vmax.f32 %v745, 0.0
          %v764 = vmax.f32 %v746, 0.0
          %766 = vset.pattern.permute.xlu0 0
          %767 = vperm.xlu0 %766, %v443
          %v768 = vpop.permute.xlu0 %767
          %771 = vset.pattern.permute.xlu0 0
          %772 = vperm.xlu0 %771, %v444
          %v773 = vpop.permute.xlu0 %772
          %776 = vset.pattern.permute.xlu0 0
          %777 = vperm.xlu0 %776, %v445
          %v778 = vpop.permute.xlu0 %777
          %781 = vset.pattern.permute.xlu0 0
          %782 = vperm.xlu0 %781, %v446
          %v783 = vpop.permute.xlu0 %782
          %786 = vset.pattern.permute.xlu0 0
          %787 = vperm.xlu0 %786, %v447
          %v788 = vpop.permute.xlu0 %787
          %791 = vset.pattern.permute.xlu0 0
          %792 = vperm.xlu0 %791, %v448
          %v793 = vpop.permute.xlu0 %792
          %796 = vset.pattern.permute.xlu0 0
          %797 = vperm.xlu0 %796, %v449
          %v798 = vpop.permute.xlu0 %797
          %801 = vset.pattern.permute.xlu0 0
          %802 = vperm.xlu0 %801, %v450
          %v803 = vpop.permute.xlu0 %802
          %806 = vset.pattern.permute.xlu0 0
          %807 = vperm.xlu0 %806, %v451
          %v808 = vpop.permute.xlu0 %807
          %811 = vset.pattern.permute.xlu0 0
          %812 = vperm.xlu0 %811, %v452
          %v813 = vpop.permute.xlu0 %812
          %816 = vset.pattern.permute.xlu0 0
          %817 = vperm.xlu0 %816, %v453
          %v818 = vpop.permute.xlu0 %817
          %821 = vset.pattern.permute.xlu0 0
          %822 = vperm.xlu0 %821, %v454
          %v823 = vpop.permute.xlu0 %822
          %826 = vset.pattern.permute.xlu0 0
          %827 = vperm.xlu0 %826, %v455
          %v828 = vpop.permute.xlu0 %827
          %831 = vset.pattern.permute.xlu0 0
          %832 = vperm.xlu0 %831, %v456
          %v833 = vpop.permute.xlu0 %832
          %836 = vset.pattern.permute.xlu0 0
          %837 = vperm.xlu0 %836, %v457
          %v838 = vpop.permute.xlu0 %837
          %841 = vset.pattern.permute.xlu0 0
          %842 = vperm.xlu0 %841, %v458
          %v843 = vpop.permute.xlu0 %842
          %846 = vset.pattern.permute.xlu0 0
          %847 = vperm.xlu0 %846, %v459
          %v848 = vpop.permute.xlu0 %847
          %851 = vset.pattern.permute.xlu0 0
          %852 = vperm.xlu0 %851, %v460
          %v853 = vpop.permute.xlu0 %852
          %v855 = vmul.f32 %v747, %v768
          %v856 = vmul.f32 %v748, %v773
          %v857 = vmul.f32 %v749, %v778
          %v858 = vmul.f32 %v750, %v783
          %v859 = vmul.f32 %v751, %v788
          %v860 = vmul.f32 %v752, %v793
          %v861 = vmul.f32 %v753, %v798
          %v862 = vmul.f32 %v754, %v803
          %v863 = vmul.f32 %v755, %v808
          %v864 = vmul.f32 %v756, %v813
          %v865 = vmul.f32 %v757, %v818
          %v866 = vmul.f32 %v758, %v823
          %v867 = vmul.f32 %v759, %v828
          %v868 = vmul.f32 %v760, %v833
          %v869 = vmul.f32 %v761, %v838
          %v870 = vmul.f32 %v762, %v843
          %v871 = vmul.f32 %v763, %v848
          %v872 = vmul.f32 %v764, %v853
          %873 = vst [vmem:[%s8] sm:$0xff] %v855
          %874 = vst [vmem:[%s8 + $0x8] sm:$0xff] %v856
          %875 = vst [vmem:[%s8 + $0x10] sm:$0xff] %v857
          %876 = vst [vmem:[%s8 + $0x18] sm:$0xff] %v858
          %877 = vst [vmem:[%s8 + $0x20] sm:$0xff] %v859
          %878 = vst [vmem:[%s8 + $0x28] sm:$0xff] %v860
          %879 = vst [vmem:[%s8 + $0x30] sm:$0xff] %v861
          %880 = vst [vmem:[%s8 + $0x38] sm:$0xff] %v862
          %881 = vst [vmem:[%s8 + $0x40] sm:$0xff] %v863
          %882 = vst [vmem:[%s8 + $0x48] sm:$0xff] %v864
          %883 = vst [vmem:[%s8 + $0x50] sm:$0xff] %v865
          %884 = vst [vmem:[%s8 + $0x58] sm:$0xff] %v866
          %885 = vst [vmem:[%s8 + $0x60] sm:$0xff] %v867
          %886 = vst [vmem:[%s8 + $0x68] sm:$0xff] %v868
          %887 = vst [vmem:[%s8 + $0x70] sm:$0xff] %v869
          %888 = vst [vmem:[%s8 + $0x78] sm:$0xff] %v870
          %889 = vst [vmem:[%s8 + $0x80] sm:$0xff] %v871
          %890 = vst [vmem:[%s8 + $0x88] sm:$0xff] %v872
        $region84: #{connectnet_forward.3} parent=51 // pred_fallthru
          _
        %v891 = vld [vmem:[%s8] sm:$0xff]
        %v892 = vld [vmem:[%s8 + $0x8] sm:$0xff]
        %v893 = vld [vmem:[%s8 + $0x10] sm:$0xff]
        %v894 = vld [vmem:[%s8 + $0x18] sm:$0xff]
        %v895 = vld [vmem:[%s8 + $0x20] sm:$0xff]
        %v896 = vld [vmem:[%s8 + $0x28] sm:$0xff]
        %v897 = vld [vmem:[%s8 + $0x30] sm:$0xff]
        %v898 = vld [vmem:[%s8 + $0x38] sm:$0xff]
        %v899 = vld [vmem:[%s8 + $0x40] sm:$0xff]
        %v900 = vld [vmem:[%s8 + $0x48] sm:$0xff]
        %v901 = vld [vmem:[%s8 + $0x50] sm:$0xff]
        %v902 = vld [vmem:[%s8 + $0x58] sm:$0xff]
        %v903 = vld [vmem:[%s8 + $0x60] sm:$0xff]
        %v904 = vld [vmem:[%s8 + $0x68] sm:$0xff]
        %v905 = vld [vmem:[%s8 + $0x70] sm:$0xff]
        %v906 = vld [vmem:[%s8 + $0x78] sm:$0xff]
        %v907 = vld [vmem:[%s8 + $0x80] sm:$0xff]
        %v908 = vld [vmem:[%s8 + $0x88] sm:$0xff]
        %v909 = vpack.c.bf16 %v892, %v891
        %v910 = vpack.c.bf16 %v894, %v893
        %v911 = vpack.c.bf16 %v896, %v895
        %v912 = vpack.c.bf16 %v898, %v897
        %v913 = vpack.c.bf16 %v900, %v899
        %v914 = vpack.c.bf16 %v902, %v901
        %v915 = vpack.c.bf16 %v904, %v903
        %v916 = vpack.c.bf16 %v906, %v905
        %v917 = vpack.c.bf16 %v908, %v907
        %v918 = vld [vmem:[%s382] sm:$0xff]
        %v919 = vld [vmem:[%s382 + $0x8] sm:$0xf]
        %v920 = vld [vmem:[%s382 + $0xc] sm:$0xff]
        %v921 = vld [vmem:[%s382 + $0x14] sm:$0xf]
        %v922 = vld [vmem:[%s382 + $0x18] sm:$0xff]
        %v923 = vld [vmem:[%s382 + $0x20] sm:$0xf]
        %v924 = vld [vmem:[%s382 + $0x24] sm:$0xff]
        %v925 = vld [vmem:[%s382 + $0x2c] sm:$0xf]
        %v926 = vld [vmem:[%s382 + $0x30] sm:$0xff]
        %v927 = vld [vmem:[%s382 + $0x38] sm:$0xf]
        %v928 = vld [vmem:[%s382 + $0x3c] sm:$0xff]
        %v929 = vld [vmem:[%s382 + $0x44] sm:$0xf]
        %v930 = vld [vmem:[%s382 + $0x48] sm:$0xff]
        %v931 = vld [vmem:[%s382 + $0x50] sm:$0xf]
        %v932 = vld [vmem:[%s382 + $0x54] sm:$0xff]
        %v933 = vld [vmem:[%s382 + $0x5c] sm:$0xf]
        %v934 = vld [vmem:[%s382 + $0x60] sm:$0xff]
        %v935 = vld [vmem:[%s382 + $0x68] sm:$0xf]
        %v936 = vld [vmem:[%s382 + $0x6c] sm:$0xff]
        %v937 = vld [vmem:[%s382 + $0x74] sm:$0xf]
        %v938 = vld [vmem:[%s382 + $0x78] sm:$0xff]
        %v939 = vld [vmem:[%s382 + $0x80] sm:$0xf]
        %v940 = vld [vmem:[%s382 + $0x84] sm:$0xff]
        %v941 = vld [vmem:[%s382 + $0x8c] sm:$0xf]
        %v942 = vld [vmem:[%s382 + $0x90] sm:$0xff]
        %v943 = vld [vmem:[%s382 + $0x98] sm:$0xf]
        %v944 = vld [vmem:[%s382 + $0x9c] sm:$0xff]
        %v945 = vld [vmem:[%s382 + $0xa4] sm:$0xf]
        %v946 = vld [vmem:[%s382 + $0xa8] sm:$0xff]
        %v947 = vld [vmem:[%s382 + $0xb0] sm:$0xf]
        %v948 = vld [vmem:[%s382 + $0xb4] sm:$0xff]
        %v949 = vld [vmem:[%s382 + $0xbc] sm:$0xf]
        %v982 = vunpack.c.l.b16 %v918
        %v983 = vunpack.c.h.b16 %v918
        %v984 = vunpack.c.l.b16 %v919
        %v985 = vunpack.c.l.b16 %v920
        %v986 = vunpack.c.h.b16 %v920
        %v987 = vunpack.c.l.b16 %v921
        %v988 = vunpack.c.l.b16 %v922
        %v989 = vunpack.c.h.b16 %v922
        %v990 = vunpack.c.l.b16 %v923
        %v991 = vunpack.c.l.b16 %v924
        %v992 = vunpack.c.h.b16 %v924
        %v993 = vunpack.c.l.b16 %v925
        %v994 = vunpack.c.l.b16 %v926
        %v995 = vunpack.c.h.b16 %v926
        %v996 = vunpack.c.l.b16 %v927
        %v997 = vunpack.c.l.b16 %v928
        %v998 = vunpack.c.h.b16 %v928
        %v999 = vunpack.c.l.b16 %v929
        %v1000 = vunpack.c.l.b16 %v930
        %v1001 = vunpack.c.h.b16 %v930
        %v1002 = vunpack.c.l.b16 %v931
        %v1003 = vunpack.c.l.b16 %v932
        %v1004 = vunpack.c.h.b16 %v932
        %v1005 = vunpack.c.l.b16 %v933
        %v1006 = vunpack.c.l.b16 %v934
        %v1007 = vunpack.c.h.b16 %v934
        %v1008 = vunpack.c.l.b16 %v935
        %v1009 = vunpack.c.l.b16 %v936
        %v1010 = vunpack.c.h.b16 %v936
        %v1011 = vunpack.c.l.b16 %v937
        %v1012 = vunpack.c.l.b16 %v938
        %v1013 = vunpack.c.h.b16 %v938
        %v1014 = vunpack.c.l.b16 %v939
        %v1015 = vunpack.c.l.b16 %v940
        %v1016 = vunpack.c.h.b16 %v940
        %v1017 = vunpack.c.l.b16 %v941
        %v1018 = vunpack.c.l.b16 %v942
        %v1019 = vunpack.c.h.b16 %v942
        %v1020 = vunpack.c.l.b16 %v943
        %v1021 = vunpack.c.l.b16 %v944
        %v1022 = vunpack.c.h.b16 %v944
        %v1023 = vunpack.c.l.b16 %v945
        %v1024 = vunpack.c.l.b16 %v946
        %v1025 = vunpack.c.h.b16 %v946
        %v1026 = vunpack.c.l.b16 %v947
        %v1027 = vunpack.c.l.b16 %v948
        %v1028 = vunpack.c.h.b16 %v948
        %v1029 = vunpack.c.l.b16 %v949
        %v1030 = vpack.c.b16 %v985, %v982
        %v1031 = vpack.c.b16 %v986, %v983
        %v1032 = vpack.c.b16 %v987, %v984
        %v1033 = vpack.c.b16 %v991, %v988
        %v1034 = vpack.c.b16 %v992, %v989
        %v1035 = vpack.c.b16 %v993, %v990
        %v1036 = vpack.c.b16 %v997, %v994
        %v1037 = vpack.c.b16 %v998, %v995
        %v1038 = vpack.c.b16 %v999, %v996
        %v1039 = vpack.c.b16 %v1003, %v1000
        %v1040 = vpack.c.b16 %v1004, %v1001
        %v1041 = vpack.c.b16 %v1005, %v1002
        %v1042 = vpack.c.b16 %v1009, %v1006
        %v1043 = vpack.c.b16 %v1010, %v1007
        %v1044 = vpack.c.b16 %v1011, %v1008
        %v1045 = vpack.c.b16 %v1015, %v1012
        %v1046 = vpack.c.b16 %v1016, %v1013
        %v1047 = vpack.c.b16 %v1017, %v1014
        %v1048 = vpack.c.b16 %v1021, %v1018
        %v1049 = vpack.c.b16 %v1022, %v1019
        %v1050 = vpack.c.b16 %v1023, %v1020
        %v1051 = vpack.c.b16 %v1027, %v1024
        %v1052 = vpack.c.b16 %v1028, %v1025
        %v1053 = vpack.c.b16 %v1029, %v1026
        %1078 = vmatprep.subr.bf16.mxu0 %v1031
        %1079 = vmatpush1.bf16.msra.mxu0 %v1030
        %1080 = vmatprep.subr.bf16.mxu0 %v1034
        %1081 = vmatpush1.bf16.msra.mxu0 %v1033
        %1082 = vmatprep.subr.bf16.mxu0 %v1037
        %1083 = vmatpush1.bf16.msra.mxu0 %v1036
        %1084 = vmatprep.subr.bf16.mxu0 %v1040
        %1085 = vmatpush1.bf16.msra.mxu0 %v1039
        %1086 = vmatprep.subr.bf16.mxu0 %v1043
        %1087 = vmatpush1.bf16.msra.mxu0 %v1042
        %1088 = vmatprep.subr.bf16.mxu0 %v1046
        %1089 = vmatpush1.bf16.msra.mxu0 %v1045
        %1090 = vmatprep.subr.bf16.mxu0 %v1049
        %1091 = vmatpush1.bf16.msra.mxu0 %v1048
        %1092 = vmatprep.subr.bf16.mxu0 %v1052
        %1093 = vmatpush1.bf16.msra.mxu0 %v1051
        %1094 = vmatprep.subr.bf16.mxu0 0
        %1095 = vmatpush1.bf16.msra.mxu0 0
        %1096 = vmatprep.subr.bf16.mxu0 0
        %1097 = vmatpush1.bf16.msra.mxu0 0
        %1098 = vmatprep.subr.bf16.mxu0 0
        %1099 = vmatpush1.bf16.msra.mxu0 0
        %1100 = vmatprep.subr.bf16.mxu0 0
        %1101 = vmatpush1.bf16.msra.mxu0 0
        %1102 = vmatprep.subr.bf16.mxu0 0
        %1103 = vmatpush1.bf16.msra.mxu0 0
        %1104 = vmatprep.subr.bf16.mxu0 0
        %1105 = vmatpush1.bf16.msra.mxu0 0
        %1106 = vmatprep.subr.bf16.mxu0 0
        %1107 = vmatpush1.bf16.msra.mxu0 0
        %1108 = vmatprep.subr.bf16.mxu0 0
        %1109 = vmatpush1.bf16.msra.mxu0 0
        %1110 = vmatprep.mubr.bf16.mxu0 0
        %1111 = vmatmul.mubr.bf16.gmra.mrb[0].mxu0 %v909
        %v1112 = vpop.f32.mrb[0].mxu0
        %v1113 = vadd.f32 0.0, %v1112
        %v1114 = vpop.f32.mrb[0].mxu0
        %v1115 = vadd.f32 0.0, %v1114
        %v1116 = vpop.f32.mrb[0].mxu0
        %v1117 = vadd.f32 0.0, %v1116
        %v1118 = vpop.f32.mrb[0].mxu0
        %v1119 = vadd.f32 0.0, %v1118
        %1120 = vmatprep.mubr.bf16.mxu0 0
        %1121 = vmatmul.mubr.bf16.gmra.mrb[0].mxu0 %v910
        %v1122 = vpop.f32.mrb[0].mxu0
        %v1123 = vadd.f32 0.0, %v1122
        %v1124 = vpop.f32.mrb[0].mxu0
        %v1125 = vadd.f32 0.0, %v1124
        %v1126 = vpop.f32.mrb[0].mxu0
        %v1127 = vadd.f32 0.0, %v1126
        %v1128 = vpop.f32.mrb[0].mxu0
        %v1129 = vadd.f32 0.0, %v1128
        %1130 = vmatprep.mubr.bf16.mxu0 0
        %1131 = vmatmul.mubr.bf16.gmra.mrb[0].mxu0 %v911
        %v1132 = vpop.f32.mrb[0].mxu0
        %v1133 = vadd.f32 0.0, %v1132
        %v1134 = vpop.f32.mrb[0].mxu0
        %v1135 = vadd.f32 0.0, %v1134
        %v1136 = vpop.f32.mrb[0].mxu0
        %v1137 = vadd.f32 0.0, %v1136
        %v1138 = vpop.f32.mrb[0].mxu0
        %v1139 = vadd.f32 0.0, %v1138
        %1140 = vmatprep.mubr.bf16.mxu0 0
        %1141 = vmatmul.mubr.bf16.gmra.mrb[0].mxu0 %v912
        %v1142 = vpop.f32.mrb[0].mxu0
        %v1143 = vadd.f32 0.0, %v1142
        %v1144 = vpop.f32.mrb[0].mxu0
        %v1145 = vadd.f32 0.0, %v1144
        %v1146 = vpop.f32.mrb[0].mxu0
        %v1147 = vadd.f32 0.0, %v1146
        %v1148 = vpop.f32.mrb[0].mxu0
        %v1149 = vadd.f32 0.0, %v1148
        %1150 = vmatprep.mubr.bf16.mxu0 0
        %1151 = vmatmul.mubr.bf16.gmra.mrb[0].mxu0 %v913
        %v1152 = vpop.f32.mrb[0].mxu0
        %v1153 = vadd.f32 0.0, %v1152
        %v1154 = vpop.f32.mrb[0].mxu0
        %v1155 = vadd.f32 0.0, %v1154
        %v1156 = vpop.f32.mrb[0].mxu0
        %v1157 = vadd.f32 0.0, %v1156
        %v1158 = vpop.f32.mrb[0].mxu0
        %v1159 = vadd.f32 0.0, %v1158
        %1160 = vmatprep.mubr.bf16.mxu0 0
        %1161 = vmatmul.mubr.bf16.gmra.mrb[0].mxu0 %v914
        %v1162 = vpop.f32.mrb[0].mxu0
        %v1163 = vadd.f32 0.0, %v1162
        %v1164 = vpop.f32.mrb[0].mxu0
        %v1165 = vadd.f32 0.0, %v1164
        %v1166 = vpop.f32.mrb[0].mxu0
        %v1167 = vadd.f32 0.0, %v1166
        %v1168 = vpop.f32.mrb[0].mxu0
        %v1169 = vadd.f32 0.0, %v1168
        %1170 = vmatprep.mubr.bf16.mxu0 0
        %1171 = vmatmul.mubr.bf16.gmra.mrb[0].mxu0 %v915
        %v1172 = vpop.f32.mrb[0].mxu0
        %v1173 = vadd.f32 0.0, %v1172
        %v1174 = vpop.f32.mrb[0].mxu0
        %v1175 = vadd.f32 0.0, %v1174
        %v1176 = vpop.f32.mrb[0].mxu0
        %v1177 = vadd.f32 0.0, %v1176
        %v1178 = vpop.f32.mrb[0].mxu0
        %v1179 = vadd.f32 0.0, %v1178
        %1180 = vmatprep.mubr.bf16.mxu0 0
        %1181 = vmatmul.mubr.bf16.gmra.mrb[0].mxu0 %v916
        %v1182 = vpop.f32.mrb[0].mxu0
        %v1183 = vadd.f32 0.0, %v1182
        %v1184 = vpop.f32.mrb[0].mxu0
        %v1185 = vadd.f32 0.0, %v1184
        %v1186 = vpop.f32.mrb[0].mxu0
        %v1187 = vadd.f32 0.0, %v1186
        %v1188 = vpop.f32.mrb[0].mxu0
        %v1189 = vadd.f32 0.0, %v1188
        %1190 = vmatprep.mubr.bf16.mxu0 0
        %1191 = vmatmul.mubr.bf16.gmra.mrb[0].mxu0 %v917
        %v1192 = vpop.f32.mrb[0].mxu0
        %v1193 = vadd.f32 0.0, %v1192
        %v1194 = vpop.f32.mrb[0].mxu0
        %v1195 = vadd.f32 0.0, %v1194
        %v1196 = vpop.f32.mrb[0].mxu0
        %v1197 = vadd.f32 0.0, %v1196
        %v1198 = vpop.f32.mrb[0].mxu0
        %v1199 = vadd.f32 0.0, %v1198
        %1200 = vdwg.mxu0
        %1201 = vmatprep.subr.bf16.mxu0 0
        %1202 = vmatpush1.bf16.msra.mxu0 %v1032
        %1203 = vmatprep.subr.bf16.mxu0 0
        %1204 = vmatpush1.bf16.msra.mxu0 %v1035
        %1205 = vmatprep.subr.bf16.mxu0 0
        %1206 = vmatpush1.bf16.msra.mxu0 %v1038
        %1207 = vmatprep.subr.bf16.mxu0 0
        %1208 = vmatpush1.bf16.msra.mxu0 %v1041
        %1209 = vmatprep.subr.bf16.mxu0 0
        %1210 = vmatpush1.bf16.msra.mxu0 %v1044
        %1211 = vmatprep.subr.bf16.mxu0 0
        %1212 = vmatpush1.bf16.msra.mxu0 %v1047
        %1213 = vmatprep.subr.bf16.mxu0 0
        %1214 = vmatpush1.bf16.msra.mxu0 %v1050
        %1215 = vmatprep.subr.bf16.mxu0 0
        %1216 = vmatpush1.bf16.msra.mxu0 %v1053
        %1217 = vmatprep.subr.bf16.mxu0 0
        %1218 = vmatpush1.bf16.msra.mxu0 0
        %1219 = vmatprep.subr.bf16.mxu0 0
        %1220 = vmatpush1.bf16.msra.mxu0 0
        %1221 = vmatprep.subr.bf16.mxu0 0
        %1222 = vmatpush1.bf16.msra.mxu0 0
        %1223 = vmatprep.subr.bf16.mxu0 0
        %1224 = vmatpush1.bf16.msra.mxu0 0
        %1225 = vmatprep.subr.bf16.mxu0 0
        %1226 = vmatpush1.bf16.msra.mxu0 0
        %1227 = vmatprep.subr.bf16.mxu0 0
        %1228 = vmatpush1.bf16.msra.mxu0 0
        %1229 = vmatprep.subr.bf16.mxu0 0
        %1230 = vmatpush1.bf16.msra.mxu0 0
        %1231 = vmatprep.subr.bf16.mxu0 0
        %1232 = vmatpush1.bf16.msra.mxu0 0
        %1233 = vmatprep.mubr.bf16.mxu0 0
        %1234 = vmatmul.mubr.bf16.gmra.mrb[0].mxu0 %v909
        %v1235 = vpop.f32.mrb[0].mxu0
        %v1236 = vadd.f32 0.0, %v1235
        %v1237 = vpop.f32.mrb[0].mxu0
        %v1238 = vpop.f32.mrb[0].mxu0
        %v1239 = vadd.f32 0.0, %v1238
        %v1240 = vpop.f32.mrb[0].mxu0
        %1241 = vmatprep.mubr.bf16.mxu0 0
        %1242 = vmatmul.mubr.bf16.gmra.mrb[0].mxu0 %v910
        %v1243 = vpop.f32.mrb[0].mxu0
        %v1244 = vadd.f32 0.0, %v1243
        %v1245 = vpop.f32.mrb[0].mxu0
        %v1246 = vpop.f32.mrb[0].mxu0
        %v1247 = vadd.f32 0.0, %v1246
        %v1248 = vpop.f32.mrb[0].mxu0
        %1249 = vmatprep.mubr.bf16.mxu0 0
        %1250 = vmatmul.mubr.bf16.gmra.mrb[0].mxu0 %v911
        %v1251 = vpop.f32.mrb[0].mxu0
        %v1252 = vadd.f32 0.0, %v1251
        %v1253 = vpop.f32.mrb[0].mxu0
        %v1254 = vpop.f32.mrb[0].mxu0
        %v1255 = vadd.f32 0.0, %v1254
        %v1256 = vpop.f32.mrb[0].mxu0
        %1257 = vmatprep.mubr.bf16.mxu0 0
        %1258 = vmatmul.mubr.bf16.gmra.mrb[0].mxu0 %v912
        %v1259 = vpop.f32.mrb[0].mxu0
        %v1260 = vadd.f32 0.0, %v1259
        %v1261 = vpop.f32.mrb[0].mxu0
        %v1262 = vpop.f32.mrb[0].mxu0
        %v1263 = vadd.f32 0.0, %v1262
        %v1264 = vpop.f32.mrb[0].mxu0
        %1265 = vmatprep.mubr.bf16.mxu0 0
        %1266 = vmatmul.mubr.bf16.gmra.mrb[0].mxu0 %v913
        %v1267 = vpop.f32.mrb[0].mxu0
        %v1268 = vadd.f32 0.0, %v1267
        %v1269 = vpop.f32.mrb[0].mxu0
        %v1270 = vpop.f32.mrb[0].mxu0
        %v1271 = vadd.f32 0.0, %v1270
        %v1272 = vpop.f32.mrb[0].mxu0
        %1273 = vmatprep.mubr.bf16.mxu0 0
        %1274 = vmatmul.mubr.bf16.gmra.mrb[0].mxu0 %v914
        %v1275 = vpop.f32.mrb[0].mxu0
        %v1276 = vadd.f32 0.0, %v1275
        %v1277 = vpop.f32.mrb[0].mxu0
        %v1278 = vpop.f32.mrb[0].mxu0
        %v1279 = vadd.f32 0.0, %v1278
        %v1280 = vpop.f32.mrb[0].mxu0
        %1281 = vmatprep.mubr.bf16.mxu0 0
        %1282 = vmatmul.mubr.bf16.gmra.mrb[0].mxu0 %v915
        %v1283 = vpop.f32.mrb[0].mxu0
        %v1284 = vadd.f32 0.0, %v1283
        %v1285 = vpop.f32.mrb[0].mxu0
        %v1286 = vpop.f32.mrb[0].mxu0
        %v1287 = vadd.f32 0.0, %v1286
        %v1288 = vpop.f32.mrb[0].mxu0
        %1289 = vmatprep.mubr.bf16.mxu0 0
        %1290 = vmatmul.mubr.bf16.gmra.mrb[0].mxu0 %v916
        %v1291 = vpop.f32.mrb[0].mxu0
        %v1292 = vadd.f32 0.0, %v1291
        %v1293 = vpop.f32.mrb[0].mxu0
        %v1294 = vpop.f32.mrb[0].mxu0
        %v1295 = vadd.f32 0.0, %v1294
        %v1296 = vpop.f32.mrb[0].mxu0
        %1297 = vmatprep.mubr.bf16.mxu0 0
        %1298 = vmatmul.mubr.bf16.gmra.mrb[0].mxu0 %v917
        %v1299 = vpop.f32.mrb[0].mxu0
        %v1300 = vadd.f32 0.0, %v1299
        %v1301 = vpop.f32.mrb[0].mxu0
        %v1302 = vpop.f32.mrb[0].mxu0
        %v1303 = vadd.f32 0.0, %v1302
        %v1304 = vpop.f32.mrb[0].mxu0
        %1305 = vdwg.mxu0
        %v1306 = vrot.slane %v1113, 6
        %v1307 = vrot.slane %v1117, 6
        %v1308 = vrot.slane %v1123, 6
        %v1309 = vrot.slane %v1127, 6
        %v1310 = vrot.slane %v1133, 6
        %v1311 = vrot.slane %v1137, 6
        %v1312 = vrot.slane %v1143, 6
        %v1313 = vrot.slane %v1147, 6
        %v1314 = vrot.slane %v1153, 6
        %v1315 = vrot.slane %v1157, 6
        %v1316 = vrot.slane %v1163, 6
        %v1317 = vrot.slane %v1167, 6
        %v1318 = vrot.slane %v1173, 6
        %v1319 = vrot.slane %v1177, 6
        %v1320 = vrot.slane %v1183, 6
        %v1321 = vrot.slane %v1187, 6
        %v1322 = vrot.slane %v1193, 6
        %v1323 = vrot.slane %v1197, 6
        %v1324 = vlaneseq
        %v1325 = vshrl.u32 %v1324, 7
        %vm1326 = vcmp.lt.s32.totalorder %v1325, 2
        %v1327 = vsel %vm1326, %v1322, %v1323
        %v1328 = vsel %vm1326, %v1321, %v1322
        %v1329 = vsel %vm1326, %v1320, %v1321
        %v1330 = vsel %vm1326, %v1319, %v1320
        %v1331 = vsel %vm1326, %v1318, %v1319
        %v1332 = vsel %vm1326, %v1317, %v1318
        %v1333 = vsel %vm1326, %v1316, %v1317
        %v1334 = vsel %vm1326, %v1315, %v1316
        %v1335 = vsel %vm1326, %v1314, %v1315
        %v1336 = vsel %vm1326, %v1313, %v1314
        %v1337 = vsel %vm1326, %v1312, %v1313
        %v1338 = vsel %vm1326, %v1311, %v1312
        %v1339 = vsel %vm1326, %v1310, %v1311
        %v1340 = vsel %vm1326, %v1309, %v1310
        %v1341 = vsel %vm1326, %v1308, %v1309
        %v1342 = vsel %vm1326, %v1307, %v1308
        %v1343 = vsel %vm1326, %v1306, %v1307
        %v1344 = vsel %vm1326, %v1323, %v1306
        %v1345 = vrot.slane %v1115, 7
        %v1346 = vrot.slane %v1119, 7
        %v1347 = vrot.slane %v1125, 7
        %v1348 = vrot.slane %v1129, 7
        %v1349 = vrot.slane %v1135, 7
        %v1350 = vrot.slane %v1139, 7
        %v1351 = vrot.slane %v1145, 7
        %v1352 = vrot.slane %v1149, 7
        %v1353 = vrot.slane %v1155, 7
        %v1354 = vrot.slane %v1159, 7
        %v1355 = vrot.slane %v1165, 7
        %v1356 = vrot.slane %v1169, 7
        %v1357 = vrot.slane %v1175, 7
        %v1358 = vrot.slane %v1179, 7
        %v1359 = vrot.slane %v1185, 7
        %v1360 = vrot.slane %v1189, 7
        %v1361 = vrot.slane %v1195, 7
        %v1362 = vrot.slane %v1199, 7
        %vm1363 = vcmp.lt.s32.totalorder %v1325, 1
        %v1364 = vsel %vm1363, %v1361, %v1362
        %v1365 = vsel %vm1363, %v1360, %v1361
        %v1366 = vsel %vm1363, %v1359, %v1360
        %v1367 = vsel %vm1363, %v1358, %v1359
        %v1368 = vsel %vm1363, %v1357, %v1358
        %v1369 = vsel %vm1363, %v1356, %v1357
        %v1370 = vsel %vm1363, %v1355, %v1356
        %v1371 = vsel %vm1363, %v1354, %v1355
        %v1372 = vsel %vm1363, %v1353, %v1354
        %v1373 = vsel %vm1363, %v1352, %v1353
        %v1374 = vsel %vm1363, %v1351, %v1352
        %v1375 = vsel %vm1363, %v1350, %v1351
        %v1376 = vsel %vm1363, %v1349, %v1350
        %v1377 = vsel %vm1363, %v1348, %v1349
        %v1378 = vsel %vm1363, %v1347, %v1348
        %v1379 = vsel %vm1363, %v1346, %v1347
        %v1380 = vsel %vm1363, %v1345, %v1346
        %v1381 = vsel %vm1363, %v1362, %v1345
        %v1382 = vadd.f32 %v1327, %v1364
        %v1383 = vadd.f32 %v1344, %v1381
        %v1384 = vadd.f32 %v1343, %v1380
        %v1385 = vadd.f32 %v1342, %v1379
        %v1386 = vadd.f32 %v1341, %v1378
        %v1387 = vadd.f32 %v1340, %v1377
        %v1388 = vadd.f32 %v1339, %v1376
        %v1389 = vadd.f32 %v1338, %v1375
        %v1390 = vadd.f32 %v1337, %v1374
        %v1391 = vadd.f32 %v1336, %v1373
        %v1392 = vadd.f32 %v1335, %v1372
        %v1393 = vadd.f32 %v1334, %v1371
        %v1394 = vadd.f32 %v1333, %v1370
        %v1395 = vadd.f32 %v1332, %v1369
        %v1396 = vadd.f32 %v1331, %v1368
        %v1397 = vadd.f32 %v1330, %v1367
        %v1398 = vadd.f32 %v1329, %v1366
        %v1399 = vadd.f32 %v1328, %v1365
        %v1400 = vadd.f32 %v1382, %v1303
        %v1401 = vadd.f32 %v1383, %v1236
        %v1402 = vadd.f32 %v1384, %v1239
        %v1403 = vadd.f32 %v1385, %v1244
        %v1404 = vadd.f32 %v1386, %v1247
        %v1405 = vadd.f32 %v1387, %v1252
        %v1406 = vadd.f32 %v1388, %v1255
        %v1407 = vadd.f32 %v1389, %v1260
        %v1408 = vadd.f32 %v1390, %v1263
        %v1409 = vadd.f32 %v1391, %v1268
        %v1410 = vadd.f32 %v1392, %v1271
        %v1411 = vadd.f32 %v1393, %v1276
        %v1412 = vadd.f32 %v1394, %v1279
        %v1413 = vadd.f32 %v1395, %v1284
        %v1414 = vadd.f32 %v1396, %v1287
        %v1415 = vadd.f32 %v1397, %v1292
        %v1416 = vadd.f32 %v1398, %v1295
        %v1417 = vadd.f32 %v1399, %v1300
        %s1418 = scalar_lea.vmem %s382, 192 [#allocation7]
        %v1419 = vld [vmem:[%s1418] sm:$0xff]
        %v1420 = vld [vmem:[%s1418 + $0x8] sm:$0xf]
        %v1421 = vld [vmem:[%s1418 + $0xc] sm:$0xff]
        %v1422 = vld [vmem:[%s1418 + $0x14] sm:$0xf]
        %v1423 = vld [vmem:[%s1418 + $0x18] sm:$0xff]
        %v1424 = vld [vmem:[%s1418 + $0x20] sm:$0xf]
        %v1425 = vld [vmem:[%s1418 + $0x24] sm:$0xff]
        %v1426 = vld [vmem:[%s1418 + $0x2c] sm:$0xf]
        %v1427 = vld [vmem:[%s1418 + $0x30] sm:$0xff]
        %v1428 = vld [vmem:[%s1418 + $0x38] sm:$0xf]
        %v1429 = vld [vmem:[%s1418 + $0x3c] sm:$0xff]
        %v1430 = vld [vmem:[%s1418 + $0x44] sm:$0xf]
        %v1431 = vld [vmem:[%s1418 + $0x48] sm:$0xff]
        %v1432 = vld [vmem:[%s1418 + $0x50] sm:$0xf]
        %v1433 = vld [vmem:[%s1418 + $0x54] sm:$0xff]
        %v1434 = vld [vmem:[%s1418 + $0x5c] sm:$0xf]
        %v1435 = vld [vmem:[%s1418 + $0x60] sm:$0xff]
        %v1436 = vld [vmem:[%s1418 + $0x68] sm:$0xf]
        %v1437 = vld [vmem:[%s1418 + $0x6c] sm:$0xff]
        %v1438 = vld [vmem:[%s1418 + $0x74] sm:$0xf]
        %v1439 = vld [vmem:[%s1418 + $0x78] sm:$0xff]
        %v1440 = vld [vmem:[%s1418 + $0x80] sm:$0xf]
        %v1441 = vld [vmem:[%s1418 + $0x84] sm:$0xff]
        %v1442 = vld [vmem:[%s1418 + $0x8c] sm:$0xf]
        %v1443 = vld [vmem:[%s1418 + $0x90] sm:$0xff]
        %v1444 = vld [vmem:[%s1418 + $0x98] sm:$0xf]
        %v1445 = vld [vmem:[%s1418 + $0x9c] sm:$0xff]
        %v1446 = vld [vmem:[%s1418 + $0xa4] sm:$0xf]
        %v1447 = vld [vmem:[%s1418 + $0xa8] sm:$0xff]
        %v1448 = vld [vmem:[%s1418 + $0xb0] sm:$0xf]
        %v1449 = vld [vmem:[%s1418 + $0xb4] sm:$0xff]
        %v1450 = vld [vmem:[%s1418 + $0xbc] sm:$0xf]
        %v1483 = vunpack.c.l.b16 %v1419
        %v1484 = vunpack.c.h.b16 %v1419
        %v1485 = vunpack.c.l.b16 %v1420
        %v1486 = vunpack.c.l.b16 %v1421
        %v1487 = vunpack.c.h.b16 %v1421
        %v1488 = vunpack.c.l.b16 %v1422
        %v1489 = vunpack.c.l.b16 %v1423
        %v1490 = vunpack.c.h.b16 %v1423
        %v1491 = vunpack.c.l.b16 %v1424
        %v1492 = vunpack.c.l.b16 %v1425
        %v1493 = vunpack.c.h.b16 %v1425
        %v1494 = vunpack.c.l.b16 %v1426
        %v1495 = vunpack.c.l.b16 %v1427
        %v1496 = vunpack.c.h.b16 %v1427
        %v1497 = vunpack.c.l.b16 %v1428
        %v1498 = vunpack.c.l.b16 %v1429
        %v1499 = vunpack.c.h.b16 %v1429
        %v1500 = vunpack.c.l.b16 %v1430
        %v1501 = vunpack.c.l.b16 %v1431
        %v1502 = vunpack.c.h.b16 %v1431
        %v1503 = vunpack.c.l.b16 %v1432
        %v1504 = vunpack.c.l.b16 %v1433
        %v1505 = vunpack.c.h.b16 %v1433
        %v1506 = vunpack.c.l.b16 %v1434
        %v1507 = vunpack.c.l.b16 %v1435
        %v1508 = vunpack.c.h.b16 %v1435
        %v1509 = vunpack.c.l.b16 %v1436
        %v1510 = vunpack.c.l.b16 %v1437
        %v1511 = vunpack.c.h.b16 %v1437
        %v1512 = vunpack.c.l.b16 %v1438
        %v1513 = vunpack.c.l.b16 %v1439
        %v1514 = vunpack.c.h.b16 %v1439
        %v1515 = vunpack.c.l.b16 %v1440
        %v1516 = vunpack.c.l.b16 %v1441
        %v1517 = vunpack.c.h.b16 %v1441
        %v1518 = vunpack.c.l.b16 %v1442
        %v1519 = vunpack.c.l.b16 %v1443
        %v1520 = vunpack.c.h.b16 %v1443
        %v1521 = vunpack.c.l.b16 %v1444
        %v1522 = vunpack.c.l.b16 %v1445
        %v1523 = vunpack.c.h.b16 %v1445
        %v1524 = vunpack.c.l.b16 %v1446
        %v1525 = vunpack.c.l.b16 %v1447
        %v1526 = vunpack.c.h.b16 %v1447
        %v1527 = vunpack.c.l.b16 %v1448
        %v1528 = vunpack.c.l.b16 %v1449
        %v1529 = vunpack.c.h.b16 %v1449
        %v1530 = vunpack.c.l.b16 %v1450
        %v1531 = vpack.c.b16 %v1486, %v1483
        %v1532 = vpack.c.b16 %v1487, %v1484
        %v1533 = vpack.c.b16 %v1488, %v1485
        %v1534 = vpack.c.b16 %v1492, %v1489
        %v1535 = vpack.c.b16 %v1493, %v1490
        %v1536 = vpack.c.b16 %v1494, %v1491
        %v1537 = vpack.c.b16 %v1498, %v1495
        %v1538 = vpack.c.b16 %v1499, %v1496
        %v1539 = vpack.c.b16 %v1500, %v1497
        %v1540 = vpack.c.b16 %v1504, %v1501
        %v1541 = vpack.c.b16 %v1505, %v1502
        %v1542 = vpack.c.b16 %v1506, %v1503
        %v1543 = vpack.c.b16 %v1510, %v1507
        %v1544 = vpack.c.b16 %v1511, %v1508
        %v1545 = vpack.c.b16 %v1512, %v1509
        %v1546 = vpack.c.b16 %v1516, %v1513
        %v1547 = vpack.c.b16 %v1517, %v1514
        %v1548 = vpack.c.b16 %v1518, %v1515
        %v1549 = vpack.c.b16 %v1522, %v1519
        %v1550 = vpack.c.b16 %v1523, %v1520
        %v1551 = vpack.c.b16 %v1524, %v1521
        %v1552 = vpack.c.b16 %v1528, %v1525
        %v1553 = vpack.c.b16 %v1529, %v1526
        %v1554 = vpack.c.b16 %v1530, %v1527
        %1579 = vmatprep.subr.bf16.mxu0 %v1532
        %1580 = vmatpush1.bf16.msra.mxu0 %v1531
        %1581 = vmatprep.subr.bf16.mxu0 %v1535
        %1582 = vmatpush1.bf16.msra.mxu0 %v1534
        %1583 = vmatprep.subr.bf16.mxu0 %v1538
        %1584 = vmatpush1.bf16.msra.mxu0 %v1537
        %1585 = vmatprep.subr.bf16.mxu0 %v1541
        %1586 = vmatpush1.bf16.msra.mxu0 %v1540
        %1587 = vmatprep.subr.bf16.mxu0 %v1544
        %1588 = vmatpush1.bf16.msra.mxu0 %v1543
        %1589 = vmatprep.subr.bf16.mxu0 %v1547
        %1590 = vmatpush1.bf16.msra.mxu0 %v1546
        %1591 = vmatprep.subr.bf16.mxu0 %v1550
        %1592 = vmatpush1.bf16.msra.mxu0 %v1549
        %1593 = vmatprep.subr.bf16.mxu0 %v1553
        %1594 = vmatpush1.bf16.msra.mxu0 %v1552
        %1595 = vmatprep.subr.bf16.mxu0 0
        %1596 = vmatpush1.bf16.msra.mxu0 0
        %1597 = vmatprep.subr.bf16.mxu0 0
        %1598 = vmatpush1.bf16.msra.mxu0 0
        %1599 = vmatprep.subr.bf16.mxu0 0
        %1600 = vmatpush1.bf16.msra.mxu0 0
        %1601 = vmatprep.subr.bf16.mxu0 0
        %1602 = vmatpush1.bf16.msra.mxu0 0
        %1603 = vmatprep.subr.bf16.mxu0 0
        %1604 = vmatpush1.bf16.msra.mxu0 0
        %1605 = vmatprep.subr.bf16.mxu0 0
        %1606 = vmatpush1.bf16.msra.mxu0 0
        %1607 = vmatprep.subr.bf16.mxu0 0
        %1608 = vmatpush1.bf16.msra.mxu0 0
        %1609 = vmatprep.subr.bf16.mxu0 0
        %1610 = vmatpush1.bf16.msra.mxu0 0
        %1611 = vmatprep.mubr.bf16.mxu0 0
        %1612 = vmatmul.mubr.bf16.gmra.mrb[0].mxu0 %v909
        %v1613 = vpop.f32.mrb[0].mxu0
        %v1614 = vadd.f32 0.0, %v1613
        %v1615 = vpop.f32.mrb[0].mxu0
        %v1616 = vadd.f32 0.0, %v1615
        %v1617 = vpop.f32.mrb[0].mxu0
        %v1618 = vadd.f32 0.0, %v1617
        %v1619 = vpop.f32.mrb[0].mxu0
        %v1620 = vadd.f32 0.0, %v1619
        %1621 = vmatprep.mubr.bf16.mxu0 0
        %1622 = vmatmul.mubr.bf16.gmra.mrb[0].mxu0 %v910
        %v1623 = vpop.f32.mrb[0].mxu0
        %v1624 = vadd.f32 0.0, %v1623
        %v1625 = vpop.f32.mrb[0].mxu0
        %v1626 = vadd.f32 0.0, %v1625
        %v1627 = vpop.f32.mrb[0].mxu0
        %v1628 = vadd.f32 0.0, %v1627
        %v1629 = vpop.f32.mrb[0].mxu0
        %v1630 = vadd.f32 0.0, %v1629
        %1631 = vmatprep.mubr.bf16.mxu0 0
        %1632 = vmatmul.mubr.bf16.gmra.mrb[0].mxu0 %v911
        %v1633 = vpop.f32.mrb[0].mxu0
        %v1634 = vadd.f32 0.0, %v1633
        %v1635 = vpop.f32.mrb[0].mxu0
        %v1636 = vadd.f32 0.0, %v1635
        %v1637 = vpop.f32.mrb[0].mxu0
        %v1638 = vadd.f32 0.0, %v1637
        %v1639 = vpop.f32.mrb[0].mxu0
        %v1640 = vadd.f32 0.0, %v1639
        %1641 = vmatprep.mubr.bf16.mxu0 0
        %1642 = vmatmul.mubr.bf16.gmra.mrb[0].mxu0 %v912
        %v1643 = vpop.f32.mrb[0].mxu0
        %v1644 = vadd.f32 0.0, %v1643
        %v1645 = vpop.f32.mrb[0].mxu0
        %v1646 = vadd.f32 0.0, %v1645
        %v1647 = vpop.f32.mrb[0].mxu0
        %v1648 = vadd.f32 0.0, %v1647
        %v1649 = vpop.f32.mrb[0].mxu0
        %v1650 = vadd.f32 0.0, %v1649
        %1651 = vmatprep.mubr.bf16.mxu0 0
        %1652 = vmatmul.mubr.bf16.gmra.mrb[0].mxu0 %v913
        %v1653 = vpop.f32.mrb[0].mxu0
        %v1654 = vadd.f32 0.0, %v1653
        %v1655 = vpop.f32.mrb[0].mxu0
        %v1656 = vadd.f32 0.0, %v1655
        %v1657 = vpop.f32.mrb[0].mxu0
        %v1658 = vadd.f32 0.0, %v1657
        %v1659 = vpop.f32.mrb[0].mxu0
        %v1660 = vadd.f32 0.0, %v1659
        %1661 = vmatprep.mubr.bf16.mxu0 0
        %1662 = vmatmul.mubr.bf16.gmra.mrb[0].mxu0 %v914
        %v1663 = vpop.f32.mrb[0].mxu0
        %v1664 = vadd.f32 0.0, %v1663
        %v1665 = vpop.f32.mrb[0].mxu0
        %v1666 = vadd.f32 0.0, %v1665
        %v1667 = vpop.f32.mrb[0].mxu0
        %v1668 = vadd.f32 0.0, %v1667
        %v1669 = vpop.f32.mrb[0].mxu0
        %v1670 = vadd.f32 0.0, %v1669
        %1671 = vmatprep.mubr.bf16.mxu0 0
        %1672 = vmatmul.mubr.bf16.gmra.mrb[0].mxu0 %v915
        %v1673 = vpop.f32.mrb[0].mxu0
        %v1674 = vadd.f32 0.0, %v1673
        %v1675 = vpop.f32.mrb[0].mxu0
        %v1676 = vadd.f32 0.0, %v1675
        %v1677 = vpop.f32.mrb[0].mxu0
        %v1678 = vadd.f32 0.0, %v1677
        %v1679 = vpop.f32.mrb[0].mxu0
        %v1680 = vadd.f32 0.0, %v1679
        %1681 = vmatprep.mubr.bf16.mxu0 0
        %1682 = vmatmul.mubr.bf16.gmra.mrb[0].mxu0 %v916
        %v1683 = vpop.f32.mrb[0].mxu0
        %v1684 = vadd.f32 0.0, %v1683
        %v1685 = vpop.f32.mrb[0].mxu0
        %v1686 = vadd.f32 0.0, %v1685
        %v1687 = vpop.f32.mrb[0].mxu0
        %v1688 = vadd.f32 0.0, %v1687
        %v1689 = vpop.f32.mrb[0].mxu0
        %v1690 = vadd.f32 0.0, %v1689
        %1691 = vmatprep.mubr.bf16.mxu0 0
        %1692 = vmatmul.mubr.bf16.gmra.mrb[0].mxu0 %v917
        %v1693 = vpop.f32.mrb[0].mxu0
        %v1694 = vadd.f32 0.0, %v1693
        %v1695 = vpop.f32.mrb[0].mxu0
        %v1696 = vadd.f32 0.0, %v1695
        %v1697 = vpop.f32.mrb[0].mxu0
        %v1698 = vadd.f32 0.0, %v1697
        %v1699 = vpop.f32.mrb[0].mxu0
        %v1700 = vadd.f32 0.0, %v1699
        %1701 = vdwg.mxu0
        %1702 = vmatprep.subr.bf16.mxu0 0
        %1703 = vmatpush1.bf16.msra.mxu0 %v1533
        %1704 = vmatprep.subr.bf16.mxu0 0
        %1705 = vmatpush1.bf16.msra.mxu0 %v1536
        %1706 = vmatprep.subr.bf16.mxu0 0
        %1707 = vmatpush1.bf16.msra.mxu0 %v1539
        %1708 = vmatprep.subr.bf16.mxu0 0
        %1709 = vmatpush1.bf16.msra.mxu0 %v1542
        %1710 = vmatprep.subr.bf16.mxu0 0
        %1711 = vmatpush1.bf16.msra.mxu0 %v1545
        %1712 = vmatprep.subr.bf16.mxu0 0
        %1713 = vmatpush1.bf16.msra.mxu0 %v1548
        %1714 = vmatprep.subr.bf16.mxu0 0
        %1715 = vmatpush1.bf16.msra.mxu0 %v1551
        %1716 = vmatprep.subr.bf16.mxu0 0
        %1717 = vmatpush1.bf16.msra.mxu0 %v1554
        %1718 = vmatprep.subr.bf16.mxu0 0
        %1719 = vmatpush1.bf16.msra.mxu0 0
        %1720 = vmatprep.subr.bf16.mxu0 0
        %1721 = vmatpush1.bf16.msra.mxu0 0
        %1722 = vmatprep.subr.bf16.mxu0 0
        %1723 = vmatpush1.bf16.msra.mxu0 0
        %1724 = vmatprep.subr.bf16.mxu0 0
        %1725 = vmatpush1.bf16.msra.mxu0 0
        %1726 = vmatprep.subr.bf16.mxu0 0
        %1727 = vmatpush1.bf16.msra.mxu0 0
        %1728 = vmatprep.subr.bf16.mxu0 0
        %1729 = vmatpush1.bf16.msra.mxu0 0
        %1730 = vmatprep.subr.bf16.mxu0 0
        %1731 = vmatpush1.bf16.msra.mxu0 0
        %1732 = vmatprep.subr.bf16.mxu0 0
        %1733 = vmatpush1.bf16.msra.mxu0 0
        %1734 = vmatprep.mubr.bf16.mxu0 0
        %1735 = vmatmul.mubr.bf16.gmra.mrb[0].mxu0 %v909
        %v1736 = vpop.f32.mrb[0].mxu0
        %v1737 = vadd.f32 0.0, %v1736
        %v1738 = vpop.f32.mrb[0].mxu0
        %v1739 = vpop.f32.mrb[0].mxu0
        %v1740 = vadd.f32 0.0, %v1739
        %v1741 = vpop.f32.mrb[0].mxu0
        %1742 = vmatprep.mubr.bf16.mxu0 0
        %1743 = vmatmul.mubr.bf16.gmra.mrb[0].mxu0 %v910
        %v1744 = vpop.f32.mrb[0].mxu0
        %v1745 = vadd.f32 0.0, %v1744
        %v1746 = vpop.f32.mrb[0].mxu0
        %v1747 = vpop.f32.mrb[0].mxu0
        %v1748 = vadd.f32 0.0, %v1747
        %v1749 = vpop.f32.mrb[0].mxu0
        %1750 = vmatprep.mubr.bf16.mxu0 0
        %1751 = vmatmul.mubr.bf16.gmra.mrb[0].mxu0 %v911
        %v1752 = vpop.f32.mrb[0].mxu0
        %v1753 = vadd.f32 0.0, %v1752
        %v1754 = vpop.f32.mrb[0].mxu0
        %v1755 = vpop.f32.mrb[0].mxu0
        %v1756 = vadd.f32 0.0, %v1755
        %v1757 = vpop.f32.mrb[0].mxu0
        %1758 = vmatprep.mubr.bf16.mxu0 0
        %1759 = vmatmul.mubr.bf16.gmra.mrb[0].mxu0 %v912
        %v1760 = vpop.f32.mrb[0].mxu0
        %v1761 = vadd.f32 0.0, %v1760
        %v1762 = vpop.f32.mrb[0].mxu0
        %v1763 = vpop.f32.mrb[0].mxu0
        %v1764 = vadd.f32 0.0, %v1763
        %v1765 = vpop.f32.mrb[0].mxu0
        %1766 = vmatprep.mubr.bf16.mxu0 0
        %1767 = vmatmul.mubr.bf16.gmra.mrb[0].mxu0 %v913
        %v1768 = vpop.f32.mrb[0].mxu0
        %v1769 = vadd.f32 0.0, %v1768
        %v1770 = vpop.f32.mrb[0].mxu0
        %v1771 = vpop.f32.mrb[0].mxu0
        %v1772 = vadd.f32 0.0, %v1771
        %v1773 = vpop.f32.mrb[0].mxu0
        %1774 = vmatprep.mubr.bf16.mxu0 0
        %1775 = vmatmul.mubr.bf16.gmra.mrb[0].mxu0 %v914
        %v1776 = vpop.f32.mrb[0].mxu0
        %v1777 = vadd.f32 0.0, %v1776
        %v1778 = vpop.f32.mrb[0].mxu0
        %v1779 = vpop.f32.mrb[0].mxu0
        %v1780 = vadd.f32 0.0, %v1779
        %v1781 = vpop.f32.mrb[0].mxu0
        %1782 = vmatprep.mubr.bf16.mxu0 0
        %1783 = vmatmul.mubr.bf16.gmra.mrb[0].mxu0 %v915
        %v1784 = vpop.f32.mrb[0].mxu0
        %v1785 = vadd.f32 0.0, %v1784
        %v1786 = vpop.f32.mrb[0].mxu0
        %v1787 = vpop.f32.mrb[0].mxu0
        %v1788 = vadd.f32 0.0, %v1787
        %v1789 = vpop.f32.mrb[0].mxu0
        %1790 = vmatprep.mubr.bf16.mxu0 0
        %1791 = vmatmul.mubr.bf16.gmra.mrb[0].mxu0 %v916
        %v1792 = vpop.f32.mrb[0].mxu0
        %v1793 = vadd.f32 0.0, %v1792
        %v1794 = vpop.f32.mrb[0].mxu0
        %v1795 = vpop.f32.mrb[0].mxu0
        %v1796 = vadd.f32 0.0, %v1795
        %v1797 = vpop.f32.mrb[0].mxu0
        %1798 = vmatprep.mubr.bf16.mxu0 0
        %1799 = vmatmul.mubr.bf16.gmra.mrb[0].mxu0 %v917
        %v1800 = vpop.f32.mrb[0].mxu0
        %v1801 = vadd.f32 0.0, %v1800
        %v1802 = vpop.f32.mrb[0].mxu0
        %v1803 = vpop.f32.mrb[0].mxu0
        %v1804 = vadd.f32 0.0, %v1803
        %v1805 = vpop.f32.mrb[0].mxu0
        %1806 = vdwg.mxu0
        %v1807 = vrot.slane %v1614, 7
        %v1808 = vrot.slane %v1618, 7
        %v1809 = vrot.slane %v1624, 7
        %v1810 = vrot.slane %v1628, 7
        %v1811 = vrot.slane %v1634, 7
        %v1812 = vrot.slane %v1638, 7
        %v1813 = vrot.slane %v1644, 7
        %v1814 = vrot.slane %v1648, 7
        %v1815 = vrot.slane %v1654, 7
        %v1816 = vrot.slane %v1658, 7
        %v1817 = vrot.slane %v1664, 7
        %v1818 = vrot.slane %v1668, 7
        %v1819 = vrot.slane %v1674, 7
        %v1820 = vrot.slane %v1678, 7
        %v1821 = vrot.slane %v1684, 7
        %v1822 = vrot.slane %v1688, 7
        %v1823 = vrot.slane %v1694, 7
        %v1824 = vrot.slane %v1698, 7
        %v1825 = vsel %vm1363, %v1823, %v1824
        %v1826 = vsel %vm1363, %v1822, %v1823
        %v1827 = vsel %vm1363, %v1821, %v1822
        %v1828 = vsel %vm1363, %v1820, %v1821
        %v1829 = vsel %vm1363, %v1819, %v1820
        %v1830 = vsel %vm1363, %v1818, %v1819
        %v1831 = vsel %vm1363, %v1817, %v1818
        %v1832 = vsel %vm1363, %v1816, %v1817
        %v1833 = vsel %vm1363, %v1815, %v1816
        %v1834 = vsel %vm1363, %v1814, %v1815
        %v1835 = vsel %vm1363, %v1813, %v1814
        %v1836 = vsel %vm1363, %v1812, %v1813
        %v1837 = vsel %vm1363, %v1811, %v1812
        %v1838 = vsel %vm1363, %v1810, %v1811
        %v1839 = vsel %vm1363, %v1809, %v1810
        %v1840 = vsel %vm1363, %v1808, %v1809
        %v1841 = vsel %vm1363, %v1807, %v1808
        %v1842 = vsel %vm1363, %v1824, %v1807
        %v1843 = vadd.f32 %v1400, %v1842
        %v1844 = vadd.f32 %v1401, %v1841
        %v1845 = vadd.f32 %v1402, %v1840
        %v1846 = vadd.f32 %v1403, %v1839
        %v1847 = vadd.f32 %v1404, %v1838
        %v1848 = vadd.f32 %v1405, %v1837
        %v1849 = vadd.f32 %v1406, %v1836
        %v1850 = vadd.f32 %v1407, %v1835
        %v1851 = vadd.f32 %v1408, %v1834
        %v1852 = vadd.f32 %v1409, %v1833
        %v1853 = vadd.f32 %v1410, %v1832
        %v1854 = vadd.f32 %v1411, %v1831
        %v1855 = vadd.f32 %v1412, %v1830
        %v1856 = vadd.f32 %v1413, %v1829
        %v1857 = vadd.f32 %v1414, %v1828
        %v1858 = vadd.f32 %v1415, %v1827
        %v1859 = vadd.f32 %v1416, %v1826
        %v1860 = vadd.f32 %v1417, %v1825
        %v1861 = vadd.f32 %v1843, %v1616
        %v1862 = vadd.f32 %v1844, %v1620
        %v1863 = vadd.f32 %v1845, %v1626
        %v1864 = vadd.f32 %v1846, %v1630
        %v1865 = vadd.f32 %v1847, %v1636
        %v1866 = vadd.f32 %v1848, %v1640
        %v1867 = vadd.f32 %v1849, %v1646
        %v1868 = vadd.f32 %v1850, %v1650
        %v1869 = vadd.f32 %v1851, %v1656
        %v1870 = vadd.f32 %v1852, %v1660
        %v1871 = vadd.f32 %v1853, %v1666
        %v1872 = vadd.f32 %v1854, %v1670
        %v1873 = vadd.f32 %v1855, %v1676
        %v1874 = vadd.f32 %v1856, %v1680
        %v1875 = vadd.f32 %v1857, %v1686
        %v1876 = vadd.f32 %v1858, %v1690
        %v1877 = vadd.f32 %v1859, %v1696
        %v1878 = vadd.f32 %v1860, %v1700
        %v1879 = vrot.slane %v1737, 1
        %v1880 = vrot.slane %v1740, 1
        %v1881 = vrot.slane %v1745, 1
        %v1882 = vrot.slane %v1748, 1
        %v1883 = vrot.slane %v1753, 1
        %v1884 = vrot.slane %v1756, 1
        %v1885 = vrot.slane %v1761, 1
        %v1886 = vrot.slane %v1764, 1
        %v1887 = vrot.slane %v1769, 1
        %v1888 = vrot.slane %v1772, 1
        %v1889 = vrot.slane %v1777, 1
        %v1890 = vrot.slane %v1780, 1
        %v1891 = vrot.slane %v1785, 1
        %v1892 = vrot.slane %v1788, 1
        %v1893 = vrot.slane %v1793, 1
        %v1894 = vrot.slane %v1796, 1
        %v1895 = vrot.slane %v1801, 1
        %v1896 = vrot.slane %v1804, 1
        %vm1897 = vcmp.lt.s32.totalorder %v1325, 7
        %v1898 = vsel %vm1897, %v1895, %v1896
        %v1899 = vsel %vm1897, %v1894, %v1895
        %v1900 = vsel %vm1897, %v1893, %v1894
        %v1901 = vsel %vm1897, %v1892, %v1893
        %v1902 = vsel %vm1897, %v1891, %v1892
        %v1903 = vsel %vm1897, %v1890, %v1891
        %v1904 = vsel %vm1897, %v1889, %v1890
        %v1905 = vsel %vm1897, %v1888, %v1889
        %v1906 = vsel %vm1897, %v1887, %v1888
        %v1907 = vsel %vm1897, %v1886, %v1887
        %v1908 = vsel %vm1897, %v1885, %v1886
        %v1909 = vsel %vm1897, %v1884, %v1885
        %v1910 = vsel %vm1897, %v1883, %v1884
        %v1911 = vsel %vm1897, %v1882, %v1883
        %v1912 = vsel %vm1897, %v1881, %v1882
        %v1913 = vsel %vm1897, %v1880, %v1881
        %v1914 = vsel %vm1897, %v1879, %v1880
        %v1915 = vsel %vm1897, %v1896, %v1879
        %v1916 = vadd.f32 %v1861, %v1914
        %v1917 = vadd.f32 %v1862, %v1913
        %v1918 = vadd.f32 %v1863, %v1912
        %v1919 = vadd.f32 %v1864, %v1911
        %v1920 = vadd.f32 %v1865, %v1910
        %v1921 = vadd.f32 %v1866, %v1909
        %v1922 = vadd.f32 %v1867, %v1908
        %v1923 = vadd.f32 %v1868, %v1907
        %v1924 = vadd.f32 %v1869, %v1906
        %v1925 = vadd.f32 %v1870, %v1905
        %v1926 = vadd.f32 %v1871, %v1904
        %v1927 = vadd.f32 %v1872, %v1903
        %v1928 = vadd.f32 %v1873, %v1902
        %v1929 = vadd.f32 %v1874, %v1901
        %v1930 = vadd.f32 %v1875, %v1900
        %v1931 = vadd.f32 %v1876, %v1899
        %v1932 = vadd.f32 %v1877, %v1898
        %v1933 = vadd.f32 %v1878, %v1915
        %s1934 = scalar_lea.vmem %s382, 384 [#allocation7]
        %v1935 = vld [vmem:[%s1934] sm:$0xff]
        %v1936 = vld [vmem:[%s1934 + $0x8] sm:$0xf]
        %v1937 = vld [vmem:[%s1934 + $0xc] sm:$0xff]
        %v1938 = vld [vmem:[%s1934 + $0x14] sm:$0xf]
        %v1939 = vld [vmem:[%s1934 + $0x18] sm:$0xff]
        %v1940 = vld [vmem:[%s1934 + $0x20] sm:$0xf]
        %v1941 = vld [vmem:[%s1934 + $0x24] sm:$0xff]
        %v1942 = vld [vmem:[%s1934 + $0x2c] sm:$0xf]
        %v1943 = vld [vmem:[%s1934 + $0x30] sm:$0xff]
        %v1944 = vld [vmem:[%s1934 + $0x38] sm:$0xf]
        %v1945 = vld [vmem:[%s1934 + $0x3c] sm:$0xff]
        %v1946 = vld [vmem:[%s1934 + $0x44] sm:$0xf]
        %v1947 = vld [vmem:[%s1934 + $0x48] sm:$0xff]
        %v1948 = vld [vmem:[%s1934 + $0x50] sm:$0xf]
        %v1949 = vld [vmem:[%s1934 + $0x54] sm:$0xff]
        %v1950 = vld [vmem:[%s1934 + $0x5c] sm:$0xf]
        %v1951 = vld [vmem:[%s1934 + $0x60] sm:$0xff]
        %v1952 = vld [vmem:[%s1934 + $0x68] sm:$0xf]
        %v1953 = vld [vmem:[%s1934 + $0x6c] sm:$0xff]
        %v1954 = vld [vmem:[%s1934 + $0x74] sm:$0xf]
        %v1955 = vld [vmem:[%s1934 + $0x78] sm:$0xff]
        %v1956 = vld [vmem:[%s1934 + $0x80] sm:$0xf]
        %v1957 = vld [vmem:[%s1934 + $0x84] sm:$0xff]
        %v1958 = vld [vmem:[%s1934 + $0x8c] sm:$0xf]
        %v1959 = vld [vmem:[%s1934 + $0x90] sm:$0xff]
        %v1960 = vld [vmem:[%s1934 + $0x98] sm:$0xf]
        %v1961 = vld [vmem:[%s1934 + $0x9c] sm:$0xff]
        %v1962 = vld [vmem:[%s1934 + $0xa4] sm:$0xf]
        %v1963 = vld [vmem:[%s1934 + $0xa8] sm:$0xff]
        %v1964 = vld [vmem:[%s1934 + $0xb0] sm:$0xf]
        %v1965 = vld [vmem:[%s1934 + $0xb4] sm:$0xff]
        %v1966 = vld [vmem:[%s1934 + $0xbc] sm:$0xf]
        %v1999 = vunpack.c.l.b16 %v1935
        %v2000 = vunpack.c.h.b16 %v1935
        %v2001 = vunpack.c.l.b16 %v1936
        %v2002 = vunpack.c.l.b16 %v1937
        %v2003 = vunpack.c.h.b16 %v1937
        %v2004 = vunpack.c.l.b16 %v1938
        %v2005 = vunpack.c.l.b16 %v1939
        %v2006 = vunpack.c.h.b16 %v1939
        %v2007 = vunpack.c.l.b16 %v1940
        %v2008 = vunpack.c.l.b16 %v1941
        %v2009 = vunpack.c.h.b16 %v1941
        %v2010 = vunpack.c.l.b16 %v1942
        %v2011 = vunpack.c.l.b16 %v1943
        %v2012 = vunpack.c.h.b16 %v1943
        %v2013 = vunpack.c.l.b16 %v1944
        %v2014 = vunpack.c.l.b16 %v1945
        %v2015 = vunpack.c.h.b16 %v1945
        %v2016 = vunpack.c.l.b16 %v1946
        %v2017 = vunpack.c.l.b16 %v1947
        %v2018 = vunpack.c.h.b16 %v1947
        %v2019 = vunpack.c.l.b16 %v1948
        %v2020 = vunpack.c.l.b16 %v1949
        %v2021 = vunpack.c.h.b16 %v1949
        %v2022 = vunpack.c.l.b16 %v1950
        %v2023 = vunpack.c.l.b16 %v1951
        %v2024 = vunpack.c.h.b16 %v1951
        %v2025 = vunpack.c.l.b16 %v1952
        %v2026 = vunpack.c.l.b16 %v1953
        %v2027 = vunpack.c.h.b16 %v1953
        %v2028 = vunpack.c.l.b16 %v1954
        %v2029 = vunpack.c.l.b16 %v1955
        %v2030 = vunpack.c.h.b16 %v1955
        %v2031 = vunpack.c.l.b16 %v1956
        %v2032 = vunpack.c.l.b16 %v1957
        %v2033 = vunpack.c.h.b16 %v1957
        %v2034 = vunpack.c.l.b16 %v1958
        %v2035 = vunpack.c.l.b16 %v1959
        %v2036 = vunpack.c.h.b16 %v1959
        %v2037 = vunpack.c.l.b16 %v1960
        %v2038 = vunpack.c.l.b16 %v1961
        %v2039 = vunpack.c.h.b16 %v1961
        %v2040 = vunpack.c.l.b16 %v1962
        %v2041 = vunpack.c.l.b16 %v1963
        %v2042 = vunpack.c.h.b16 %v1963
        %v2043 = vunpack.c.l.b16 %v1964
        %v2044 = vunpack.c.l.b16 %v1965
        %v2045 = vunpack.c.h.b16 %v1965
        %v2046 = vunpack.c.l.b16 %v1966
        %v2047 = vpack.c.b16 %v2002, %v1999
        %v2048 = vpack.c.b16 %v2003, %v2000
        %v2049 = vpack.c.b16 %v2004, %v2001
        %v2050 = vpack.c.b16 %v2008, %v2005
        %v2051 = vpack.c.b16 %v2009, %v2006
        %v2052 = vpack.c.b16 %v2010, %v2007
        %v2053 = vpack.c.b16 %v2014, %v2011
        %v2054 = vpack.c.b16 %v2015, %v2012
        %v2055 = vpack.c.b16 %v2016, %v2013
        %v2056 = vpack.c.b16 %v2020, %v2017
        %v2057 = vpack.c.b16 %v2021, %v2018
        %v2058 = vpack.c.b16 %v2022, %v2019
        %v2059 = vpack.c.b16 %v2026, %v2023
        %v2060 = vpack.c.b16 %v2027, %v2024
        %v2061 = vpack.c.b16 %v2028, %v2025
        %v2062 = vpack.c.b16 %v2032, %v2029
        %v2063 = vpack.c.b16 %v2033, %v2030
        %v2064 = vpack.c.b16 %v2034, %v2031
        %v2065 = vpack.c.b16 %v2038, %v2035
        %v2066 = vpack.c.b16 %v2039, %v2036
        %v2067 = vpack.c.b16 %v2040, %v2037
        %v2068 = vpack.c.b16 %v2044, %v2041
        %v2069 = vpack.c.b16 %v2045, %v2042
        %v2070 = vpack.c.b16 %v2046, %v2043
        %2095 = vmatprep.subr.bf16.mxu0 %v2048
        %2096 = vmatpush1.bf16.msra.mxu0 %v2047
        %2097 = vmatprep.subr.bf16.mxu0 %v2051
        %2098 = vmatpush1.bf16.msra.mxu0 %v2050
        %2099 = vmatprep.subr.bf16.mxu0 %v2054
        %2100 = vmatpush1.bf16.msra.mxu0 %v2053
        %2101 = vmatprep.subr.bf16.mxu0 %v2057
        %2102 = vmatpush1.bf16.msra.mxu0 %v2056
        %2103 = vmatprep.subr.bf16.mxu0 %v2060
        %2104 = vmatpush1.bf16.msra.mxu0 %v2059
        %2105 = vmatprep.subr.bf16.mxu0 %v2063
        %2106 = vmatpush1.bf16.msra.mxu0 %v2062
        %2107 = vmatprep.subr.bf16.mxu0 %v2066
        %2108 = vmatpush1.bf16.msra.mxu0 %v2065
        %2109 = vmatprep.subr.bf16.mxu0 %v2069
        %2110 = vmatpush1.bf16.msra.mxu0 %v2068
        %2111 = vmatprep.subr.bf16.mxu0 0
        %2112 = vmatpush1.bf16.msra.mxu0 0
        %2113 = vmatprep.subr.bf16.mxu0 0
        %2114 = vmatpush1.bf16.msra.mxu0 0
        %2115 = vmatprep.subr.bf16.mxu0 0
        %2116 = vmatpush1.bf16.msra.mxu0 0
        %2117 = vmatprep.subr.bf16.mxu0 0
        %2118 = vmatpush1.bf16.msra.mxu0 0
        %2119 = vmatprep.subr.bf16.mxu0 0
        %2120 = vmatpush1.bf16.msra.mxu0 0
        %2121 = vmatprep.subr.bf16.mxu0 0
        %2122 = vmatpush1.bf16.msra.mxu0 0
        %2123 = vmatprep.subr.bf16.mxu0 0
        %2124 = vmatpush1.bf16.msra.mxu0 0
        %2125 = vmatprep.subr.bf16.mxu0 0
        %2126 = vmatpush1.bf16.msra.mxu0 0
        %2127 = vmatprep.mubr.bf16.mxu0 0
        %2128 = vmatmul.mubr.bf16.gmra.mrb[0].mxu0 %v909
        %v2129 = vpop.f32.mrb[0].mxu0
        %v2130 = vadd.f32 0.0, %v2129
        %v2131 = vpop.f32.mrb[0].mxu0
        %v2132 = vadd.f32 0.0, %v2131
        %v2133 = vpop.f32.mrb[0].mxu0
        %v2134 = vadd.f32 0.0, %v2133
        %v2135 = vpop.f32.mrb[0].mxu0
        %v2136 = vadd.f32 0.0, %v2135
        %2137 = vmatprep.mubr.bf16.mxu0 0
        %2138 = vmatmul.mubr.bf16.gmra.mrb[0].mxu0 %v910
        %v2139 = vpop.f32.mrb[0].mxu0
        %v2140 = vadd.f32 0.0, %v2139
        %v2141 = vpop.f32.mrb[0].mxu0
        %v2142 = vadd.f32 0.0, %v2141
        %v2143 = vpop.f32.mrb[0].mxu0
        %v2144 = vadd.f32 0.0, %v2143
        %v2145 = vpop.f32.mrb[0].mxu0
        %v2146 = vadd.f32 0.0, %v2145
        %2147 = vmatprep.mubr.bf16.mxu0 0
        %2148 = vmatmul.mubr.bf16.gmra.mrb[0].mxu0 %v911
        %v2149 = vpop.f32.mrb[0].mxu0
        %v2150 = vadd.f32 0.0, %v2149
        %v2151 = vpop.f32.mrb[0].mxu0
        %v2152 = vadd.f32 0.0, %v2151
        %v2153 = vpop.f32.mrb[0].mxu0
        %v2154 = vadd.f32 0.0, %v2153
        %v2155 = vpop.f32.mrb[0].mxu0
        %v2156 = vadd.f32 0.0, %v2155
        %2157 = vmatprep.mubr.bf16.mxu0 0
        %2158 = vmatmul.mubr.bf16.gmra.mrb[0].mxu0 %v912
        %v2159 = vpop.f32.mrb[0].mxu0
        %v2160 = vadd.f32 0.0, %v2159
        %v2161 = vpop.f32.mrb[0].mxu0
        %v2162 = vadd.f32 0.0, %v2161
        %v2163 = vpop.f32.mrb[0].mxu0
        %v2164 = vadd.f32 0.0, %v2163
        %v2165 = vpop.f32.mrb[0].mxu0
        %v2166 = vadd.f32 0.0, %v2165
        %2167 = vmatprep.mubr.bf16.mxu0 0
        %2168 = vmatmul.mubr.bf16.gmra.mrb[0].mxu0 %v913
        %v2169 = vpop.f32.mrb[0].mxu0
        %v2170 = vadd.f32 0.0, %v2169
        %v2171 = vpop.f32.mrb[0].mxu0
        %v2172 = vadd.f32 0.0, %v2171
        %v2173 = vpop.f32.mrb[0].mxu0
        %v2174 = vadd.f32 0.0, %v2173
        %v2175 = vpop.f32.mrb[0].mxu0
        %v2176 = vadd.f32 0.0, %v2175
        %2177 = vmatprep.mubr.bf16.mxu0 0
        %2178 = vmatmul.mubr.bf16.gmra.mrb[0].mxu0 %v914
        %v2179 = vpop.f32.mrb[0].mxu0
        %v2180 = vadd.f32 0.0, %v2179
        %v2181 = vpop.f32.mrb[0].mxu0
        %v2182 = vadd.f32 0.0, %v2181
        %v2183 = vpop.f32.mrb[0].mxu0
        %v2184 = vadd.f32 0.0, %v2183
        %v2185 = vpop.f32.mrb[0].mxu0
        %v2186 = vadd.f32 0.0, %v2185
        %2187 = vmatprep.mubr.bf16.mxu0 0
        %2188 = vmatmul.mubr.bf16.gmra.mrb[0].mxu0 %v915
        %v2189 = vpop.f32.mrb[0].mxu0
        %v2190 = vadd.f32 0.0, %v2189
        %v2191 = vpop.f32.mrb[0].mxu0
        %v2192 = vadd.f32 0.0, %v2191
        %v2193 = vpop.f32.mrb[0].mxu0
        %v2194 = vadd.f32 0.0, %v2193
        %v2195 = vpop.f32.mrb[0].mxu0
        %v2196 = vadd.f32 0.0, %v2195
        %2197 = vmatprep.mubr.bf16.mxu0 0
        %2198 = vmatmul.mubr.bf16.gmra.mrb[0].mxu0 %v916
        %v2199 = vpop.f32.mrb[0].mxu0
        %v2200 = vadd.f32 0.0, %v2199
        %v2201 = vpop.f32.mrb[0].mxu0
        %v2202 = vadd.f32 0.0, %v2201
        %v2203 = vpop.f32.mrb[0].mxu0
        %v2204 = vadd.f32 0.0, %v2203
        %v2205 = vpop.f32.mrb[0].mxu0
        %v2206 = vadd.f32 0.0, %v2205
        %2207 = vmatprep.mubr.bf16.mxu0 0
        %2208 = vmatmul.mubr.bf16.gmra.mrb[0].mxu0 %v917
        %v2209 = vpop.f32.mrb[0].mxu0
        %v2210 = vadd.f32 0.0, %v2209
        %v2211 = vpop.f32.mrb[0].mxu0
        %v2212 = vadd.f32 0.0, %v2211
        %v2213 = vpop.f32.mrb[0].mxu0
        %v2214 = vadd.f32 0.0, %v2213
        %v2215 = vpop.f32.mrb[0].mxu0
        %v2216 = vadd.f32 0.0, %v2215
        %2217 = vdwg.mxu0
        %2218 = vmatprep.subr.bf16.mxu0 0
        %2219 = vmatpush1.bf16.msra.mxu0 %v2049
        %2220 = vmatprep.subr.bf16.mxu0 0
        %2221 = vmatpush1.bf16.msra.mxu0 %v2052
        %2222 = vmatprep.subr.bf16.mxu0 0
        %2223 = vmatpush1.bf16.msra.mxu0 %v2055
        %2224 = vmatprep.subr.bf16.mxu0 0
        %2225 = vmatpush1.bf16.msra.mxu0 %v2058
        %2226 = vmatprep.subr.bf16.mxu0 0
        %2227 = vmatpush1.bf16.msra.mxu0 %v2061
        %2228 = vmatprep.subr.bf16.mxu0 0
        %2229 = vmatpush1.bf16.msra.mxu0 %v2064
        %2230 = vmatprep.subr.bf16.mxu0 0
        %2231 = vmatpush1.bf16.msra.mxu0 %v2067
        %2232 = vmatprep.subr.bf16.mxu0 0
        %2233 = vmatpush1.bf16.msra.mxu0 %v2070
        %2234 = vmatprep.subr.bf16.mxu0 0
        %2235 = vmatpush1.bf16.msra.mxu0 0
        %2236 = vmatprep.subr.bf16.mxu0 0
        %2237 = vmatpush1.bf16.msra.mxu0 0
        %2238 = vmatprep.subr.bf16.mxu0 0
        %2239 = vmatpush1.bf16.msra.mxu0 0
        %2240 = vmatprep.subr.bf16.mxu0 0
        %2241 = vmatpush1.bf16.msra.mxu0 0
        %2242 = vmatprep.subr.bf16.mxu0 0
        %2243 = vmatpush1.bf16.msra.mxu0 0
        %2244 = vmatprep.subr.bf16.mxu0 0
        %2245 = vmatpush1.bf16.msra.mxu0 0
        %2246 = vmatprep.subr.bf16.mxu0 0
        %2247 = vmatpush1.bf16.msra.mxu0 0
        %2248 = vmatprep.subr.bf16.mxu0 0
        %2249 = vmatpush1.bf16.msra.mxu0 0
        %2250 = vmatprep.mubr.bf16.mxu0 0
        %2251 = vmatmul.mubr.bf16.gmra.mrb[0].mxu0 %v909
        %v2252 = vpop.f32.mrb[0].mxu0
        %v2253 = vadd.f32 0.0, %v2252
        %v2254 = vpop.f32.mrb[0].mxu0
        %v2255 = vpop.f32.mrb[0].mxu0
        %v2256 = vadd.f32 0.0, %v2255
        %v2257 = vpop.f32.mrb[0].mxu0
        %2258 = vmatprep.mubr.bf16.mxu0 0
        %2259 = vmatmul.mubr.bf16.gmra.mrb[0].mxu0 %v910
        %v2260 = vpop.f32.mrb[0].mxu0
        %v2261 = vadd.f32 0.0, %v2260
        %v2262 = vpop.f32.mrb[0].mxu0
        %v2263 = vpop.f32.mrb[0].mxu0
        %v2264 = vadd.f32 0.0, %v2263
        %v2265 = vpop.f32.mrb[0].mxu0
        %2266 = vmatprep.mubr.bf16.mxu0 0
        %2267 = vmatmul.mubr.bf16.gmra.mrb[0].mxu0 %v911
        %v2268 = vpop.f32.mrb[0].mxu0
        %v2269 = vadd.f32 0.0, %v2268
        %v2270 = vpop.f32.mrb[0].mxu0
        %v2271 = vpop.f32.mrb[0].mxu0
        %v2272 = vadd.f32 0.0, %v2271
        %v2273 = vpop.f32.mrb[0].mxu0
        %2274 = vmatprep.mubr.bf16.mxu0 0
        %2275 = vmatmul.mubr.bf16.gmra.mrb[0].mxu0 %v912
        %v2276 = vpop.f32.mrb[0].mxu0
        %v2277 = vadd.f32 0.0, %v2276
        %v2278 = vpop.f32.mrb[0].mxu0
        %v2279 = vpop.f32.mrb[0].mxu0
        %v2280 = vadd.f32 0.0, %v2279
        %v2281 = vpop.f32.mrb[0].mxu0
        %2282 = vmatprep.mubr.bf16.mxu0 0
        %2283 = vmatmul.mubr.bf16.gmra.mrb[0].mxu0 %v913
        %v2284 = vpop.f32.mrb[0].mxu0
        %v2285 = vadd.f32 0.0, %v2284
        %v2286 = vpop.f32.mrb[0].mxu0
        %v2287 = vpop.f32.mrb[0].mxu0
        %v2288 = vadd.f32 0.0, %v2287
        %v2289 = vpop.f32.mrb[0].mxu0
        %2290 = vmatprep.mubr.bf16.mxu0 0
        %2291 = vmatmul.mubr.bf16.gmra.mrb[0].mxu0 %v914
        %v2292 = vpop.f32.mrb[0].mxu0
        %v2293 = vadd.f32 0.0, %v2292
        %v2294 = vpop.f32.mrb[0].mxu0
        %v2295 = vpop.f32.mrb[0].mxu0
        %v2296 = vadd.f32 0.0, %v2295
        %v2297 = vpop.f32.mrb[0].mxu0
        %2298 = vmatprep.mubr.bf16.mxu0 0
        %2299 = vmatmul.mubr.bf16.gmra.mrb[0].mxu0 %v915
        %v2300 = vpop.f32.mrb[0].mxu0
        %v2301 = vadd.f32 0.0, %v2300
        %v2302 = vpop.f32.mrb[0].mxu0
        %v2303 = vpop.f32.mrb[0].mxu0
        %v2304 = vadd.f32 0.0, %v2303
        %v2305 = vpop.f32.mrb[0].mxu0
        %2306 = vmatprep.mubr.bf16.mxu0 0
        %2307 = vmatmul.mubr.bf16.gmra.mrb[0].mxu0 %v916
        %v2308 = vpop.f32.mrb[0].mxu0
        %v2309 = vadd.f32 0.0, %v2308
        %v2310 = vpop.f32.mrb[0].mxu0
        %v2311 = vpop.f32.mrb[0].mxu0
        %v2312 = vadd.f32 0.0, %v2311
        %v2313 = vpop.f32.mrb[0].mxu0
        %2314 = vmatprep.mubr.bf16.mxu0 0
        %2315 = vmatmul.mubr.bf16.gmra.mrb[0].mxu0 %v917
        %v2316 = vpop.f32.mrb[0].mxu0
        %v2317 = vadd.f32 0.0, %v2316
        %v2318 = vpop.f32.mrb[0].mxu0
        %v2319 = vpop.f32.mrb[0].mxu0
        %v2320 = vadd.f32 0.0, %v2319
        %v2321 = vpop.f32.mrb[0].mxu0
        %2322 = vdwg.mxu0
        %v2323 = vadd.f32 %v1916, %v2134
        %v2324 = vadd.f32 %v1917, %v2140
        %v2325 = vadd.f32 %v1918, %v2144
        %v2326 = vadd.f32 %v1919, %v2150
        %v2327 = vadd.f32 %v1920, %v2154
        %v2328 = vadd.f32 %v1921, %v2160
        %v2329 = vadd.f32 %v1922, %v2164
        %v2330 = vadd.f32 %v1923, %v2170
        %v2331 = vadd.f32 %v1924, %v2174
        %v2332 = vadd.f32 %v1925, %v2180
        %v2333 = vadd.f32 %v1926, %v2184
        %v2334 = vadd.f32 %v1927, %v2190
        %v2335 = vadd.f32 %v1928, %v2194
        %v2336 = vadd.f32 %v1929, %v2200
        %v2337 = vadd.f32 %v1930, %v2204
        %v2338 = vadd.f32 %v1931, %v2210
        %v2339 = vadd.f32 %v1932, %v2214
        %v2340 = vadd.f32 %v1933, %v2130
        %v2341 = vrot.slane %v2132, 1
        %v2342 = vrot.slane %v2136, 1
        %v2343 = vrot.slane %v2142, 1
        %v2344 = vrot.slane %v2146, 1
        %v2345 = vrot.slane %v2152, 1
        %v2346 = vrot.slane %v2156, 1
        %v2347 = vrot.slane %v2162, 1
        %v2348 = vrot.slane %v2166, 1
        %v2349 = vrot.slane %v2172, 1
        %v2350 = vrot.slane %v2176, 1
        %v2351 = vrot.slane %v2182, 1
        %v2352 = vrot.slane %v2186, 1
        %v2353 = vrot.slane %v2192, 1
        %v2354 = vrot.slane %v2196, 1
        %v2355 = vrot.slane %v2202, 1
        %v2356 = vrot.slane %v2206, 1
        %v2357 = vrot.slane %v2212, 1
        %v2358 = vrot.slane %v2216, 1
        %v2359 = vsel %vm1897, %v2357, %v2358
        %v2360 = vsel %vm1897, %v2356, %v2357
        %v2361 = vsel %vm1897, %v2355, %v2356
        %v2362 = vsel %vm1897, %v2354, %v2355
        %v2363 = vsel %vm1897, %v2353, %v2354
        %v2364 = vsel %vm1897, %v2352, %v2353
        %v2365 = vsel %vm1897, %v2351, %v2352
        %v2366 = vsel %vm1897, %v2350, %v2351
        %v2367 = vsel %vm1897, %v2349, %v2350
        %v2368 = vsel %vm1897, %v2348, %v2349
        %v2369 = vsel %vm1897, %v2347, %v2348
        %v2370 = vsel %vm1897, %v2346, %v2347
        %v2371 = vsel %vm1897, %v2345, %v2346
        %v2372 = vsel %vm1897, %v2344, %v2345
        %v2373 = vsel %vm1897, %v2343, %v2344
        %v2374 = vsel %vm1897, %v2342, %v2343
        %v2375 = vsel %vm1897, %v2341, %v2342
        %v2376 = vsel %vm1897, %v2358, %v2341
        %v2377 = vadd.f32 %v2323, %v2374
        %v2378 = vadd.f32 %v2324, %v2373
        %v2379 = vadd.f32 %v2325, %v2372
        %v2380 = vadd.f32 %v2326, %v2371
        %v2381 = vadd.f32 %v2327, %v2370
        %v2382 = vadd.f32 %v2328, %v2369
        %v2383 = vadd.f32 %v2329, %v2368
        %v2384 = vadd.f32 %v2330, %v2367
        %v2385 = vadd.f32 %v2331, %v2366
        %v2386 = vadd.f32 %v2332, %v2365
        %v2387 = vadd.f32 %v2333, %v2364
        %v2388 = vadd.f32 %v2334, %v2363
        %v2389 = vadd.f32 %v2335, %v2362
        %v2390 = vadd.f32 %v2336, %v2361
        %v2391 = vadd.f32 %v2337, %v2360
        %v2392 = vadd.f32 %v2338, %v2359
        %v2393 = vadd.f32 %v2339, %v2376
        %v2394 = vadd.f32 %v2340, %v2375
        %v2395 = vrot.slane %v2253, 2
        %v2396 = vrot.slane %v2256, 2
        %v2397 = vrot.slane %v2261, 2
        %v2398 = vrot.slane %v2264, 2
        %v2399 = vrot.slane %v2269, 2
        %v2400 = vrot.slane %v2272, 2
        %v2401 = vrot.slane %v2277, 2
        %v2402 = vrot.slane %v2280, 2
        %v2403 = vrot.slane %v2285, 2
        %v2404 = vrot.slane %v2288, 2
        %v2405 = vrot.slane %v2293, 2
        %v2406 = vrot.slane %v2296, 2
        %v2407 = vrot.slane %v2301, 2
        %v2408 = vrot.slane %v2304, 2
        %v2409 = vrot.slane %v2309, 2
        %v2410 = vrot.slane %v2312, 2
        %v2411 = vrot.slane %v2317, 2
        %v2412 = vrot.slane %v2320, 2
        %vm2413 = vcmp.lt.s32.totalorder %v1325, 6
        %v2414 = vsel %vm2413, %v2411, %v2412
        %v2415 = vsel %vm2413, %v2410, %v2411
        %v2416 = vsel %vm2413, %v2409, %v2410
        %v2417 = vsel %vm2413, %v2408, %v2409
        %v2418 = vsel %vm2413, %v2407, %v2408
        %v2419 = vsel %vm2413, %v2406, %v2407
        %v2420 = vsel %vm2413, %v2405, %v2406
        %v2421 = vsel %vm2413, %v2404, %v2405
        %v2422 = vsel %vm2413, %v2403, %v2404
        %v2423 = vsel %vm2413, %v2402, %v2403
        %v2424 = vsel %vm2413, %v2401, %v2402
        %v2425 = vsel %vm2413, %v2400, %v2401
        %v2426 = vsel %vm2413, %v2399, %v2400
        %v2427 = vsel %vm2413, %v2398, %v2399
        %v2428 = vsel %vm2413, %v2397, %v2398
        %v2429 = vsel %vm2413, %v2396, %v2397
        %v2430 = vsel %vm2413, %v2395, %v2396
        %v2431 = vsel %vm2413, %v2412, %v2395
        %v2432 = vadd.f32 %v2377, %v2429
        %v2433 = vadd.f32 %v2378, %v2428
        %v2434 = vadd.f32 %v2379, %v2427
        %v2435 = vadd.f32 %v2380, %v2426
        %v2436 = vadd.f32 %v2381, %v2425
        %v2437 = vadd.f32 %v2382, %v2424
        %v2438 = vadd.f32 %v2383, %v2423
        %v2439 = vadd.f32 %v2384, %v2422
        %v2440 = vadd.f32 %v2385, %v2421
        %v2441 = vadd.f32 %v2386, %v2420
        %v2442 = vadd.f32 %v2387, %v2419
        %v2443 = vadd.f32 %v2388, %v2418
        %v2444 = vadd.f32 %v2389, %v2417
        %v2445 = vadd.f32 %v2390, %v2416
        %v2446 = vadd.f32 %v2391, %v2415
        %v2447 = vadd.f32 %v2392, %v2414
        %v2448 = vadd.f32 %v2393, %v2431
        %v2449 = vadd.f32 %v2394, %v2430
        %v2450 = vld [vmem:[%s391] sm:$0x1]
        %v2452 = vlaneseq
        %v2453 = vshrl.u32 %v2452, 7
        %v2454 = vsub.s32 0, %v2453
        %v2455 = vrot.slane %v2450, %v2454
        %v2457 = vmul.f32 %v2432, %v2455
        %v2458 = vmul.f32 %v2433, %v2455
        %v2459 = vmul.f32 %v2434, %v2455
        %v2460 = vmul.f32 %v2435, %v2455
        %v2461 = vmul.f32 %v2436, %v2455
        %v2462 = vmul.f32 %v2437, %v2455
        %v2463 = vmul.f32 %v2438, %v2455
        %v2464 = vmul.f32 %v2439, %v2455
        %v2465 = vmul.f32 %v2440, %v2455
        %v2466 = vmul.f32 %v2441, %v2455
        %v2467 = vmul.f32 %v2442, %v2455
        %v2468 = vmul.f32 %v2443, %v2455
        %v2469 = vmul.f32 %v2444, %v2455
        %v2470 = vmul.f32 %v2445, %v2455
        %v2471 = vmul.f32 %v2446, %v2455
        %v2472 = vmul.f32 %v2447, %v2455
        %v2473 = vmul.f32 %v2448, %v2455
        %v2474 = vmul.f32 %v2449, %v2455
        %v2475 = vld [vmem:[%s400] sm:$0x1]
        %v2477 = vlaneseq
        %v2478 = vshrl.u32 %v2477, 7
        %v2479 = vsub.s32 0, %v2478
        %v2480 = vrot.slane %v2475, %v2479
        %v2482 = vadd.f32 %v2457, %v2480
        %v2483 = vadd.f32 %v2458, %v2480
        %v2484 = vadd.f32 %v2459, %v2480
        %v2485 = vadd.f32 %v2460, %v2480
        %v2486 = vadd.f32 %v2461, %v2480
        %v2487 = vadd.f32 %v2462, %v2480
        %v2488 = vadd.f32 %v2463, %v2480
        %v2489 = vadd.f32 %v2464, %v2480
        %v2490 = vadd.f32 %v2465, %v2480
        %v2491 = vadd.f32 %v2466, %v2480
        %v2492 = vadd.f32 %v2467, %v2480
        %v2493 = vadd.f32 %v2468, %v2480
        %v2494 = vadd.f32 %v2469, %v2480
        %v2495 = vadd.f32 %v2470, %v2480
        %v2496 = vadd.f32 %v2471, %v2480
        %v2497 = vadd.f32 %v2472, %v2480
        %v2498 = vadd.f32 %v2473, %v2480
        %v2499 = vadd.f32 %v2474, %v2480
        %v2500 = vmax.f32 %v2482, 0.0
        %v2501 = vmax.f32 %v2483, 0.0
        %v2502 = vmax.f32 %v2484, 0.0
        %v2503 = vmax.f32 %v2485, 0.0
        %v2504 = vmax.f32 %v2486, 0.0
        %v2505 = vmax.f32 %v2487, 0.0
        %v2506 = vmax.f32 %v2488, 0.0
        %v2507 = vmax.f32 %v2489, 0.0
        %v2508 = vmax.f32 %v2490, 0.0
        %v2509 = vmax.f32 %v2491, 0.0
        %v2510 = vmax.f32 %v2492, 0.0
        %v2511 = vmax.f32 %v2493, 0.0
        %v2512 = vmax.f32 %v2494, 0.0
        %v2513 = vmax.f32 %v2495, 0.0
        %v2514 = vmax.f32 %v2496, 0.0
        %v2515 = vmax.f32 %v2497, 0.0
        %v2516 = vmax.f32 %v2498, 0.0
        %v2517 = vmax.f32 %v2499, 0.0
        %2519 = vset.pattern.permute.xlu0 0
        %2520 = vperm.xlu0 %2519, %v443
        %v2521 = vpop.permute.xlu0 %2520
        %2524 = vset.pattern.permute.xlu0 0
        %2525 = vperm.xlu0 %2524, %v444
        %v2526 = vpop.permute.xlu0 %2525
        %2529 = vset.pattern.permute.xlu0 0
        %2530 = vperm.xlu0 %2529, %v445
        %v2531 = vpop.permute.xlu0 %2530
        %2534 = vset.pattern.permute.xlu0 0
        %2535 = vperm.xlu0 %2534, %v446
        %v2536 = vpop.permute.xlu0 %2535
        %2539 = vset.pattern.permute.xlu0 0
        %2540 = vperm.xlu0 %2539, %v447
        %v2541 = vpop.permute.xlu0 %2540
        %2544 = vset.pattern.permute.xlu0 0
        %2545 = vperm.xlu0 %2544, %v448
        %v2546 = vpop.permute.xlu0 %2545
        %2549 = vset.pattern.permute.xlu0 0
        %2550 = vperm.xlu0 %2549, %v449
        %v2551 = vpop.permute.xlu0 %2550
        %2554 = vset.pattern.permute.xlu0 0
        %2555 = vperm.xlu0 %2554, %v450
        %v2556 = vpop.permute.xlu0 %2555
        %2559 = vset.pattern.permute.xlu0 0
        %2560 = vperm.xlu0 %2559, %v451
        %v2561 = vpop.permute.xlu0 %2560
        %2564 = vset.pattern.permute.xlu0 0
        %2565 = vperm.xlu0 %2564, %v452
        %v2566 = vpop.permute.xlu0 %2565
        %2569 = vset.pattern.permute.xlu0 0
        %2570 = vperm.xlu0 %2569, %v453
        %v2571 = vpop.permute.xlu0 %2570
        %2574 = vset.pattern.permute.xlu0 0
        %2575 = vperm.xlu0 %2574, %v454
        %v2576 = vpop.permute.xlu0 %2575
        %2579 = vset.pattern.permute.xlu0 0
        %2580 = vperm.xlu0 %2579, %v455
        %v2581 = vpop.permute.xlu0 %2580
        %2584 = vset.pattern.permute.xlu0 0
        %2585 = vperm.xlu0 %2584, %v456
        %v2586 = vpop.permute.xlu0 %2585
        %2589 = vset.pattern.permute.xlu0 0
        %2590 = vperm.xlu0 %2589, %v457
        %v2591 = vpop.permute.xlu0 %2590
        %2594 = vset.pattern.permute.xlu0 0
        %2595 = vperm.xlu0 %2594, %v458
        %v2596 = vpop.permute.xlu0 %2595
        %2599 = vset.pattern.permute.xlu0 0
        %2600 = vperm.xlu0 %2599, %v459
        %v2601 = vpop.permute.xlu0 %2600
        %2604 = vset.pattern.permute.xlu0 0
        %2605 = vperm.xlu0 %2604, %v460
        %v2606 = vpop.permute.xlu0 %2605
        %v2608 = vmul.f32 %v2500, %v2521
        %v2609 = vmul.f32 %v2501, %v2526
        %v2610 = vmul.f32 %v2502, %v2531
        %v2611 = vmul.f32 %v2503, %v2536
        %v2612 = vmul.f32 %v2504, %v2541
        %v2613 = vmul.f32 %v2505, %v2546
        %v2614 = vmul.f32 %v2506, %v2551
        %v2615 = vmul.f32 %v2507, %v2556
        %v2616 = vmul.f32 %v2508, %v2561
        %v2617 = vmul.f32 %v2509, %v2566
        %v2618 = vmul.f32 %v2510, %v2571
        %v2619 = vmul.f32 %v2511, %v2576
        %v2620 = vmul.f32 %v2512, %v2581
        %v2621 = vmul.f32 %v2513, %v2586
        %v2622 = vmul.f32 %v2514, %v2591
        %v2623 = vmul.f32 %v2515, %v2596
        %v2624 = vmul.f32 %v2516, %v2601
        %v2625 = vmul.f32 %v2517, %v2606
        %v2626 = vpack.c.bf16 %v2609, %v2608
        %v2627 = vpack.c.bf16 %v2611, %v2610
        %v2628 = vpack.c.bf16 %v2613, %v2612
        %v2629 = vpack.c.bf16 %v2615, %v2614
        %v2630 = vpack.c.bf16 %v2617, %v2616
        %v2631 = vpack.c.bf16 %v2619, %v2618
        %v2632 = vpack.c.bf16 %v2621, %v2620
        %v2633 = vpack.c.bf16 %v2623, %v2622
        %v2634 = vpack.c.bf16 %v2625, %v2624
        %s2635 = scalar_lea.vmem %s382, 576 [#allocation7]
        %v2636 = vld [vmem:[%s2635] sm:$0xff]
        %v2637 = vld [vmem:[%s2635 + $0x8] sm:$0xf]
        %v2638 = vld [vmem:[%s2635 + $0xc] sm:$0xff]
        %v2639 = vld [vmem:[%s2635 + $0x14] sm:$0xf]
        %v2640 = vld [vmem:[%s2635 + $0x18] sm:$0xff]
        %v2641 = vld [vmem:[%s2635 + $0x20] sm:$0xf]
        %v2642 = vld [vmem:[%s2635 + $0x24] sm:$0xff]
        %v2643 = vld [vmem:[%s2635 + $0x2c] sm:$0xf]
        %v2644 = vld [vmem:[%s2635 + $0x30] sm:$0xff]
        %v2645 = vld [vmem:[%s2635 + $0x38] sm:$0xf]
        %v2646 = vld [vmem:[%s2635 + $0x3c] sm:$0xff]
        %v2647 = vld [vmem:[%s2635 + $0x44] sm:$0xf]
        %v2648 = vld [vmem:[%s2635 + $0x48] sm:$0xff]
        %v2649 = vld [vmem:[%s2635 + $0x50] sm:$0xf]
        %v2650 = vld [vmem:[%s2635 + $0x54] sm:$0xff]
        %v2651 = vld [vmem:[%s2635 + $0x5c] sm:$0xf]
        %v2652 = vld [vmem:[%s2635 + $0x60] sm:$0xff]
        %v2653 = vld [vmem:[%s2635 + $0x68] sm:$0xf]
        %v2654 = vld [vmem:[%s2635 + $0x6c] sm:$0xff]
        %v2655 = vld [vmem:[%s2635 + $0x74] sm:$0xf]
        %v2656 = vld [vmem:[%s2635 + $0x78] sm:$0xff]
        %v2657 = vld [vmem:[%s2635 + $0x80] sm:$0xf]
        %v2658 = vld [vmem:[%s2635 + $0x84] sm:$0xff]
        %v2659 = vld [vmem:[%s2635 + $0x8c] sm:$0xf]
        %v2660 = vld [vmem:[%s2635 + $0x90] sm:$0xff]
        %v2661 = vld [vmem:[%s2635 + $0x98] sm:$0xf]
        %v2662 = vld [vmem:[%s2635 + $0x9c] sm:$0xff]
        %v2663 = vld [vmem:[%s2635 + $0xa4] sm:$0xf]
        %v2664 = vld [vmem:[%s2635 + $0xa8] sm:$0xff]
        %v2665 = vld [vmem:[%s2635 + $0xb0] sm:$0xf]
        %v2666 = vld [vmem:[%s2635 + $0xb4] sm:$0xff]
        %v2667 = vld [vmem:[%s2635 + $0xbc] sm:$0xf]
        %v2700 = vunpack.c.l.b16 %v2636
        %v2701 = vunpack.c.h.b16 %v2636
        %v2702 = vunpack.c.l.b16 %v2637
        %v2703 = vunpack.c.l.b16 %v2638
        %v2704 = vunpack.c.h.b16 %v2638
        %v2705 = vunpack.c.l.b16 %v2639
        %v2706 = vunpack.c.l.b16 %v2640
        %v2707 = vunpack.c.h.b16 %v2640
        %v2708 = vunpack.c.l.b16 %v2641
        %v2709 = vunpack.c.l.b16 %v2642
        %v2710 = vunpack.c.h.b16 %v2642
        %v2711 = vunpack.c.l.b16 %v2643
        %v2712 = vunpack.c.l.b16 %v2644
        %v2713 = vunpack.c.h.b16 %v2644
        %v2714 = vunpack.c.l.b16 %v2645
        %v2715 = vunpack.c.l.b16 %v2646
        %v2716 = vunpack.c.h.b16 %v2646
        %v2717 = vunpack.c.l.b16 %v2647
        %v2718 = vunpack.c.l.b16 %v2648
        %v2719 = vunpack.c.h.b16 %v2648
        %v2720 = vunpack.c.l.b16 %v2649
        %v2721 = vunpack.c.l.b16 %v2650
        %v2722 = vunpack.c.h.b16 %v2650
        %v2723 = vunpack.c.l.b16 %v2651
        %v2724 = vunpack.c.l.b16 %v2652
        %v2725 = vunpack.c.h.b16 %v2652
        %v2726 = vunpack.c.l.b16 %v2653
        %v2727 = vunpack.c.l.b16 %v2654
        %v2728 = vunpack.c.h.b16 %v2654
        %v2729 = vunpack.c.l.b16 %v2655
        %v2730 = vunpack.c.l.b16 %v2656
        %v2731 = vunpack.c.h.b16 %v2656
        %v2732 = vunpack.c.l.b16 %v2657
        %v2733 = vunpack.c.l.b16 %v2658
        %v2734 = vunpack.c.h.b16 %v2658
        %v2735 = vunpack.c.l.b16 %v2659
        %v2736 = vunpack.c.l.b16 %v2660
        %v2737 = vunpack.c.h.b16 %v2660
        %v2738 = vunpack.c.l.b16 %v2661
        %v2739 = vunpack.c.l.b16 %v2662
        %v2740 = vunpack.c.h.b16 %v2662
        %v2741 = vunpack.c.l.b16 %v2663
        %v2742 = vunpack.c.l.b16 %v2664
        %v2743 = vunpack.c.h.b16 %v2664
        %v2744 = vunpack.c.l.b16 %v2665
        %v2745 = vunpack.c.l.b16 %v2666
        %v2746 = vunpack.c.h.b16 %v2666
        %v2747 = vunpack.c.l.b16 %v2667
        %v2748 = vpack.c.b16 %v2703, %v2700
        %v2749 = vpack.c.b16 %v2704, %v2701
        %v2750 = vpack.c.b16 %v2705, %v2702
        %v2751 = vpack.c.b16 %v2709, %v2706
        %v2752 = vpack.c.b16 %v2710, %v2707
        %v2753 = vpack.c.b16 %v2711, %v2708
        %v2754 = vpack.c.b16 %v2715, %v2712
        %v2755 = vpack.c.b16 %v2716, %v2713
        %v2756 = vpack.c.b16 %v2717, %v2714
        %v2757 = vpack.c.b16 %v2721, %v2718
        %v2758 = vpack.c.b16 %v2722, %v2719
        %v2759 = vpack.c.b16 %v2723, %v2720
        %v2760 = vpack.c.b16 %v2727, %v2724
        %v2761 = vpack.c.b16 %v2728, %v2725
        %v2762 = vpack.c.b16 %v2729, %v2726
        %v2763 = vpack.c.b16 %v2733, %v2730
        %v2764 = vpack.c.b16 %v2734, %v2731
        %v2765 = vpack.c.b16 %v2735, %v2732
        %v2766 = vpack.c.b16 %v2739, %v2736
        %v2767 = vpack.c.b16 %v2740, %v2737
        %v2768 = vpack.c.b16 %v2741, %v2738
        %v2769 = vpack.c.b16 %v2745, %v2742
        %v2770 = vpack.c.b16 %v2746, %v2743
        %v2771 = vpack.c.b16 %v2747, %v2744
        %2796 = vmatprep.subr.bf16.mxu0 %v2749
        %2797 = vmatpush1.bf16.msra.mxu0 %v2748
        %2798 = vmatprep.subr.bf16.mxu0 %v2752
        %2799 = vmatpush1.bf16.msra.mxu0 %v2751
        %2800 = vmatprep.subr.bf16.mxu0 %v2755
        %2801 = vmatpush1.bf16.msra.mxu0 %v2754
        %2802 = vmatprep.subr.bf16.mxu0 %v2758
        %2803 = vmatpush1.bf16.msra.mxu0 %v2757
        %2804 = vmatprep.subr.bf16.mxu0 %v2761
        %2805 = vmatpush1.bf16.msra.mxu0 %v2760
        %2806 = vmatprep.subr.bf16.mxu0 %v2764
        %2807 = vmatpush1.bf16.msra.mxu0 %v2763
        %2808 = vmatprep.subr.bf16.mxu0 %v2767
        %2809 = vmatpush1.bf16.msra.mxu0 %v2766
        %2810 = vmatprep.subr.bf16.mxu0 %v2770
        %2811 = vmatpush1.bf16.msra.mxu0 %v2769
        %2812 = vmatprep.subr.bf16.mxu0 0
        %2813 = vmatpush1.bf16.msra.mxu0 0
        %2814 = vmatprep.subr.bf16.mxu0 0
        %2815 = vmatpush1.bf16.msra.mxu0 0
        %2816 = vmatprep.subr.bf16.mxu0 0
        %2817 = vmatpush1.bf16.msra.mxu0 0
        %2818 = vmatprep.subr.bf16.mxu0 0
        %2819 = vmatpush1.bf16.msra.mxu0 0
        %2820 = vmatprep.subr.bf16.mxu0 0
        %2821 = vmatpush1.bf16.msra.mxu0 0
        %2822 = vmatprep.subr.bf16.mxu0 0
        %2823 = vmatpush1.bf16.msra.mxu0 0
        %2824 = vmatprep.subr.bf16.mxu0 0
        %2825 = vmatpush1.bf16.msra.mxu0 0
        %2826 = vmatprep.subr.bf16.mxu0 0
        %2827 = vmatpush1.bf16.msra.mxu0 0
        %2828 = vmatprep.mubr.bf16.mxu0 0
        %2829 = vmatmul.mubr.bf16.gmra.mrb[0].mxu0 %v2626
        %v2830 = vpop.f32.mrb[0].mxu0
        %v2831 = vadd.f32 0.0, %v2830
        %v2832 = vpop.f32.mrb[0].mxu0
        %v2833 = vadd.f32 0.0, %v2832
        %v2834 = vpop.f32.mrb[0].mxu0
        %v2835 = vadd.f32 0.0, %v2834
        %v2836 = vpop.f32.mrb[0].mxu0
        %v2837 = vadd.f32 0.0, %v2836
        %2838 = vmatprep.mubr.bf16.mxu0 0
        %2839 = vmatmul.mubr.bf16.gmra.mrb[0].mxu0 %v2627
        %v2840 = vpop.f32.mrb[0].mxu0
        %v2841 = vadd.f32 0.0, %v2840
        %v2842 = vpop.f32.mrb[0].mxu0
        %v2843 = vadd.f32 0.0, %v2842
        %v2844 = vpop.f32.mrb[0].mxu0
        %v2845 = vadd.f32 0.0, %v2844
        %v2846 = vpop.f32.mrb[0].mxu0
        %v2847 = vadd.f32 0.0, %v2846
        %2848 = vmatprep.mubr.bf16.mxu0 0
        %2849 = vmatmul.mubr.bf16.gmra.mrb[0].mxu0 %v2628
        %v2850 = vpop.f32.mrb[0].mxu0
        %v2851 = vadd.f32 0.0, %v2850
        %v2852 = vpop.f32.mrb[0].mxu0
        %v2853 = vadd.f32 0.0, %v2852
        %v2854 = vpop.f32.mrb[0].mxu0
        %v2855 = vadd.f32 0.0, %v2854
        %v2856 = vpop.f32.mrb[0].mxu0
        %v2857 = vadd.f32 0.0, %v2856
        %2858 = vmatprep.mubr.bf16.mxu0 0
        %2859 = vmatmul.mubr.bf16.gmra.mrb[0].mxu0 %v2629
        %v2860 = vpop.f32.mrb[0].mxu0
        %v2861 = vadd.f32 0.0, %v2860
        %v2862 = vpop.f32.mrb[0].mxu0
        %v2863 = vadd.f32 0.0, %v2862
        %v2864 = vpop.f32.mrb[0].mxu0
        %v2865 = vadd.f32 0.0, %v2864
        %v2866 = vpop.f32.mrb[0].mxu0
        %v2867 = vadd.f32 0.0, %v2866
        %2868 = vmatprep.mubr.bf16.mxu0 0
        %2869 = vmatmul.mubr.bf16.gmra.mrb[0].mxu0 %v2630
        %v2870 = vpop.f32.mrb[0].mxu0
        %v2871 = vadd.f32 0.0, %v2870
        %v2872 = vpop.f32.mrb[0].mxu0
        %v2873 = vadd.f32 0.0, %v2872
        %v2874 = vpop.f32.mrb[0].mxu0
        %v2875 = vadd.f32 0.0, %v2874
        %v2876 = vpop.f32.mrb[0].mxu0
        %v2877 = vadd.f32 0.0, %v2876
        %2878 = vmatprep.mubr.bf16.mxu0 0
        %2879 = vmatmul.mubr.bf16.gmra.mrb[0].mxu0 %v2631
        %v2880 = vpop.f32.mrb[0].mxu0
        %v2881 = vadd.f32 0.0, %v2880
        %v2882 = vpop.f32.mrb[0].mxu0
        %v2883 = vadd.f32 0.0, %v2882
        %v2884 = vpop.f32.mrb[0].mxu0
        %v2885 = vadd.f32 0.0, %v2884
        %v2886 = vpop.f32.mrb[0].mxu0
        %v2887 = vadd.f32 0.0, %v2886
        %2888 = vmatprep.mubr.bf16.mxu0 0
        %2889 = vmatmul.mubr.bf16.gmra.mrb[0].mxu0 %v2632
        %v2890 = vpop.f32.mrb[0].mxu0
        %v2891 = vadd.f32 0.0, %v2890
        %v2892 = vpop.f32.mrb[0].mxu0
        %v2893 = vadd.f32 0.0, %v2892
        %v2894 = vpop.f32.mrb[0].mxu0
        %v2895 = vadd.f32 0.0, %v2894
        %v2896 = vpop.f32.mrb[0].mxu0
        %v2897 = vadd.f32 0.0, %v2896
        %2898 = vmatprep.mubr.bf16.mxu0 0
        %2899 = vmatmul.mubr.bf16.gmra.mrb[0].mxu0 %v2633
        %v2900 = vpop.f32.mrb[0].mxu0
        %v2901 = vadd.f32 0.0, %v2900
        %v2902 = vpop.f32.mrb[0].mxu0
        %v2903 = vadd.f32 0.0, %v2902
        %v2904 = vpop.f32.mrb[0].mxu0
        %v2905 = vadd.f32 0.0, %v2904
        %v2906 = vpop.f32.mrb[0].mxu0
        %v2907 = vadd.f32 0.0, %v2906
        %2908 = vmatprep.mubr.bf16.mxu0 0
        %2909 = vmatmul.mubr.bf16.gmra.mrb[0].mxu0 %v2634
        %v2910 = vpop.f32.mrb[0].mxu0
        %v2911 = vadd.f32 0.0, %v2910
        %v2912 = vpop.f32.mrb[0].mxu0
        %v2913 = vadd.f32 0.0, %v2912
        %v2914 = vpop.f32.mrb[0].mxu0
        %v2915 = vadd.f32 0.0, %v2914
        %v2916 = vpop.f32.mrb[0].mxu0
        %v2917 = vadd.f32 0.0, %v2916
        %2918 = vdwg.mxu0
        %2919 = vmatprep.subr.bf16.mxu0 0
        %2920 = vmatpush1.bf16.msra.mxu0 %v2750
        %2921 = vmatprep.subr.bf16.mxu0 0
        %2922 = vmatpush1.bf16.msra.mxu0 %v2753
        %2923 = vmatprep.subr.bf16.mxu0 0
        %2924 = vmatpush1.bf16.msra.mxu0 %v2756
        %2925 = vmatprep.subr.bf16.mxu0 0
        %2926 = vmatpush1.bf16.msra.mxu0 %v2759
        %2927 = vmatprep.subr.bf16.mxu0 0
        %2928 = vmatpush1.bf16.msra.mxu0 %v2762
        %2929 = vmatprep.subr.bf16.mxu0 0
        %2930 = vmatpush1.bf16.msra.mxu0 %v2765
        %2931 = vmatprep.subr.bf16.mxu0 0
        %2932 = vmatpush1.bf16.msra.mxu0 %v2768
        %2933 = vmatprep.subr.bf16.mxu0 0
        %2934 = vmatpush1.bf16.msra.mxu0 %v2771
        %2935 = vmatprep.subr.bf16.mxu0 0
        %2936 = vmatpush1.bf16.msra.mxu0 0
        %2937 = vmatprep.subr.bf16.mxu0 0
        %2938 = vmatpush1.bf16.msra.mxu0 0
        %2939 = vmatprep.subr.bf16.mxu0 0
        %2940 = vmatpush1.bf16.msra.mxu0 0
        %2941 = vmatprep.subr.bf16.mxu0 0
        %2942 = vmatpush1.bf16.msra.mxu0 0
        %2943 = vmatprep.subr.bf16.mxu0 0
        %2944 = vmatpush1.bf16.msra.mxu0 0
        %2945 = vmatprep.subr.bf16.mxu0 0
        %2946 = vmatpush1.bf16.msra.mxu0 0
        %2947 = vmatprep.subr.bf16.mxu0 0
        %2948 = vmatpush1.bf16.msra.mxu0 0
        %2949 = vmatprep.subr.bf16.mxu0 0
        %2950 = vmatpush1.bf16.msra.mxu0 0
        %2951 = vmatprep.mubr.bf16.mxu0 0
        %2952 = vmatmul.mubr.bf16.gmra.mrb[0].mxu0 %v2626
        %v2953 = vpop.f32.mrb[0].mxu0
        %v2954 = vadd.f32 0.0, %v2953
        %v2955 = vpop.f32.mrb[0].mxu0
        %v2956 = vpop.f32.mrb[0].mxu0
        %v2957 = vadd.f32 0.0, %v2956
        %v2958 = vpop.f32.mrb[0].mxu0
        %2959 = vmatprep.mubr.bf16.mxu0 0
        %2960 = vmatmul.mubr.bf16.gmra.mrb[0].mxu0 %v2627
        %v2961 = vpop.f32.mrb[0].mxu0
        %v2962 = vadd.f32 0.0, %v2961
        %v2963 = vpop.f32.mrb[0].mxu0
        %v2964 = vpop.f32.mrb[0].mxu0
        %v2965 = vadd.f32 0.0, %v2964
        %v2966 = vpop.f32.mrb[0].mxu0
        %2967 = vmatprep.mubr.bf16.mxu0 0
        %2968 = vmatmul.mubr.bf16.gmra.mrb[0].mxu0 %v2628
        %v2969 = vpop.f32.mrb[0].mxu0
        %v2970 = vadd.f32 0.0, %v2969
        %v2971 = vpop.f32.mrb[0].mxu0
        %v2972 = vpop.f32.mrb[0].mxu0
        %v2973 = vadd.f32 0.0, %v2972
        %v2974 = vpop.f32.mrb[0].mxu0
        %2975 = vmatprep.mubr.bf16.mxu0 0
        %2976 = vmatmul.mubr.bf16.gmra.mrb[0].mxu0 %v2629
        %v2977 = vpop.f32.mrb[0].mxu0
        %v2978 = vadd.f32 0.0, %v2977
        %v2979 = vpop.f32.mrb[0].mxu0
        %v2980 = vpop.f32.mrb[0].mxu0
        %v2981 = vadd.f32 0.0, %v2980
        %v2982 = vpop.f32.mrb[0].mxu0
        %2983 = vmatprep.mubr.bf16.mxu0 0
        %2984 = vmatmul.mubr.bf16.gmra.mrb[0].mxu0 %v2630
        %v2985 = vpop.f32.mrb[0].mxu0
        %v2986 = vadd.f32 0.0, %v2985
        %v2987 = vpop.f32.mrb[0].mxu0
        %v2988 = vpop.f32.mrb[0].mxu0
        %v2989 = vadd.f32 0.0, %v2988
        %v2990 = vpop.f32.mrb[0].mxu0
        %2991 = vmatprep.mubr.bf16.mxu0 0
        %2992 = vmatmul.mubr.bf16.gmra.mrb[0].mxu0 %v2631
        %v2993 = vpop.f32.mrb[0].mxu0
        %v2994 = vadd.f32 0.0, %v2993
        %v2995 = vpop.f32.mrb[0].mxu0
        %v2996 = vpop.f32.mrb[0].mxu0
        %v2997 = vadd.f32 0.0, %v2996
        %v2998 = vpop.f32.mrb[0].mxu0
        %2999 = vmatprep.mubr.bf16.mxu0 0
        %3000 = vmatmul.mubr.bf16.gmra.mrb[0].mxu0 %v2632
        %v3001 = vpop.f32.mrb[0].mxu0
        %v3002 = vadd.f32 0.0, %v3001
        %v3003 = vpop.f32.mrb[0].mxu0
        %v3004 = vpop.f32.mrb[0].mxu0
        %v3005 = vadd.f32 0.0, %v3004
        %v3006 = vpop.f32.mrb[0].mxu0
        %3007 = vmatprep.mubr.bf16.mxu0 0
        %3008 = vmatmul.mubr.bf16.gmra.mrb[0].mxu0 %v2633
        %v3009 = vpop.f32.mrb[0].mxu0
        %v3010 = vadd.f32 0.0, %v3009
        %v3011 = vpop.f32.mrb[0].mxu0
        %v3012 = vpop.f32.mrb[0].mxu0
        %v3013 = vadd.f32 0.0, %v3012
        %v3014 = vpop.f32.mrb[0].mxu0
        %3015 = vmatprep.mubr.bf16.mxu0 0
        %3016 = vmatmul.mubr.bf16.gmra.mrb[0].mxu0 %v2634
        %v3017 = vpop.f32.mrb[0].mxu0
        %v3018 = vadd.f32 0.0, %v3017
        %v3019 = vpop.f32.mrb[0].mxu0
        %v3020 = vpop.f32.mrb[0].mxu0
        %v3021 = vadd.f32 0.0, %v3020
        %v3022 = vpop.f32.mrb[0].mxu0
        %3023 = vdwg.mxu0
        %v3024 = vrot.slane %v2831, 6
        %v3025 = vrot.slane %v2835, 6
        %v3026 = vrot.slane %v2841, 6
        %v3027 = vrot.slane %v2845, 6
        %v3028 = vrot.slane %v2851, 6
        %v3029 = vrot.slane %v2855, 6
        %v3030 = vrot.slane %v2861, 6
        %v3031 = vrot.slane %v2865, 6
        %v3032 = vrot.slane %v2871, 6
        %v3033 = vrot.slane %v2875, 6
        %v3034 = vrot.slane %v2881, 6
        %v3035 = vrot.slane %v2885, 6
        %v3036 = vrot.slane %v2891, 6
        %v3037 = vrot.slane %v2895, 6
        %v3038 = vrot.slane %v2901, 6
        %v3039 = vrot.slane %v2905, 6
        %v3040 = vrot.slane %v2911, 6
        %v3041 = vrot.slane %v2915, 6
        %v3042 = vsel %vm1326, %v3040, %v3041
        %v3043 = vsel %vm1326, %v3039, %v3040
        %v3044 = vsel %vm1326, %v3038, %v3039
        %v3045 = vsel %vm1326, %v3037, %v3038
        %v3046 = vsel %vm1326, %v3036, %v3037
        %v3047 = vsel %vm1326, %v3035, %v3036
        %v3048 = vsel %vm1326, %v3034, %v3035
        %v3049 = vsel %vm1326, %v3033, %v3034
        %v3050 = vsel %vm1326, %v3032, %v3033
        %v3051 = vsel %vm1326, %v3031, %v3032
        %v3052 = vsel %vm1326, %v3030, %v3031
        %v3053 = vsel %vm1326, %v3029, %v3030
        %v3054 = vsel %vm1326, %v3028, %v3029
        %v3055 = vsel %vm1326, %v3027, %v3028
        %v3056 = vsel %vm1326, %v3026, %v3027
        %v3057 = vsel %vm1326, %v3025, %v3026
        %v3058 = vsel %vm1326, %v3024, %v3025
        %v3059 = vsel %vm1326, %v3041, %v3024
        %v3060 = vrot.slane %v2833, 7
        %v3061 = vrot.slane %v2837, 7
        %v3062 = vrot.slane %v2843, 7
        %v3063 = vrot.slane %v2847, 7
        %v3064 = vrot.slane %v2853, 7
        %v3065 = vrot.slane %v2857, 7
        %v3066 = vrot.slane %v2863, 7
        %v3067 = vrot.slane %v2867, 7
        %v3068 = vrot.slane %v2873, 7
        %v3069 = vrot.slane %v2877, 7
        %v3070 = vrot.slane %v2883, 7
        %v3071 = vrot.slane %v2887, 7
        %v3072 = vrot.slane %v2893, 7
        %v3073 = vrot.slane %v2897, 7
        %v3074 = vrot.slane %v2903, 7
        %v3075 = vrot.slane %v2907, 7
        %v3076 = vrot.slane %v2913, 7
        %v3077 = vrot.slane %v2917, 7
        %v3078 = vsel %vm1363, %v3076, %v3077
        %v3079 = vsel %vm1363, %v3075, %v3076
        %v3080 = vsel %vm1363, %v3074, %v3075
        %v3081 = vsel %vm1363, %v3073, %v3074
        %v3082 = vsel %vm1363, %v3072, %v3073
        %v3083 = vsel %vm1363, %v3071, %v3072
        %v3084 = vsel %vm1363, %v3070, %v3071
        %v3085 = vsel %vm1363, %v3069, %v3070
        %v3086 = vsel %vm1363, %v3068, %v3069
        %v3087 = vsel %vm1363, %v3067, %v3068
        %v3088 = vsel %vm1363, %v3066, %v3067
        %v3089 = vsel %vm1363, %v3065, %v3066
        %v3090 = vsel %vm1363, %v3064, %v3065
        %v3091 = vsel %vm1363, %v3063, %v3064
        %v3092 = vsel %vm1363, %v3062, %v3063
        %v3093 = vsel %vm1363, %v3061, %v3062
        %v3094 = vsel %vm1363, %v3060, %v3061
        %v3095 = vsel %vm1363, %v3077, %v3060
        %v3096 = vadd.f32 %v3042, %v3078
        %v3097 = vadd.f32 %v3059, %v3095
        %v3098 = vadd.f32 %v3058, %v3094
        %v3099 = vadd.f32 %v3057, %v3093
        %v3100 = vadd.f32 %v3056, %v3092
        %v3101 = vadd.f32 %v3055, %v3091
        %v3102 = vadd.f32 %v3054, %v3090
        %v3103 = vadd.f32 %v3053, %v3089
        %v3104 = vadd.f32 %v3052, %v3088
        %v3105 = vadd.f32 %v3051, %v3087
        %v3106 = vadd.f32 %v3050, %v3086
        %v3107 = vadd.f32 %v3049, %v3085
        %v3108 = vadd.f32 %v3048, %v3084
        %v3109 = vadd.f32 %v3047, %v3083
        %v3110 = vadd.f32 %v3046, %v3082
        %v3111 = vadd.f32 %v3045, %v3081
        %v3112 = vadd.f32 %v3044, %v3080
        %v3113 = vadd.f32 %v3043, %v3079
        %v3114 = vadd.f32 %v3096, %v3021
        %v3115 = vadd.f32 %v3097, %v2954
        %v3116 = vadd.f32 %v3098, %v2957
        %v3117 = vadd.f32 %v3099, %v2962
        %v3118 = vadd.f32 %v3100, %v2965
        %v3119 = vadd.f32 %v3101, %v2970
        %v3120 = vadd.f32 %v3102, %v2973
        %v3121 = vadd.f32 %v3103, %v2978
        %v3122 = vadd.f32 %v3104, %v2981
        %v3123 = vadd.f32 %v3105, %v2986
        %v3124 = vadd.f32 %v3106, %v2989
        %v3125 = vadd.f32 %v3107, %v2994
        %v3126 = vadd.f32 %v3108, %v2997
        %v3127 = vadd.f32 %v3109, %v3002
        %v3128 = vadd.f32 %v3110, %v3005
        %v3129 = vadd.f32 %v3111, %v3010
        %v3130 = vadd.f32 %v3112, %v3013
        %v3131 = vadd.f32 %v3113, %v3018
        %s3132 = scalar_lea.vmem %s382, 768 [#allocation7]
        %v3133 = vld [vmem:[%s3132] sm:$0xff]
        %v3134 = vld [vmem:[%s3132 + $0x8] sm:$0xf]
        %v3135 = vld [vmem:[%s3132 + $0xc] sm:$0xff]
        %v3136 = vld [vmem:[%s3132 + $0x14] sm:$0xf]
        %v3137 = vld [vmem:[%s3132 + $0x18] sm:$0xff]
        %v3138 = vld [vmem:[%s3132 + $0x20] sm:$0xf]
        %v3139 = vld [vmem:[%s3132 + $0x24] sm:$0xff]
        %v3140 = vld [vmem:[%s3132 + $0x2c] sm:$0xf]
        %v3141 = vld [vmem:[%s3132 + $0x30] sm:$0xff]
        %v3142 = vld [vmem:[%s3132 + $0x38] sm:$0xf]
        %v3143 = vld [vmem:[%s3132 + $0x3c] sm:$0xff]
        %v3144 = vld [vmem:[%s3132 + $0x44] sm:$0xf]
        %v3145 = vld [vmem:[%s3132 + $0x48] sm:$0xff]
        %v3146 = vld [vmem:[%s3132 + $0x50] sm:$0xf]
        %v3147 = vld [vmem:[%s3132 + $0x54] sm:$0xff]
        %v3148 = vld [vmem:[%s3132 + $0x5c] sm:$0xf]
        %v3149 = vld [vmem:[%s3132 + $0x60] sm:$0xff]
        %v3150 = vld [vmem:[%s3132 + $0x68] sm:$0xf]
        %v3151 = vld [vmem:[%s3132 + $0x6c] sm:$0xff]
        %v3152 = vld [vmem:[%s3132 + $0x74] sm:$0xf]
        %v3153 = vld [vmem:[%s3132 + $0x78] sm:$0xff]
        %v3154 = vld [vmem:[%s3132 + $0x80] sm:$0xf]
        %v3155 = vld [vmem:[%s3132 + $0x84] sm:$0xff]
        %v3156 = vld [vmem:[%s3132 + $0x8c] sm:$0xf]
        %v3157 = vld [vmem:[%s3132 + $0x90] sm:$0xff]
        %v3158 = vld [vmem:[%s3132 + $0x98] sm:$0xf]
        %v3159 = vld [vmem:[%s3132 + $0x9c] sm:$0xff]
        %v3160 = vld [vmem:[%s3132 + $0xa4] sm:$0xf]
        %v3161 = vld [vmem:[%s3132 + $0xa8] sm:$0xff]
        %v3162 = vld [vmem:[%s3132 + $0xb0] sm:$0xf]
        %v3163 = vld [vmem:[%s3132 + $0xb4] sm:$0xff]
        %v3164 = vld [vmem:[%s3132 + $0xbc] sm:$0xf]
        %v3197 = vunpack.c.l.b16 %v3133
        %v3198 = vunpack.c.h.b16 %v3133
        %v3199 = vunpack.c.l.b16 %v3134
        %v3200 = vunpack.c.l.b16 %v3135
        %v3201 = vunpack.c.h.b16 %v3135
        %v3202 = vunpack.c.l.b16 %v3136
        %v3203 = vunpack.c.l.b16 %v3137
        %v3204 = vunpack.c.h.b16 %v3137
        %v3205 = vunpack.c.l.b16 %v3138
        %v3206 = vunpack.c.l.b16 %v3139
        %v3207 = vunpack.c.h.b16 %v3139
        %v3208 = vunpack.c.l.b16 %v3140
        %v3209 = vunpack.c.l.b16 %v3141
        %v3210 = vunpack.c.h.b16 %v3141
        %v3211 = vunpack.c.l.b16 %v3142
        %v3212 = vunpack.c.l.b16 %v3143
        %v3213 = vunpack.c.h.b16 %v3143
        %v3214 = vunpack.c.l.b16 %v3144
        %v3215 = vunpack.c.l.b16 %v3145
        %v3216 = vunpack.c.h.b16 %v3145
        %v3217 = vunpack.c.l.b16 %v3146
        %v3218 = vunpack.c.l.b16 %v3147
        %v3219 = vunpack.c.h.b16 %v3147
        %v3220 = vunpack.c.l.b16 %v3148
        %v3221 = vunpack.c.l.b16 %v3149
        %v3222 = vunpack.c.h.b16 %v3149
        %v3223 = vunpack.c.l.b16 %v3150
        %v3224 = vunpack.c.l.b16 %v3151
        %v3225 = vunpack.c.h.b16 %v3151
        %v3226 = vunpack.c.l.b16 %v3152
        %v3227 = vunpack.c.l.b16 %v3153
        %v3228 = vunpack.c.h.b16 %v3153
        %v3229 = vunpack.c.l.b16 %v3154
        %v3230 = vunpack.c.l.b16 %v3155
        %v3231 = vunpack.c.h.b16 %v3155
        %v3232 = vunpack.c.l.b16 %v3156
        %v3233 = vunpack.c.l.b16 %v3157
        %v3234 = vunpack.c.h.b16 %v3157
        %v3235 = vunpack.c.l.b16 %v3158
        %v3236 = vunpack.c.l.b16 %v3159
        %v3237 = vunpack.c.h.b16 %v3159
        %v3238 = vunpack.c.l.b16 %v3160
        %v3239 = vunpack.c.l.b16 %v3161
        %v3240 = vunpack.c.h.b16 %v3161
        %v3241 = vunpack.c.l.b16 %v3162
        %v3242 = vunpack.c.l.b16 %v3163
        %v3243 = vunpack.c.h.b16 %v3163
        %v3244 = vunpack.c.l.b16 %v3164
        %v3245 = vpack.c.b16 %v3200, %v3197
        %v3246 = vpack.c.b16 %v3201, %v3198
        %v3247 = vpack.c.b16 %v3202, %v3199
        %v3248 = vpack.c.b16 %v3206, %v3203
        %v3249 = vpack.c.b16 %v3207, %v3204
        %v3250 = vpack.c.b16 %v3208, %v3205
        %v3251 = vpack.c.b16 %v3212, %v3209
        %v3252 = vpack.c.b16 %v3213, %v3210
        %v3253 = vpack.c.b16 %v3214, %v3211
        %v3254 = vpack.c.b16 %v3218, %v3215
        %v3255 = vpack.c.b16 %v3219, %v3216
        %v3256 = vpack.c.b16 %v3220, %v3217
        %v3257 = vpack.c.b16 %v3224, %v3221
        %v3258 = vpack.c.b16 %v3225, %v3222
        %v3259 = vpack.c.b16 %v3226, %v3223
        %v3260 = vpack.c.b16 %v3230, %v3227
        %v3261 = vpack.c.b16 %v3231, %v3228
        %v3262 = vpack.c.b16 %v3232, %v3229
        %v3263 = vpack.c.b16 %v3236, %v3233
        %v3264 = vpack.c.b16 %v3237, %v3234
        %v3265 = vpack.c.b16 %v3238, %v3235
        %v3266 = vpack.c.b16 %v3242, %v3239
        %v3267 = vpack.c.b16 %v3243, %v3240
        %v3268 = vpack.c.b16 %v3244, %v3241
        %3293 = vmatprep.subr.bf16.mxu0 %v3246
        %3294 = vmatpush1.bf16.msra.mxu0 %v3245
        %3295 = vmatprep.subr.bf16.mxu0 %v3249
        %3296 = vmatpush1.bf16.msra.mxu0 %v3248
        %3297 = vmatprep.subr.bf16.mxu0 %v3252
        %3298 = vmatpush1.bf16.msra.mxu0 %v3251
        %3299 = vmatprep.subr.bf16.mxu0 %v3255
        %3300 = vmatpush1.bf16.msra.mxu0 %v3254
        %3301 = vmatprep.subr.bf16.mxu0 %v3258
        %3302 = vmatpush1.bf16.msra.mxu0 %v3257
        %3303 = vmatprep.subr.bf16.mxu0 %v3261
        %3304 = vmatpush1.bf16.msra.mxu0 %v3260
        %3305 = vmatprep.subr.bf16.mxu0 %v3264
        %3306 = vmatpush1.bf16.msra.mxu0 %v3263
        %3307 = vmatprep.subr.bf16.mxu0 %v3267
        %3308 = vmatpush1.bf16.msra.mxu0 %v3266
        %3309 = vmatprep.subr.bf16.mxu0 0
        %3310 = vmatpush1.bf16.msra.mxu0 0
        %3311 = vmatprep.subr.bf16.mxu0 0
        %3312 = vmatpush1.bf16.msra.mxu0 0
        %3313 = vmatprep.subr.bf16.mxu0 0
        %3314 = vmatpush1.bf16.msra.mxu0 0
        %3315 = vmatprep.subr.bf16.mxu0 0
        %3316 = vmatpush1.bf16.msra.mxu0 0
        %3317 = vmatprep.subr.bf16.mxu0 0
        %3318 = vmatpush1.bf16.msra.mxu0 0
        %3319 = vmatprep.subr.bf16.mxu0 0
        %3320 = vmatpush1.bf16.msra.mxu0 0
        %3321 = vmatprep.subr.bf16.mxu0 0
        %3322 = vmatpush1.bf16.msra.mxu0 0
        %3323 = vmatprep.subr.bf16.mxu0 0
        %3324 = vmatpush1.bf16.msra.mxu0 0
        %3325 = vmatprep.mubr.bf16.mxu0 0
        %3326 = vmatmul.mubr.bf16.gmra.mrb[0].mxu0 %v2626
        %v3327 = vpop.f32.mrb[0].mxu0
        %v3328 = vadd.f32 0.0, %v3327
        %v3329 = vpop.f32.mrb[0].mxu0
        %v3330 = vadd.f32 0.0, %v3329
        %v3331 = vpop.f32.mrb[0].mxu0
        %v3332 = vadd.f32 0.0, %v3331
        %v3333 = vpop.f32.mrb[0].mxu0
        %v3334 = vadd.f32 0.0, %v3333
        %3335 = vmatprep.mubr.bf16.mxu0 0
        %3336 = vmatmul.mubr.bf16.gmra.mrb[0].mxu0 %v2627
        %v3337 = vpop.f32.mrb[0].mxu0
        %v3338 = vadd.f32 0.0, %v3337
        %v3339 = vpop.f32.mrb[0].mxu0
        %v3340 = vadd.f32 0.0, %v3339
        %v3341 = vpop.f32.mrb[0].mxu0
        %v3342 = vadd.f32 0.0, %v3341
        %v3343 = vpop.f32.mrb[0].mxu0
        %v3344 = vadd.f32 0.0, %v3343
        %3345 = vmatprep.mubr.bf16.mxu0 0
        %3346 = vmatmul.mubr.bf16.gmra.mrb[0].mxu0 %v2628
        %v3347 = vpop.f32.mrb[0].mxu0
        %v3348 = vadd.f32 0.0, %v3347
        %v3349 = vpop.f32.mrb[0].mxu0
        %v3350 = vadd.f32 0.0, %v3349
        %v3351 = vpop.f32.mrb[0].mxu0
        %v3352 = vadd.f32 0.0, %v3351
        %v3353 = vpop.f32.mrb[0].mxu0
        %v3354 = vadd.f32 0.0, %v3353
        %3355 = vmatprep.mubr.bf16.mxu0 0
        %3356 = vmatmul.mubr.bf16.gmra.mrb[0].mxu0 %v2629
        %v3357 = vpop.f32.mrb[0].mxu0
        %v3358 = vadd.f32 0.0, %v3357
        %v3359 = vpop.f32.mrb[0].mxu0
        %v3360 = vadd.f32 0.0, %v3359
        %v3361 = vpop.f32.mrb[0].mxu0
        %v3362 = vadd.f32 0.0, %v3361
        %v3363 = vpop.f32.mrb[0].mxu0
        %v3364 = vadd.f32 0.0, %v3363
        %3365 = vmatprep.mubr.bf16.mxu0 0
        %3366 = vmatmul.mubr.bf16.gmra.mrb[0].mxu0 %v2630
        %v3367 = vpop.f32.mrb[0].mxu0
        %v3368 = vadd.f32 0.0, %v3367
        %v3369 = vpop.f32.mrb[0].mxu0
        %v3370 = vadd.f32 0.0, %v3369
        %v3371 = vpop.f32.mrb[0].mxu0
        %v3372 = vadd.f32 0.0, %v3371
        %v3373 = vpop.f32.mrb[0].mxu0
        %v3374 = vadd.f32 0.0, %v3373
        %3375 = vmatprep.mubr.bf16.mxu0 0
        %3376 = vmatmul.mubr.bf16.gmra.mrb[0].mxu0 %v2631
        %v3377 = vpop.f32.mrb[0].mxu0
        %v3378 = vadd.f32 0.0, %v3377
        %v3379 = vpop.f32.mrb[0].mxu0
        %v3380 = vadd.f32 0.0, %v3379
        %v3381 = vpop.f32.mrb[0].mxu0
        %v3382 = vadd.f32 0.0, %v3381
        %v3383 = vpop.f32.mrb[0].mxu0
        %v3384 = vadd.f32 0.0, %v3383
        %3385 = vmatprep.mubr.bf16.mxu0 0
        %3386 = vmatmul.mubr.bf16.gmra.mrb[0].mxu0 %v2632
        %v3387 = vpop.f32.mrb[0].mxu0
        %v3388 = vadd.f32 0.0, %v3387
        %v3389 = vpop.f32.mrb[0].mxu0
        %v3390 = vadd.f32 0.0, %v3389
        %v3391 = vpop.f32.mrb[0].mxu0
        %v3392 = vadd.f32 0.0, %v3391
        %v3393 = vpop.f32.mrb[0].mxu0
        %v3394 = vadd.f32 0.0, %v3393
        %3395 = vmatprep.mubr.bf16.mxu0 0
        %3396 = vmatmul.mubr.bf16.gmra.mrb[0].mxu0 %v2633
        %v3397 = vpop.f32.mrb[0].mxu0
        %v3398 = vadd.f32 0.0, %v3397
        %v3399 = vpop.f32.mrb[0].mxu0
        %v3400 = vadd.f32 0.0, %v3399
        %v3401 = vpop.f32.mrb[0].mxu0
        %v3402 = vadd.f32 0.0, %v3401
        %v3403 = vpop.f32.mrb[0].mxu0
        %v3404 = vadd.f32 0.0, %v3403
        %3405 = vmatprep.mubr.bf16.mxu0 0
        %3406 = vmatmul.mubr.bf16.gmra.mrb[0].mxu0 %v2634
        %v3407 = vpop.f32.mrb[0].mxu0
        %v3408 = vadd.f32 0.0, %v3407
        %v3409 = vpop.f32.mrb[0].mxu0
        %v3410 = vadd.f32 0.0, %v3409
        %v3411 = vpop.f32.mrb[0].mxu0
        %v3412 = vadd.f32 0.0, %v3411
        %v3413 = vpop.f32.mrb[0].mxu0
        %v3414 = vadd.f32 0.0, %v3413
        %3415 = vdwg.mxu0
        %3416 = vmatprep.subr.bf16.mxu0 0
        %3417 = vmatpush1.bf16.msra.mxu0 %v3247
        %3418 = vmatprep.subr.bf16.mxu0 0
        %3419 = vmatpush1.bf16.msra.mxu0 %v3250
        %3420 = vmatprep.subr.bf16.mxu0 0
        %3421 = vmatpush1.bf16.msra.mxu0 %v3253
        %3422 = vmatprep.subr.bf16.mxu0 0
        %3423 = vmatpush1.bf16.msra.mxu0 %v3256
        %3424 = vmatprep.subr.bf16.mxu0 0
        %3425 = vmatpush1.bf16.msra.mxu0 %v3259
        %3426 = vmatprep.subr.bf16.mxu0 0
        %3427 = vmatpush1.bf16.msra.mxu0 %v3262
        %3428 = vmatprep.subr.bf16.mxu0 0
        %3429 = vmatpush1.bf16.msra.mxu0 %v3265
        %3430 = vmatprep.subr.bf16.mxu0 0
        %3431 = vmatpush1.bf16.msra.mxu0 %v3268
        %3432 = vmatprep.subr.bf16.mxu0 0
        %3433 = vmatpush1.bf16.msra.mxu0 0
        %3434 = vmatprep.subr.bf16.mxu0 0
        %3435 = vmatpush1.bf16.msra.mxu0 0
        %3436 = vmatprep.subr.bf16.mxu0 0
        %3437 = vmatpush1.bf16.msra.mxu0 0
        %3438 = vmatprep.subr.bf16.mxu0 0
        %3439 = vmatpush1.bf16.msra.mxu0 0
        %3440 = vmatprep.subr.bf16.mxu0 0
        %3441 = vmatpush1.bf16.msra.mxu0 0
        %3442 = vmatprep.subr.bf16.mxu0 0
        %3443 = vmatpush1.bf16.msra.mxu0 0
        %3444 = vmatprep.subr.bf16.mxu0 0
        %3445 = vmatpush1.bf16.msra.mxu0 0
        %3446 = vmatprep.subr.bf16.mxu0 0
        %3447 = vmatpush1.bf16.msra.mxu0 0
        %3448 = vmatprep.mubr.bf16.mxu0 0
        %3449 = vmatmul.mubr.bf16.gmra.mrb[0].mxu0 %v2626
        %v3450 = vpop.f32.mrb[0].mxu0
        %v3451 = vadd.f32 0.0, %v3450
        %v3452 = vpop.f32.mrb[0].mxu0
        %v3453 = vpop.f32.mrb[0].mxu0
        %v3454 = vadd.f32 0.0, %v3453
        %v3455 = vpop.f32.mrb[0].mxu0
        %3456 = vmatprep.mubr.bf16.mxu0 0
        %3457 = vmatmul.mubr.bf16.gmra.mrb[0].mxu0 %v2627
        %v3458 = vpop.f32.mrb[0].mxu0
        %v3459 = vadd.f32 0.0, %v3458
        %v3460 = vpop.f32.mrb[0].mxu0
        %v3461 = vpop.f32.mrb[0].mxu0
        %v3462 = vadd.f32 0.0, %v3461
        %v3463 = vpop.f32.mrb[0].mxu0
        %3464 = vmatprep.mubr.bf16.mxu0 0
        %3465 = vmatmul.mubr.bf16.gmra.mrb[0].mxu0 %v2628
        %v3466 = vpop.f32.mrb[0].mxu0
        %v3467 = vadd.f32 0.0, %v3466
        %v3468 = vpop.f32.mrb[0].mxu0
        %v3469 = vpop.f32.mrb[0].mxu0
        %v3470 = vadd.f32 0.0, %v3469
        %v3471 = vpop.f32.mrb[0].mxu0
        %3472 = vmatprep.mubr.bf16.mxu0 0
        %3473 = vmatmul.mubr.bf16.gmra.mrb[0].mxu0 %v2629
        %v3474 = vpop.f32.mrb[0].mxu0
        %v3475 = vadd.f32 0.0, %v3474
        %v3476 = vpop.f32.mrb[0].mxu0
        %v3477 = vpop.f32.mrb[0].mxu0
        %v3478 = vadd.f32 0.0, %v3477
        %v3479 = vpop.f32.mrb[0].mxu0
        %3480 = vmatprep.mubr.bf16.mxu0 0
        %3481 = vmatmul.mubr.bf16.gmra.mrb[0].mxu0 %v2630
        %v3482 = vpop.f32.mrb[0].mxu0
        %v3483 = vadd.f32 0.0, %v3482
        %v3484 = vpop.f32.mrb[0].mxu0
        %v3485 = vpop.f32.mrb[0].mxu0
        %v3486 = vadd.f32 0.0, %v3485
        %v3487 = vpop.f32.mrb[0].mxu0
        %3488 = vmatprep.mubr.bf16.mxu0 0
        %3489 = vmatmul.mubr.bf16.gmra.mrb[0].mxu0 %v2631
        %v3490 = vpop.f32.mrb[0].mxu0
        %v3491 = vadd.f32 0.0, %v3490
        %v3492 = vpop.f32.mrb[0].mxu0
        %v3493 = vpop.f32.mrb[0].mxu0
        %v3494 = vadd.f32 0.0, %v3493
        %v3495 = vpop.f32.mrb[0].mxu0
        %3496 = vmatprep.mubr.bf16.mxu0 0
        %3497 = vmatmul.mubr.bf16.gmra.mrb[0].mxu0 %v2632
        %v3498 = vpop.f32.mrb[0].mxu0
        %v3499 = vadd.f32 0.0, %v3498
        %v3500 = vpop.f32.mrb[0].mxu0
        %v3501 = vpop.f32.mrb[0].mxu0
        %v3502 = vadd.f32 0.0, %v3501
        %v3503 = vpop.f32.mrb[0].mxu0
        %3504 = vmatprep.mubr.bf16.mxu0 0
        %3505 = vmatmul.mubr.bf16.gmra.mrb[0].mxu0 %v2633
        %v3506 = vpop.f32.mrb[0].mxu0
        %v3507 = vadd.f32 0.0, %v3506
        %v3508 = vpop.f32.mrb[0].mxu0
        %v3509 = vpop.f32.mrb[0].mxu0
        %v3510 = vadd.f32 0.0, %v3509
        %v3511 = vpop.f32.mrb[0].mxu0
        %3512 = vmatprep.mubr.bf16.mxu0 0
        %3513 = vmatmul.mubr.bf16.gmra.mrb[0].mxu0 %v2634
        %v3514 = vpop.f32.mrb[0].mxu0
        %v3515 = vadd.f32 0.0, %v3514
        %v3516 = vpop.f32.mrb[0].mxu0
        %v3517 = vpop.f32.mrb[0].mxu0
        %v3518 = vadd.f32 0.0, %v3517
        %v3519 = vpop.f32.mrb[0].mxu0
        %3520 = vdwg.mxu0
        %v3521 = vrot.slane %v3328, 7
        %v3522 = vrot.slane %v3332, 7
        %v3523 = vrot.slane %v3338, 7
        %v3524 = vrot.slane %v3342, 7
        %v3525 = vrot.slane %v3348, 7
        %v3526 = vrot.slane %v3352, 7
        %v3527 = vrot.slane %v3358, 7
        %v3528 = vrot.slane %v3362, 7
        %v3529 = vrot.slane %v3368, 7
        %v3530 = vrot.slane %v3372, 7
        %v3531 = vrot.slane %v3378, 7
        %v3532 = vrot.slane %v3382, 7
        %v3533 = vrot.slane %v3388, 7
        %v3534 = vrot.slane %v3392, 7
        %v3535 = vrot.slane %v3398, 7
        %v3536 = vrot.slane %v3402, 7
        %v3537 = vrot.slane %v3408, 7
        %v3538 = vrot.slane %v3412, 7
        %v3539 = vsel %vm1363, %v3537, %v3538
        %v3540 = vsel %vm1363, %v3536, %v3537
        %v3541 = vsel %vm1363, %v3535, %v3536
        %v3542 = vsel %vm1363, %v3534, %v3535
        %v3543 = vsel %vm1363, %v3533, %v3534
        %v3544 = vsel %vm1363, %v3532, %v3533
        %v3545 = vsel %vm1363, %v3531, %v3532
        %v3546 = vsel %vm1363, %v3530, %v3531
        %v3547 = vsel %vm1363, %v3529, %v3530
        %v3548 = vsel %vm1363, %v3528, %v3529
        %v3549 = vsel %vm1363, %v3527, %v3528
        %v3550 = vsel %vm1363, %v3526, %v3527
        %v3551 = vsel %vm1363, %v3525, %v3526
        %v3552 = vsel %vm1363, %v3524, %v3525
        %v3553 = vsel %vm1363, %v3523, %v3524
        %v3554 = vsel %vm1363, %v3522, %v3523
        %v3555 = vsel %vm1363, %v3521, %v3522
        %v3556 = vsel %vm1363, %v3538, %v3521
        %v3557 = vadd.f32 %v3114, %v3556
        %v3558 = vadd.f32 %v3115, %v3555
        %v3559 = vadd.f32 %v3116, %v3554
        %v3560 = vadd.f32 %v3117, %v3553
        %v3561 = vadd.f32 %v3118, %v3552
        %v3562 = vadd.f32 %v3119, %v3551
        %v3563 = vadd.f32 %v3120, %v3550
        %v3564 = vadd.f32 %v3121, %v3549
        %v3565 = vadd.f32 %v3122, %v3548
        %v3566 = vadd.f32 %v3123, %v3547
        %v3567 = vadd.f32 %v3124, %v3546
        %v3568 = vadd.f32 %v3125, %v3545
        %v3569 = vadd.f32 %v3126, %v3544
        %v3570 = vadd.f32 %v3127, %v3543
        %v3571 = vadd.f32 %v3128, %v3542
        %v3572 = vadd.f32 %v3129, %v3541
        %v3573 = vadd.f32 %v3130, %v3540
        %v3574 = vadd.f32 %v3131, %v3539
        %v3575 = vadd.f32 %v3557, %v3330
        %v3576 = vadd.f32 %v3558, %v3334
        %v3577 = vadd.f32 %v3559, %v3340
        %v3578 = vadd.f32 %v3560, %v3344
        %v3579 = vadd.f32 %v3561, %v3350
        %v3580 = vadd.f32 %v3562, %v3354
        %v3581 = vadd.f32 %v3563, %v3360
        %v3582 = vadd.f32 %v3564, %v3364
        %v3583 = vadd.f32 %v3565, %v3370
        %v3584 = vadd.f32 %v3566, %v3374
        %v3585 = vadd.f32 %v3567, %v3380
        %v3586 = vadd.f32 %v3568, %v3384
        %v3587 = vadd.f32 %v3569, %v3390
        %v3588 = vadd.f32 %v3570, %v3394
        %v3589 = vadd.f32 %v3571, %v3400
        %v3590 = vadd.f32 %v3572, %v3404
        %v3591 = vadd.f32 %v3573, %v3410
        %v3592 = vadd.f32 %v3574, %v3414
        %v3593 = vrot.slane %v3451, 1
        %v3594 = vrot.slane %v3454, 1
        %v3595 = vrot.slane %v3459, 1
        %v3596 = vrot.slane %v3462, 1
        %v3597 = vrot.slane %v3467, 1
        %v3598 = vrot.slane %v3470, 1
        %v3599 = vrot.slane %v3475, 1
        %v3600 = vrot.slane %v3478, 1
        %v3601 = vrot.slane %v3483, 1
        %v3602 = vrot.slane %v3486, 1
        %v3603 = vrot.slane %v3491, 1
        %v3604 = vrot.slane %v3494, 1
        %v3605 = vrot.slane %v3499, 1
        %v3606 = vrot.slane %v3502, 1
        %v3607 = vrot.slane %v3507, 1
        %v3608 = vrot.slane %v3510, 1
        %v3609 = vrot.slane %v3515, 1
        %v3610 = vrot.slane %v3518, 1
        %v3611 = vsel %vm1897, %v3609, %v3610
        %v3612 = vsel %vm1897, %v3608, %v3609
        %v3613 = vsel %vm1897, %v3607, %v3608
        %v3614 = vsel %vm1897, %v3606, %v3607
        %v3615 = vsel %vm1897, %v3605, %v3606
        %v3616 = vsel %vm1897, %v3604, %v3605
        %v3617 = vsel %vm1897, %v3603, %v3604
        %v3618 = vsel %vm1897, %v3602, %v3603
        %v3619 = vsel %vm1897, %v3601, %v3602
        %v3620 = vsel %vm1897, %v3600, %v3601
        %v3621 = vsel %vm1897, %v3599, %v3600
        %v3622 = vsel %vm1897, %v3598, %v3599
        %v3623 = vsel %vm1897, %v3597, %v3598
        %v3624 = vsel %vm1897, %v3596, %v3597
        %v3625 = vsel %vm1897, %v3595, %v3596
        %v3626 = vsel %vm1897, %v3594, %v3595
        %v3627 = vsel %vm1897, %v3593, %v3594
        %v3628 = vsel %vm1897, %v3610, %v3593
        %v3629 = vadd.f32 %v3575, %v3627
        %v3630 = vadd.f32 %v3576, %v3626
        %v3631 = vadd.f32 %v3577, %v3625
        %v3632 = vadd.f32 %v3578, %v3624
        %v3633 = vadd.f32 %v3579, %v3623
        %v3634 = vadd.f32 %v3580, %v3622
        %v3635 = vadd.f32 %v3581, %v3621
        %v3636 = vadd.f32 %v3582, %v3620
        %v3637 = vadd.f32 %v3583, %v3619
        %v3638 = vadd.f32 %v3584, %v3618
        %v3639 = vadd.f32 %v3585, %v3617
        %v3640 = vadd.f32 %v3586, %v3616
        %v3641 = vadd.f32 %v3587, %v3615
        %v3642 = vadd.f32 %v3588, %v3614
        %v3643 = vadd.f32 %v3589, %v3613
        %v3644 = vadd.f32 %v3590, %v3612
        %v3645 = vadd.f32 %v3591, %v3611
        %v3646 = vadd.f32 %v3592, %v3628
        %s3647 = scalar_lea.vmem %s382, 960 [#allocation7]
        %v3648 = vld [vmem:[%s3647] sm:$0xff]
        %v3649 = vld [vmem:[%s3647 + $0x8] sm:$0xf]
        %v3650 = vld [vmem:[%s3647 + $0xc] sm:$0xff]
        %v3651 = vld [vmem:[%s3647 + $0x14] sm:$0xf]
        %v3652 = vld [vmem:[%s3647 + $0x18] sm:$0xff]
        %v3653 = vld [vmem:[%s3647 + $0x20] sm:$0xf]
        %v3654 = vld [vmem:[%s3647 + $0x24] sm:$0xff]
        %v3655 = vld [vmem:[%s3647 + $0x2c] sm:$0xf]
        %v3656 = vld [vmem:[%s3647 + $0x30] sm:$0xff]
        %v3657 = vld [vmem:[%s3647 + $0x38] sm:$0xf]
        %v3658 = vld [vmem:[%s3647 + $0x3c] sm:$0xff]
        %v3659 = vld [vmem:[%s3647 + $0x44] sm:$0xf]
        %v3660 = vld [vmem:[%s3647 + $0x48] sm:$0xff]
        %v3661 = vld [vmem:[%s3647 + $0x50] sm:$0xf]
        %v3662 = vld [vmem:[%s3647 + $0x54] sm:$0xff]
        %v3663 = vld [vmem:[%s3647 + $0x5c] sm:$0xf]
        %v3664 = vld [vmem:[%s3647 + $0x60] sm:$0xff]
        %v3665 = vld [vmem:[%s3647 + $0x68] sm:$0xf]
        %v3666 = vld [vmem:[%s3647 + $0x6c] sm:$0xff]
        %v3667 = vld [vmem:[%s3647 + $0x74] sm:$0xf]
        %v3668 = vld [vmem:[%s3647 + $0x78] sm:$0xff]
        %v3669 = vld [vmem:[%s3647 + $0x80] sm:$0xf]
        %v3670 = vld [vmem:[%s3647 + $0x84] sm:$0xff]
        %v3671 = vld [vmem:[%s3647 + $0x8c] sm:$0xf]
        %v3672 = vld [vmem:[%s3647 + $0x90] sm:$0xff]
        %v3673 = vld [vmem:[%s3647 + $0x98] sm:$0xf]
        %v3674 = vld [vmem:[%s3647 + $0x9c] sm:$0xff]
        %v3675 = vld [vmem:[%s3647 + $0xa4] sm:$0xf]
        %v3676 = vld [vmem:[%s3647 + $0xa8] sm:$0xff]
        %v3677 = vld [vmem:[%s3647 + $0xb0] sm:$0xf]
        %v3678 = vld [vmem:[%s3647 + $0xb4] sm:$0xff]
        %v3679 = vld [vmem:[%s3647 + $0xbc] sm:$0xf]
        %v3712 = vunpack.c.l.b16 %v3648
        %v3713 = vunpack.c.h.b16 %v3648
        %v3714 = vunpack.c.l.b16 %v3649
        %v3715 = vunpack.c.l.b16 %v3650
        %v3716 = vunpack.c.h.b16 %v3650
        %v3717 = vunpack.c.l.b16 %v3651
        %v3718 = vunpack.c.l.b16 %v3652
        %v3719 = vunpack.c.h.b16 %v3652
        %v3720 = vunpack.c.l.b16 %v3653
        %v3721 = vunpack.c.l.b16 %v3654
        %v3722 = vunpack.c.h.b16 %v3654
        %v3723 = vunpack.c.l.b16 %v3655
        %v3724 = vunpack.c.l.b16 %v3656
        %v3725 = vunpack.c.h.b16 %v3656
        %v3726 = vunpack.c.l.b16 %v3657
        %v3727 = vunpack.c.l.b16 %v3658
        %v3728 = vunpack.c.h.b16 %v3658
        %v3729 = vunpack.c.l.b16 %v3659
        %v3730 = vunpack.c.l.b16 %v3660
        %v3731 = vunpack.c.h.b16 %v3660
        %v3732 = vunpack.c.l.b16 %v3661
        %v3733 = vunpack.c.l.b16 %v3662
        %v3734 = vunpack.c.h.b16 %v3662
        %v3735 = vunpack.c.l.b16 %v3663
        %v3736 = vunpack.c.l.b16 %v3664
        %v3737 = vunpack.c.h.b16 %v3664
        %v3738 = vunpack.c.l.b16 %v3665
        %v3739 = vunpack.c.l.b16 %v3666
        %v3740 = vunpack.c.h.b16 %v3666
        %v3741 = vunpack.c.l.b16 %v3667
        %v3742 = vunpack.c.l.b16 %v3668
        %v3743 = vunpack.c.h.b16 %v3668
        %v3744 = vunpack.c.l.b16 %v3669
        %v3745 = vunpack.c.l.b16 %v3670
        %v3746 = vunpack.c.h.b16 %v3670
        %v3747 = vunpack.c.l.b16 %v3671
        %v3748 = vunpack.c.l.b16 %v3672
        %v3749 = vunpack.c.h.b16 %v3672
        %v3750 = vunpack.c.l.b16 %v3673
        %v3751 = vunpack.c.l.b16 %v3674
        %v3752 = vunpack.c.h.b16 %v3674
        %v3753 = vunpack.c.l.b16 %v3675
        %v3754 = vunpack.c.l.b16 %v3676
        %v3755 = vunpack.c.h.b16 %v3676
        %v3756 = vunpack.c.l.b16 %v3677
        %v3757 = vunpack.c.l.b16 %v3678
        %v3758 = vunpack.c.h.b16 %v3678
        %v3759 = vunpack.c.l.b16 %v3679
        %v3760 = vpack.c.b16 %v3715, %v3712
        %v3761 = vpack.c.b16 %v3716, %v3713
        %v3762 = vpack.c.b16 %v3717, %v3714
        %v3763 = vpack.c.b16 %v3721, %v3718
        %v3764 = vpack.c.b16 %v3722, %v3719
        %v3765 = vpack.c.b16 %v3723, %v3720
        %v3766 = vpack.c.b16 %v3727, %v3724
        %v3767 = vpack.c.b16 %v3728, %v3725
        %v3768 = vpack.c.b16 %v3729, %v3726
        %v3769 = vpack.c.b16 %v3733, %v3730
        %v3770 = vpack.c.b16 %v3734, %v3731
        %v3771 = vpack.c.b16 %v3735, %v3732
        %v3772 = vpack.c.b16 %v3739, %v3736
        %v3773 = vpack.c.b16 %v3740, %v3737
        %v3774 = vpack.c.b16 %v3741, %v3738
        %v3775 = vpack.c.b16 %v3745, %v3742
        %v3776 = vpack.c.b16 %v3746, %v3743
        %v3777 = vpack.c.b16 %v3747, %v3744
        %v3778 = vpack.c.b16 %v3751, %v3748
        %v3779 = vpack.c.b16 %v3752, %v3749
        %v3780 = vpack.c.b16 %v3753, %v3750
        %v3781 = vpack.c.b16 %v3757, %v3754
        %v3782 = vpack.c.b16 %v3758, %v3755
        %v3783 = vpack.c.b16 %v3759, %v3756
        %3808 = vmatprep.subr.bf16.mxu0 %v3761
        %3809 = vmatpush1.bf16.msra.mxu0 %v3760
        %3810 = vmatprep.subr.bf16.mxu0 %v3764
        %3811 = vmatpush1.bf16.msra.mxu0 %v3763
        %3812 = vmatprep.subr.bf16.mxu0 %v3767
        %3813 = vmatpush1.bf16.msra.mxu0 %v3766
        %3814 = vmatprep.subr.bf16.mxu0 %v3770
        %3815 = vmatpush1.bf16.msra.mxu0 %v3769
        %3816 = vmatprep.subr.bf16.mxu0 %v3773
        %3817 = vmatpush1.bf16.msra.mxu0 %v3772
        %3818 = vmatprep.subr.bf16.mxu0 %v3776
        %3819 = vmatpush1.bf16.msra.mxu0 %v3775
        %3820 = vmatprep.subr.bf16.mxu0 %v3779
        %3821 = vmatpush1.bf16.msra.mxu0 %v3778
        %3822 = vmatprep.subr.bf16.mxu0 %v3782
        %3823 = vmatpush1.bf16.msra.mxu0 %v3781
        %3824 = vmatprep.subr.bf16.mxu0 0
        %3825 = vmatpush1.bf16.msra.mxu0 0
        %3826 = vmatprep.subr.bf16.mxu0 0
        %3827 = vmatpush1.bf16.msra.mxu0 0
        %3828 = vmatprep.subr.bf16.mxu0 0
        %3829 = vmatpush1.bf16.msra.mxu0 0
        %3830 = vmatprep.subr.bf16.mxu0 0
        %3831 = vmatpush1.bf16.msra.mxu0 0
        %3832 = vmatprep.subr.bf16.mxu0 0
        %3833 = vmatpush1.bf16.msra.mxu0 0
        %3834 = vmatprep.subr.bf16.mxu0 0
        %3835 = vmatpush1.bf16.msra.mxu0 0
        %3836 = vmatprep.subr.bf16.mxu0 0
        %3837 = vmatpush1.bf16.msra.mxu0 0
        %3838 = vmatprep.subr.bf16.mxu0 0
        %3839 = vmatpush1.bf16.msra.mxu0 0
        %3840 = vmatprep.mubr.bf16.mxu0 0
        %3841 = vmatmul.mubr.bf16.gmra.mrb[0].mxu0 %v2626
        %v3842 = vpop.f32.mrb[0].mxu0
        %v3843 = vadd.f32 0.0, %v3842
        %v3844 = vpop.f32.mrb[0].mxu0
        %v3845 = vadd.f32 0.0, %v3844
        %v3846 = vpop.f32.mrb[0].mxu0
        %v3847 = vadd.f32 0.0, %v3846
        %v3848 = vpop.f32.mrb[0].mxu0
        %v3849 = vadd.f32 0.0, %v3848
        %3850 = vmatprep.mubr.bf16.mxu0 0
        %3851 = vmatmul.mubr.bf16.gmra.mrb[0].mxu0 %v2627
        %v3852 = vpop.f32.mrb[0].mxu0
        %v3853 = vadd.f32 0.0, %v3852
        %v3854 = vpop.f32.mrb[0].mxu0
        %v3855 = vadd.f32 0.0, %v3854
        %v3856 = vpop.f32.mrb[0].mxu0
        %v3857 = vadd.f32 0.0, %v3856
        %v3858 = vpop.f32.mrb[0].mxu0
        %v3859 = vadd.f32 0.0, %v3858
        %3860 = vmatprep.mubr.bf16.mxu0 0
        %3861 = vmatmul.mubr.bf16.gmra.mrb[0].mxu0 %v2628
        %v3862 = vpop.f32.mrb[0].mxu0
        %v3863 = vadd.f32 0.0, %v3862
        %v3864 = vpop.f32.mrb[0].mxu0
        %v3865 = vadd.f32 0.0, %v3864
        %v3866 = vpop.f32.mrb[0].mxu0
        %v3867 = vadd.f32 0.0, %v3866
        %v3868 = vpop.f32.mrb[0].mxu0
        %v3869 = vadd.f32 0.0, %v3868
        %3870 = vmatprep.mubr.bf16.mxu0 0
        %3871 = vmatmul.mubr.bf16.gmra.mrb[0].mxu0 %v2629
        %v3872 = vpop.f32.mrb[0].mxu0
        %v3873 = vadd.f32 0.0, %v3872
        %v3874 = vpop.f32.mrb[0].mxu0
        %v3875 = vadd.f32 0.0, %v3874
        %v3876 = vpop.f32.mrb[0].mxu0
        %v3877 = vadd.f32 0.0, %v3876
        %v3878 = vpop.f32.mrb[0].mxu0
        %v3879 = vadd.f32 0.0, %v3878
        %3880 = vmatprep.mubr.bf16.mxu0 0
        %3881 = vmatmul.mubr.bf16.gmra.mrb[0].mxu0 %v2630
        %v3882 = vpop.f32.mrb[0].mxu0
        %v3883 = vadd.f32 0.0, %v3882
        %v3884 = vpop.f32.mrb[0].mxu0
        %v3885 = vadd.f32 0.0, %v3884
        %v3886 = vpop.f32.mrb[0].mxu0
        %v3887 = vadd.f32 0.0, %v3886
        %v3888 = vpop.f32.mrb[0].mxu0
        %v3889 = vadd.f32 0.0, %v3888
        %3890 = vmatprep.mubr.bf16.mxu0 0
        %3891 = vmatmul.mubr.bf16.gmra.mrb[0].mxu0 %v2631
        %v3892 = vpop.f32.mrb[0].mxu0
        %v3893 = vadd.f32 0.0, %v3892
        %v3894 = vpop.f32.mrb[0].mxu0
        %v3895 = vadd.f32 0.0, %v3894
        %v3896 = vpop.f32.mrb[0].mxu0
        %v3897 = vadd.f32 0.0, %v3896
        %v3898 = vpop.f32.mrb[0].mxu0
        %v3899 = vadd.f32 0.0, %v3898
        %3900 = vmatprep.mubr.bf16.mxu0 0
        %3901 = vmatmul.mubr.bf16.gmra.mrb[0].mxu0 %v2632
        %v3902 = vpop.f32.mrb[0].mxu0
        %v3903 = vadd.f32 0.0, %v3902
        %v3904 = vpop.f32.mrb[0].mxu0
        %v3905 = vadd.f32 0.0, %v3904
        %v3906 = vpop.f32.mrb[0].mxu0
        %v3907 = vadd.f32 0.0, %v3906
        %v3908 = vpop.f32.mrb[0].mxu0
        %v3909 = vadd.f32 0.0, %v3908
        %3910 = vmatprep.mubr.bf16.mxu0 0
        %3911 = vmatmul.mubr.bf16.gmra.mrb[0].mxu0 %v2633
        %v3912 = vpop.f32.mrb[0].mxu0
        %v3913 = vadd.f32 0.0, %v3912
        %v3914 = vpop.f32.mrb[0].mxu0
        %v3915 = vadd.f32 0.0, %v3914
        %v3916 = vpop.f32.mrb[0].mxu0
        %v3917 = vadd.f32 0.0, %v3916
        %v3918 = vpop.f32.mrb[0].mxu0
        %v3919 = vadd.f32 0.0, %v3918
        %3920 = vmatprep.mubr.bf16.mxu0 0
        %3921 = vmatmul.mubr.bf16.gmra.mrb[0].mxu0 %v2634
        %v3922 = vpop.f32.mrb[0].mxu0
        %v3923 = vadd.f32 0.0, %v3922
        %v3924 = vpop.f32.mrb[0].mxu0
        %v3925 = vadd.f32 0.0, %v3924
        %v3926 = vpop.f32.mrb[0].mxu0
        %v3927 = vadd.f32 0.0, %v3926
        %v3928 = vpop.f32.mrb[0].mxu0
        %v3929 = vadd.f32 0.0, %v3928
        %3930 = vdwg.mxu0
        %3931 = vmatprep.subr.bf16.mxu0 0
        %3932 = vmatpush1.bf16.msra.mxu0 %v3762
        %3933 = vmatprep.subr.bf16.mxu0 0
        %3934 = vmatpush1.bf16.msra.mxu0 %v3765
        %3935 = vmatprep.subr.bf16.mxu0 0
        %3936 = vmatpush1.bf16.msra.mxu0 %v3768
        %3937 = vmatprep.subr.bf16.mxu0 0
        %3938 = vmatpush1.bf16.msra.mxu0 %v3771
        %3939 = vmatprep.subr.bf16.mxu0 0
        %3940 = vmatpush1.bf16.msra.mxu0 %v3774
        %3941 = vmatprep.subr.bf16.mxu0 0
        %3942 = vmatpush1.bf16.msra.mxu0 %v3777
        %3943 = vmatprep.subr.bf16.mxu0 0
        %3944 = vmatpush1.bf16.msra.mxu0 %v3780
        %3945 = vmatprep.subr.bf16.mxu0 0
        %3946 = vmatpush1.bf16.msra.mxu0 %v3783
        %3947 = vmatprep.subr.bf16.mxu0 0
        %3948 = vmatpush1.bf16.msra.mxu0 0
        %3949 = vmatprep.subr.bf16.mxu0 0
        %3950 = vmatpush1.bf16.msra.mxu0 0
        %3951 = vmatprep.subr.bf16.mxu0 0
        %3952 = vmatpush1.bf16.msra.mxu0 0
        %3953 = vmatprep.subr.bf16.mxu0 0
        %3954 = vmatpush1.bf16.msra.mxu0 0
        %3955 = vmatprep.subr.bf16.mxu0 0
        %3956 = vmatpush1.bf16.msra.mxu0 0
        %3957 = vmatprep.subr.bf16.mxu0 0
        %3958 = vmatpush1.bf16.msra.mxu0 0
        %3959 = vmatprep.subr.bf16.mxu0 0
        %3960 = vmatpush1.bf16.msra.mxu0 0
        %3961 = vmatprep.subr.bf16.mxu0 0
        %3962 = vmatpush1.bf16.msra.mxu0 0
        %3963 = vmatprep.mubr.bf16.mxu0 0
        %3964 = vmatmul.mubr.bf16.gmra.mrb[0].mxu0 %v2626
        %v3965 = vpop.f32.mrb[0].mxu0
        %v3966 = vadd.f32 0.0, %v3965
        %v3967 = vpop.f32.mrb[0].mxu0
        %v3968 = vpop.f32.mrb[0].mxu0
        %v3969 = vadd.f32 0.0, %v3968
        %v3970 = vpop.f32.mrb[0].mxu0
        %3971 = vmatprep.mubr.bf16.mxu0 0
        %3972 = vmatmul.mubr.bf16.gmra.mrb[0].mxu0 %v2627
        %v3973 = vpop.f32.mrb[0].mxu0
        %v3974 = vadd.f32 0.0, %v3973
        %v3975 = vpop.f32.mrb[0].mxu0
        %v3976 = vpop.f32.mrb[0].mxu0
        %v3977 = vadd.f32 0.0, %v3976
        %v3978 = vpop.f32.mrb[0].mxu0
        %3979 = vmatprep.mubr.bf16.mxu0 0
        %3980 = vmatmul.mubr.bf16.gmra.mrb[0].mxu0 %v2628
        %v3981 = vpop.f32.mrb[0].mxu0
        %v3982 = vadd.f32 0.0, %v3981
        %v3983 = vpop.f32.mrb[0].mxu0
        %v3984 = vpop.f32.mrb[0].mxu0
        %v3985 = vadd.f32 0.0, %v3984
        %v3986 = vpop.f32.mrb[0].mxu0
        %3987 = vmatprep.mubr.bf16.mxu0 0
        %3988 = vmatmul.mubr.bf16.gmra.mrb[0].mxu0 %v2629
        %v3989 = vpop.f32.mrb[0].mxu0
        %v3990 = vadd.f32 0.0, %v3989
        %v3991 = vpop.f32.mrb[0].mxu0
        %v3992 = vpop.f32.mrb[0].mxu0
        %v3993 = vadd.f32 0.0, %v3992
        %v3994 = vpop.f32.mrb[0].mxu0
        %3995 = vmatprep.mubr.bf16.mxu0 0
        %3996 = vmatmul.mubr.bf16.gmra.mrb[0].mxu0 %v2630
        %v3997 = vpop.f32.mrb[0].mxu0
        %v3998 = vadd.f32 0.0, %v3997
        %v3999 = vpop.f32.mrb[0].mxu0
        %v4000 = vpop.f32.mrb[0].mxu0
        %v4001 = vadd.f32 0.0, %v4000
        %v4002 = vpop.f32.mrb[0].mxu0
        %4003 = vmatprep.mubr.bf16.mxu0 0
        %4004 = vmatmul.mubr.bf16.gmra.mrb[0].mxu0 %v2631
        %v4005 = vpop.f32.mrb[0].mxu0
        %v4006 = vadd.f32 0.0, %v4005
        %v4007 = vpop.f32.mrb[0].mxu0
        %v4008 = vpop.f32.mrb[0].mxu0
        %v4009 = vadd.f32 0.0, %v4008
        %v4010 = vpop.f32.mrb[0].mxu0
        %4011 = vmatprep.mubr.bf16.mxu0 0
        %4012 = vmatmul.mubr.bf16.gmra.mrb[0].mxu0 %v2632
        %v4013 = vpop.f32.mrb[0].mxu0
        %v4014 = vadd.f32 0.0, %v4013
        %v4015 = vpop.f32.mrb[0].mxu0
        %v4016 = vpop.f32.mrb[0].mxu0
        %v4017 = vadd.f32 0.0, %v4016
        %v4018 = vpop.f32.mrb[0].mxu0
        %4019 = vmatprep.mubr.bf16.mxu0 0
        %4020 = vmatmul.mubr.bf16.gmra.mrb[0].mxu0 %v2633
        %v4021 = vpop.f32.mrb[0].mxu0
        %v4022 = vadd.f32 0.0, %v4021
        %v4023 = vpop.f32.mrb[0].mxu0
        %v4024 = vpop.f32.mrb[0].mxu0
        %v4025 = vadd.f32 0.0, %v4024
        %v4026 = vpop.f32.mrb[0].mxu0
        %4027 = vmatprep.mubr.bf16.mxu0 0
        %4028 = vmatmul.mubr.bf16.gmra.mrb[0].mxu0 %v2634
        %v4029 = vpop.f32.mrb[0].mxu0
        %v4030 = vadd.f32 0.0, %v4029
        %v4031 = vpop.f32.mrb[0].mxu0
        %v4032 = vpop.f32.mrb[0].mxu0
        %v4033 = vadd.f32 0.0, %v4032
        %v4034 = vpop.f32.mrb[0].mxu0
        %4035 = vdwg.mxu0
        %v4036 = vadd.f32 %v3629, %v3847
        %v4037 = vadd.f32 %v3630, %v3853
        %v4038 = vadd.f32 %v3631, %v3857
        %v4039 = vadd.f32 %v3632, %v3863
        %v4040 = vadd.f32 %v3633, %v3867
        %v4041 = vadd.f32 %v3634, %v3873
        %v4042 = vadd.f32 %v3635, %v3877
        %v4043 = vadd.f32 %v3636, %v3883
        %v4044 = vadd.f32 %v3637, %v3887
        %v4045 = vadd.f32 %v3638, %v3893
        %v4046 = vadd.f32 %v3639, %v3897
        %v4047 = vadd.f32 %v3640, %v3903
        %v4048 = vadd.f32 %v3641, %v3907
        %v4049 = vadd.f32 %v3642, %v3913
        %v4050 = vadd.f32 %v3643, %v3917
        %v4051 = vadd.f32 %v3644, %v3923
        %v4052 = vadd.f32 %v3645, %v3927
        %v4053 = vadd.f32 %v3646, %v3843
        %v4054 = vrot.slane %v3845, 1
        %v4055 = vrot.slane %v3849, 1
        %v4056 = vrot.slane %v3855, 1
        %v4057 = vrot.slane %v3859, 1
        %v4058 = vrot.slane %v3865, 1
        %v4059 = vrot.slane %v3869, 1
        %v4060 = vrot.slane %v3875, 1
        %v4061 = vrot.slane %v3879, 1
        %v4062 = vrot.slane %v3885, 1
        %v4063 = vrot.slane %v3889, 1
        %v4064 = vrot.slane %v3895, 1
        %v4065 = vrot.slane %v3899, 1
        %v4066 = vrot.slane %v3905, 1
        %v4067 = vrot.slane %v3909, 1
        %v4068 = vrot.slane %v3915, 1
        %v4069 = vrot.slane %v3919, 1
        %v4070 = vrot.slane %v3925, 1
        %v4071 = vrot.slane %v3929, 1
        %v4072 = vsel %vm1897, %v4070, %v4071
        %v4073 = vsel %vm1897, %v4069, %v4070
        %v4074 = vsel %vm1897, %v4068, %v4069
        %v4075 = vsel %vm1897, %v4067, %v4068
        %v4076 = vsel %vm1897, %v4066, %v4067
        %v4077 = vsel %vm1897, %v4065, %v4066
        %v4078 = vsel %vm1897, %v4064, %v4065
        %v4079 = vsel %vm1897, %v4063, %v4064
        %v4080 = vsel %vm1897, %v4062, %v4063
        %v4081 = vsel %vm1897, %v4061, %v4062
        %v4082 = vsel %vm1897, %v4060, %v4061
        %v4083 = vsel %vm1897, %v4059, %v4060
        %v4084 = vsel %vm1897, %v4058, %v4059
        %v4085 = vsel %vm1897, %v4057, %v4058
        %v4086 = vsel %vm1897, %v4056, %v4057
        %v4087 = vsel %vm1897, %v4055, %v4056
        %v4088 = vsel %vm1897, %v4054, %v4055
        %v4089 = vsel %vm1897, %v4071, %v4054
        %v4090 = vadd.f32 %v4036, %v4087
        %v4091 = vadd.f32 %v4037, %v4086
        %v4092 = vadd.f32 %v4038, %v4085
        %v4093 = vadd.f32 %v4039, %v4084
        %v4094 = vadd.f32 %v4040, %v4083
        %v4095 = vadd.f32 %v4041, %v4082
        %v4096 = vadd.f32 %v4042, %v4081
        %v4097 = vadd.f32 %v4043, %v4080
        %v4098 = vadd.f32 %v4044, %v4079
        %v4099 = vadd.f32 %v4045, %v4078
        %v4100 = vadd.f32 %v4046, %v4077
        %v4101 = vadd.f32 %v4047, %v4076
        %v4102 = vadd.f32 %v4048, %v4075
        %v4103 = vadd.f32 %v4049, %v4074
        %v4104 = vadd.f32 %v4050, %v4073
        %v4105 = vadd.f32 %v4051, %v4072
        %v4106 = vadd.f32 %v4052, %v4089
        %v4107 = vadd.f32 %v4053, %v4088
        %v4108 = vrot.slane %v3966, 2
        %v4109 = vrot.slane %v3969, 2
        %v4110 = vrot.slane %v3974, 2
        %v4111 = vrot.slane %v3977, 2
        %v4112 = vrot.slane %v3982, 2
        %v4113 = vrot.slane %v3985, 2
        %v4114 = vrot.slane %v3990, 2
        %v4115 = vrot.slane %v3993, 2
        %v4116 = vrot.slane %v3998, 2
        %v4117 = vrot.slane %v4001, 2
        %v4118 = vrot.slane %v4006, 2
        %v4119 = vrot.slane %v4009, 2
        %v4120 = vrot.slane %v4014, 2
        %v4121 = vrot.slane %v4017, 2
        %v4122 = vrot.slane %v4022, 2
        %v4123 = vrot.slane %v4025, 2
        %v4124 = vrot.slane %v4030, 2
        %v4125 = vrot.slane %v4033, 2
        %v4126 = vsel %vm2413, %v4124, %v4125
        %v4127 = vsel %vm2413, %v4123, %v4124
        %v4128 = vsel %vm2413, %v4122, %v4123
        %v4129 = vsel %vm2413, %v4121, %v4122
        %v4130 = vsel %vm2413, %v4120, %v4121
        %v4131 = vsel %vm2413, %v4119, %v4120
        %v4132 = vsel %vm2413, %v4118, %v4119
        %v4133 = vsel %vm2413, %v4117, %v4118
        %v4134 = vsel %vm2413, %v4116, %v4117
        %v4135 = vsel %vm2413, %v4115, %v4116
        %v4136 = vsel %vm2413, %v4114, %v4115
        %v4137 = vsel %vm2413, %v4113, %v4114
        %v4138 = vsel %vm2413, %v4112, %v4113
        %v4139 = vsel %vm2413, %v4111, %v4112
        %v4140 = vsel %vm2413, %v4110, %v4111
        %v4141 = vsel %vm2413, %v4109, %v4110
        %v4142 = vsel %vm2413, %v4108, %v4109
        %v4143 = vsel %vm2413, %v4125, %v4108
        %v4144 = vadd.f32 %v4090, %v4141
        %v4145 = vadd.f32 %v4091, %v4140
        %v4146 = vadd.f32 %v4092, %v4139
        %v4147 = vadd.f32 %v4093, %v4138
        %v4148 = vadd.f32 %v4094, %v4137
        %v4149 = vadd.f32 %v4095, %v4136
        %v4150 = vadd.f32 %v4096, %v4135
        %v4151 = vadd.f32 %v4097, %v4134
        %v4152 = vadd.f32 %v4098, %v4133
        %v4153 = vadd.f32 %v4099, %v4132
        %v4154 = vadd.f32 %v4100, %v4131
        %v4155 = vadd.f32 %v4101, %v4130
        %v4156 = vadd.f32 %v4102, %v4129
        %v4157 = vadd.f32 %v4103, %v4128
        %v4158 = vadd.f32 %v4104, %v4127
        %v4159 = vadd.f32 %v4105, %v4126
        %v4160 = vadd.f32 %v4106, %v4143
        %v4161 = vadd.f32 %v4107, %v4142
        %s4162 = scalar_lea.vmem %s391, 1 [#allocation9]
        %v4163 = vld [vmem:[%s4162] sm:$0x1]
        %v4165 = vlaneseq
        %v4166 = vshrl.u32 %v4165, 7
        %v4167 = vsub.s32 0, %v4166
        %v4168 = vrot.slane %v4163, %v4167
        %v4170 = vmul.f32 %v4144, %v4168
        %v4171 = vmul.f32 %v4145, %v4168
        %v4172 = vmul.f32 %v4146, %v4168
        %v4173 = vmul.f32 %v4147, %v4168
        %v4174 = vmul.f32 %v4148, %v4168
        %v4175 = vmul.f32 %v4149, %v4168
        %v4176 = vmul.f32 %v4150, %v4168
        %v4177 = vmul.f32 %v4151, %v4168
        %v4178 = vmul.f32 %v4152, %v4168
        %v4179 = vmul.f32 %v4153, %v4168
        %v4180 = vmul.f32 %v4154, %v4168
        %v4181 = vmul.f32 %v4155, %v4168
        %v4182 = vmul.f32 %v4156, %v4168
        %v4183 = vmul.f32 %v4157, %v4168
        %v4184 = vmul.f32 %v4158, %v4168
        %v4185 = vmul.f32 %v4159, %v4168
        %v4186 = vmul.f32 %v4160, %v4168
        %v4187 = vmul.f32 %v4161, %v4168
        %s4188 = scalar_lea.vmem %s400, 1 [#allocation10]
        %v4189 = vld [vmem:[%s4188] sm:$0x1]
        %v4191 = vlaneseq
        %v4192 = vshrl.u32 %v4191, 7
        %v4193 = vsub.s32 0, %v4192
        %v4194 = vrot.slane %v4189, %v4193
        %v4196 = vadd.f32 %v4170, %v4194
        %v4197 = vadd.f32 %v4171, %v4194
        %v4198 = vadd.f32 %v4172, %v4194
        %v4199 = vadd.f32 %v4173, %v4194
        %v4200 = vadd.f32 %v4174, %v4194
        %v4201 = vadd.f32 %v4175, %v4194
        %v4202 = vadd.f32 %v4176, %v4194
        %v4203 = vadd.f32 %v4177, %v4194
        %v4204 = vadd.f32 %v4178, %v4194
        %v4205 = vadd.f32 %v4179, %v4194
        %v4206 = vadd.f32 %v4180, %v4194
        %v4207 = vadd.f32 %v4181, %v4194
        %v4208 = vadd.f32 %v4182, %v4194
        %v4209 = vadd.f32 %v4183, %v4194
        %v4210 = vadd.f32 %v4184, %v4194
        %v4211 = vadd.f32 %v4185, %v4194
        %v4212 = vadd.f32 %v4186, %v4194
        %v4213 = vadd.f32 %v4187, %v4194
        %v4214 = vadd.f32 %v4196, %v891
        %v4215 = vadd.f32 %v4197, %v892
        %v4216 = vadd.f32 %v4198, %v893
        %v4217 = vadd.f32 %v4199, %v894
        %v4218 = vadd.f32 %v4200, %v895
        %v4219 = vadd.f32 %v4201, %v896
        %v4220 = vadd.f32 %v4202, %v897
        %v4221 = vadd.f32 %v4203, %v898
        %v4222 = vadd.f32 %v4204, %v899
        %v4223 = vadd.f32 %v4205, %v900
        %v4224 = vadd.f32 %v4206, %v901
        %v4225 = vadd.f32 %v4207, %v902
        %v4226 = vadd.f32 %v4208, %v903
        %v4227 = vadd.f32 %v4209, %v904
        %v4228 = vadd.f32 %v4210, %v905
        %v4229 = vadd.f32 %v4211, %v906
        %v4230 = vadd.f32 %v4212, %v907
        %v4231 = vadd.f32 %v4213, %v908
        %v4232 = vmax.f32 %v4214, 0.0
        %v4233 = vmax.f32 %v4215, 0.0
        %v4234 = vmax.f32 %v4216, 0.0
        %v4235 = vmax.f32 %v4217, 0.0
        %v4236 = vmax.f32 %v4218, 0.0
        %v4237 = vmax.f32 %v4219, 0.0
        %v4238 = vmax.f32 %v4220, 0.0
        %v4239 = vmax.f32 %v4221, 0.0
        %v4240 = vmax.f32 %v4222, 0.0
        %v4241 = vmax.f32 %v4223, 0.0
        %v4242 = vmax.f32 %v4224, 0.0
        %v4243 = vmax.f32 %v4225, 0.0
        %v4244 = vmax.f32 %v4226, 0.0
        %v4245 = vmax.f32 %v4227, 0.0
        %v4246 = vmax.f32 %v4228, 0.0
        %v4247 = vmax.f32 %v4229, 0.0
        %v4248 = vmax.f32 %v4230, 0.0
        %v4249 = vmax.f32 %v4231, 0.0
        %v4250 = vmul.f32 %v4232, %v2521
        %v4251 = vmul.f32 %v4233, %v2526
        %v4252 = vmul.f32 %v4234, %v2531
        %v4253 = vmul.f32 %v4235, %v2536
        %v4254 = vmul.f32 %v4236, %v2541
        %v4255 = vmul.f32 %v4237, %v2546
        %v4256 = vmul.f32 %v4238, %v2551
        %v4257 = vmul.f32 %v4239, %v2556
        %v4258 = vmul.f32 %v4240, %v2561
        %v4259 = vmul.f32 %v4241, %v2566
        %v4260 = vmul.f32 %v4242, %v2571
        %v4261 = vmul.f32 %v4243, %v2576
        %v4262 = vmul.f32 %v4244, %v2581
        %v4263 = vmul.f32 %v4245, %v2586
        %v4264 = vmul.f32 %v4246, %v2591
        %v4265 = vmul.f32 %v4247, %v2596
        %v4266 = vmul.f32 %v4248, %v2601
        %v4267 = vmul.f32 %v4249, %v2606
        %4268 = vst [vmem:[%s8] sm:$0xff] %v4250
        %4269 = vst [vmem:[%s8 + $0x8] sm:$0xff] %v4251
        %4270 = vst [vmem:[%s8 + $0x10] sm:$0xff] %v4252
        %4271 = vst [vmem:[%s8 + $0x18] sm:$0xff] %v4253
        %4272 = vst [vmem:[%s8 + $0x20] sm:$0xff] %v4254
        %4273 = vst [vmem:[%s8 + $0x28] sm:$0xff] %v4255
        %4274 = vst [vmem:[%s8 + $0x30] sm:$0xff] %v4256
        %4275 = vst [vmem:[%s8 + $0x38] sm:$0xff] %v4257
        %4276 = vst [vmem:[%s8 + $0x40] sm:$0xff] %v4258
        %4277 = vst [vmem:[%s8 + $0x48] sm:$0xff] %v4259
        %4278 = vst [vmem:[%s8 + $0x50] sm:$0xff] %v4260
        %4279 = vst [vmem:[%s8 + $0x58] sm:$0xff] %v4261
        %4280 = vst [vmem:[%s8 + $0x60] sm:$0xff] %v4262
        %4281 = vst [vmem:[%s8 + $0x68] sm:$0xff] %v4263
        %4282 = vst [vmem:[%s8 + $0x70] sm:$0xff] %v4264
        %4283 = vst [vmem:[%s8 + $0x78] sm:$0xff] %v4265
        %4284 = vst [vmem:[%s8 + $0x80] sm:$0xff] %v4266
        %4285 = vst [vmem:[%s8 + $0x88] sm:$0xff] %v4267
        // Predicated region
        $region85: #{connectnet_forward.3} parent=51 // pred_check
          %p4286 = pneg %p223
        $region86: #{connectnet_forward.3} parent=51 // pred_check_branch
          %4288 = sbr.rel (%p4286) target = $region88
        $region87: #{connectnet_forward.3} parent=51 // pred_region
          _
        $region88: #{connectnet_forward.3} parent=51 // pred_fallthru
          _
        // Predicated region
        $region89: #{connectnet_forward.3} parent=51 // pred_check
          %p4289 = pneg %p223
        $region90: #{connectnet_forward.3} parent=51 // pred_check_branch
          %4291 = sbr.rel (%p4289) target = $region92
        $region91: #{connectnet_forward.3} parent=51 // pred_region
          _
        $region92: #{connectnet_forward.3} parent=51 // pred_fallthru
          _
      $region52: #{connectnet_forward.3} parent=5 // pred_fallthru
        _
      %p4292 = scmp.le.s32.totalorder 2, %s22
      // Predicated region
      $region93: #{connectnet_forward.3} parent=5 // pred_check
        %p4293 = pneg %p4292
      $region94: #{connectnet_forward.3} parent=5 // pred_check_branch
        %4295 = sbr.rel (%p4293) target = $region96
      $region95: #{connectnet_forward.3} parent=5 // pred_region
        %s4296 = ssub.s32 %s22, 2
      $region96: #{connectnet_forward.3} parent=5 // pred_fallthru
        _
    $region6: #{connectnet_forward.3} parent=1 // loop_footer
      %s26 = sadd.s32 1, %s22
    $region7: #{connectnet_forward.3} parent=1 // loop_footer_branch
      %21 = sbr.rel target = $region3
    $region8: #{connectnet_forward.3} parent=1 // loop_exit
      _
    %4297 = vsyncpa [#allocation3], 1
    %s4298 = scalar_lea.sflag [#allocation3], 1
    %4299 = vsyncpa %s4298, 1
    %4300 = vsyncpa [#allocation5], 1
    %4301 = vsyncpa [#allocation8], 1
    %s4302 = scalar_lea.sflag [#allocation8], 1
    %4303 = vsyncpa %s4302, 1
    %4304 = vsyncpa [#allocation11], 1
    %s4305 = scalar_lea.sflag [#allocation11], 1
    %4306 = vsyncpa %s4305, 1

</llo_original>
